<compile_context>
chip_gen: v7x
topology: tpu7x:2x2x1
jax: 0.10.0
libtpu: 0.0.40
codegen_flags: <defaults>
</compile_context>

<pallas_src>
import jax
import jax.numpy as jnp
from jax.experimental import pallas as pl
from jax.experimental.pallas import tpu as pltpu

_VMEM_LIMIT = 32 * 1024 * 1024   # explicit limit, safe on v5e/v6e (128 MiB) and v7x (64 MiB)


# ---------------------------------------------------------------------------
# Pallas kernels (channel-major: blocks are (C, TM) with TM on the lane axis)
# ---------------------------------------------------------------------------
def _mm_stats_kernel(x_ref, w_ref, b_ref, y_ref, st_ref):
    """y = W @ x + b (bf16 MXU operands, f32 accumulate); BN partials packed as (C, 2)."""
    y = jnp.dot(w_ref[...], x_ref[...].astype(jnp.bfloat16),
                preferred_element_type=jnp.float32) + b_ref[...]
    st_ref[...] = jnp.concatenate([jnp.sum(y, axis=1, keepdims=True),
                                   jnp.sum(y * y, axis=1, keepdims=True)], axis=1)
    y_ref[...] = y.astype(y_ref.dtype)          # bf16 store AFTER f32 stats


def _bn_relu_mm_stats_kernel(x_ref, sc_ref, sh_ref, w_ref, b_ref, y_ref, st_ref):
    """Fused: a = relu(x*scale+shift) (previous layer's BN, f32 VPU math — v5e-safe),
    y = W @ a + b on the MXU, + packed (C, 2) BN partial sums of y."""
    a = jnp.maximum(x_ref[...].astype(jnp.float32) * sc_ref[...] + sh_ref[...], 0.0)
    y = jnp.dot(w_ref[...], a.astype(jnp.bfloat16),
                preferred_element_type=jnp.float32) + b_ref[...]
    st_ref[...] = jnp.concatenate([jnp.sum(y, axis=1, keepdims=True),
                                   jnp.sum(y * y, axis=1, keepdims=True)], axis=1)
    y_ref[...] = y.astype(y_ref.dtype)


def _bn_relu_kernel(x_ref, sc_ref, sh_ref, o_ref):
    """Final BN + ReLU, lane-dense channel-major tiles (output is already NCDHW layout)."""
    o_ref[...] = jnp.maximum(x_ref[...].astype(jnp.float32) * sc_ref[...] + sh_ref[...], 0.0)


# ---------------------------------------------------------------------------
# pallas_call wrappers
# ---------------------------------------------------------------------------
def _pick_tile(s, target=2048):
    """Largest lane-dense (multiple of 128) tile dividing s, capped at `target`.
    Per-grid-step overhead is ~0.35us, so prefer 1024-2048 lanes; with <=128 channel
    rows a double-buffered bf16-in / bf16-out tile stays ~1-3 MiB, far below the
    explicit 32 MiB VMEM limit on every generation."""
    for t in range(min(target, s), 127, -128):
        if s % t == 0 and t % 128 == 0:
            return t
    return s


def _conv_matmul_cm(x_cm, w, b, tm, out_dtype=jnp.bfloat16):
    """x_cm: (N, Cin, S); w: (Cout, Cin); b: (Cout,) ->
    y: (N, Cout, S) out_dtype; per-tile BN partials: (N, S//tm, Cout, 2) f32."""
    N, Cin, S = x_cm.shape
    Cout = w.shape[0]
    nm = S // tm
    return pl.pallas_call(
        _mm_stats_kernel,
        out_shape=(jax.ShapeDtypeStruct((N, Cout, S), out_dtype),
                   jax.ShapeDtypeStruct((N, nm, Cout, 2), jnp.float32)),
        grid_spec=pltpu.PrefetchScalarGridSpec(
            num_scalar_prefetch=0,
            grid=(N, nm),                     # both parallel (>=2 steps with N>=2)
            in_specs=[
                pl.BlockSpec((pl.Squeezed(), Cin, tm), lambda n, m: (n, 0, m)),
                pl.BlockSpec((Cout, Cin), lambda n, m: (0, 0)),   # constant block
                pl.BlockSpec((Cout, 1), lambda n, m: (0, 0)),
            ],
            out_specs=[
                pl.BlockSpec((pl.Squeezed(), Cout, tm), lambda n, m: (n, 0, m)),
                pl.BlockSpec((pl.Squeezed(), pl.Squeezed(), Cout, 2),
                             lambda n, m: (n, m, 0, 0)),
            ]),
        compiler_params=pltpu.CompilerParams(
            dimension_semantics=("parallel", "parallel"),
            vmem_limit_bytes=_VMEM_LIMIT),
    )(x_cm, w.astype(jnp.bfloat16), b.reshape(Cout, 1).astype(jnp.float32))


def _bn_relu_conv_matmul_cm(x_cm, scale, shift, w, b, tm, out_dtype=jnp.bfloat16):
    """Fused BN(prev)+ReLU -> 1x1x1 conv matmul -> packed BN partials of the output."""
    N, Cin, S = x_cm.shape
    Cout = w.shape[0]
    nm = S // tm
    return pl.pallas_call(
        _bn_relu_mm_stats_kernel,
        out_shape=(jax.ShapeDtypeStruct((N, Cout, S), out_dtype),
                   jax.ShapeDtypeStruct((N, nm, Cout, 2), jnp.float32)),
        grid_spec=pltpu.PrefetchScalarGridSpec(
            num_scalar_prefetch=0,
            grid=(N, nm),
            in_specs=[
                pl.BlockSpec((pl.Squeezed(), Cin, tm), lambda n, m: (n, 0, m)),
                pl.BlockSpec((Cin, 1), lambda n, m: (0, 0)),
                pl.BlockSpec((Cin, 1), lambda n, m: (0, 0)),
                pl.BlockSpec((Cout, Cin), lambda n, m: (0, 0)),
                pl.BlockSpec((Cout, 1), lambda n, m: (0, 0)),
            ],
            out_specs=[
                pl.BlockSpec((pl.Squeezed(), Cout, tm), lambda n, m: (n, 0, m)),
                pl.BlockSpec((pl.Squeezed(), pl.Squeezed(), Cout, 2),
                             lambda n, m: (n, m, 0, 0)),
            ]),
        compiler_params=pltpu.CompilerParams(
            dimension_semantics=("parallel", "parallel"),
            vmem_limit_bytes=_VMEM_LIMIT),
    )(x_cm,
      scale.reshape(Cin, 1).astype(jnp.float32),
      shift.reshape(Cin, 1).astype(jnp.float32),
      w.astype(jnp.bfloat16),
      b.reshape(Cout, 1).astype(jnp.float32))


def _bn_relu_cm(x_cm, scale, shift, tm):
    """Final BN+ReLU over a (N, C, S) channel-major tensor; f32 module output."""
    N, C, S = x_cm.shape
    nm = S // tm
    return pl.pallas_call(
        _bn_relu_kernel,
        out_shape=jax.ShapeDtypeStruct((N, C, S), jnp.float32),
        grid_spec=pltpu.PrefetchScalarGridSpec(
            num_scalar_prefetch=0,
            grid=(N, nm),
            in_specs=[
                pl.BlockSpec((pl.Squeezed(), C, tm), lambda n, m: (n, 0, m)),
                pl.BlockSpec((C, 1), lambda n, m: (0, 0)),
                pl.BlockSpec((C, 1), lambda n, m: (0, 0)),
            ],
            out_specs=pl.BlockSpec((pl.Squeezed(), C, tm), lambda n, m: (n, 0, m))),
        compiler_params=pltpu.CompilerParams(
            dimension_semantics=("parallel", "parallel"),
            vmem_limit_bytes=_VMEM_LIMIT),
    )(x_cm, scale.reshape(C, 1).astype(jnp.float32),
      shift.reshape(C, 1).astype(jnp.float32))


def _deconv_parity_cm(y1_cm, scale1, shift1, w_fold_t, b_fold, spatial):
    """ConvTranspose3d(k=3, s=2, p=1, op=1) folded over output parity into one
    (8*Co, 8*Ci) matmul, with BN1+ReLU, the 8-neighbour gather and boundary zeroing
    all done in-kernel (only y1 bf16 is read, only y2 bf16 + tiny stats are written).

    y1_cm: (N, Ci, S1) channel-major; output rows ordered (pd, ph, pw, co).
    TODO(synk): tile D with a one-slice halo for volumes too large for VMEM."""
    N, Cm, S1 = y1_cm.shape
    D, H, W = spatial
    HW = H * W
    C8 = w_fold_t.shape[0]
    offs = [dd * HW + dh * W + dw for dd in (0, 1) for dh in (0, 1) for dw in (0, 1)]
    PAD = ((max(offs) + 127) // 128) * 128

    # {0,1} masks: a neighbour outside the volume contributes zero.  The zeroing must
    # happen AFTER BN1+ReLU, hence in-kernel masking.  Pure function of static shapes
    # -> constant-folded at compile time, DMA'd once (constant index_map).
    d_i = jnp.arange(D)[:, None, None]
    h_i = jnp.arange(H)[None, :, None]
    w_i = jnp.arange(W)[None, None, :]
    masks = jnp.stack(
        [((d_i + dd < D) & (h_i + dh < H) & (w_i + dw < W)).reshape(S1)
         for dd in (0, 1) for dh in (0, 1) for dw in (0, 1)]).astype(jnp.float32)

    def kernel(x_ref, sc_ref, sh_ref, m_ref, w_ref, b_ref, y_ref, st_ref):
        # BN1 + ReLU in f32 (VPU; v5e-safe).
        a = jnp.maximum(x_ref[...].astype(jnp.float32) * sc_ref[...] + sh_ref[...], 0.0)
        a = jnp.concatenate([a, jnp.zeros((Cm, PAD), jnp.float32)], axis=1)
        m = m_ref[...]
        # 8 neighbour shifts = static lane slices of the padded value; zero the
        # out-of-range boundary; stack along sublanes -> (8*Ci, S1) MXU operand.
        taps = []
        for t, off in enumerate(offs):
            s = jax.lax.slice(a, (0, off), (Cm, off + S1))
            taps.append(s * m[t:t + 1, :])
        op = jnp.concatenate(taps, axis=0).astype(jnp.bfloat16)
        y = jnp.dot(w_ref[...], op, preferred_element_type=jnp.float32) + b_ref[...]
        st_ref[...] = jnp.concatenate([jnp.sum(y, axis=1, keepdims=True),
                                       jnp.sum(y * y, axis=1, keepdims=True)], axis=1)
        y_ref[...] = y.astype(y_ref.dtype)

    return pl.pallas_call(
        kernel,
        out_shape=(jax.ShapeDtypeStruct((N, C8, S1), jnp.bfloat16),
                   jax.ShapeDtypeStruct((N, C8, 2), jnp.float32)),
        grid_spec=pltpu.PrefetchScalarGridSpec(
            num_scalar_prefetch=0,
            grid=(N,),                         # parallel over batch (N>=2 -> 2 TCs busy)
            in_specs=[
                pl.BlockSpec((pl.Squeezed(), Cm, S1), lambda n: (n, 0, 0)),
                pl.BlockSpec((Cm, 1), lambda n: (0, 0)),
                pl.BlockSpec((Cm, 1), lambda n: (0, 0)),
                pl.BlockSpec((8, S1), lambda n: (0, 0)),
                pl.BlockSpec((C8, C8), lambda n: (0, 0)),
                pl.BlockSpec((C8, 1), lambda n: (0, 0)),
            ],
            out_specs=[
                pl.BlockSpec((pl.Squeezed(), C8, S1), lambda n: (n, 0, 0)),
                pl.BlockSpec((pl.Squeezed(), C8, 2), lambda n: (n, 0, 0)),
            ]),
        compiler_params=pltpu.CompilerParams(
            dimension_semantics=("parallel",),
            vmem_limit_bytes=_VMEM_LIMIT),
    )(y1_cm,
      scale1.reshape(Cm, 1).astype(jnp.float32),
      shift1.reshape(Cm, 1).astype(jnp.float32),
      masks,
      w_fold_t.astype(jnp.bfloat16),
      b_fold.reshape(C8, 1).astype(jnp.float32))


# ---------------------------------------------------------------------------
# Parameter prep (runs ONCE, outside the jitted per-call path) + BN finalisation
# ---------------------------------------------------------------------------
def _fold_deconv_weight(w2):
    """Fold ConvTranspose3d(k=3, s=2, p=1, op=1) into one (8*Ci, 8*Co) matrix.

    w2: (3,3,3,Ci,Co); tap k contributes input voxel i to output o = 2*i - 1 + k.
    Rows ordered (dd,dh,dw,ci) over forward neighbours, columns (pd,ph,pw,co)."""
    Ci, Co = w2.shape[3], w2.shape[4]
    kmap = {(0, 0): 1, (1, 0): 2, (1, 1): 0}   # (parity, neighbour offset) -> tap
    w_all = jnp.zeros((2, 2, 2, Ci, 2, 2, 2, Co), w2.dtype)
    for pd in range(2):
        for ph in range(2):
            for pw in range(2):
                for dd in range(2):
                    for dh in range(2):
                        for dw in range(2):
                            kd = kmap.get((pd, dd))
                            kh = kmap.get((ph, dh))
                            kw = kmap.get((pw, dw))
                            if kd is None or kh is None or kw is None:
                                continue
                            w_all = w_all.at[dd, dh, dw, :, pd, ph, pw, :].set(
                                w2[kd, kh, kw])
    return w_all.reshape(8 * Ci, 8 * Co)


def prepare_params(params):
    """One-time prep: fold/transpose the deconv weight, tile its bias, cast to bf16."""
    prep = dict(params)
    prep["w1"] = params["w1"].astype(jnp.bfloat16)
    prep["w3"] = params["w3"].astype(jnp.bfloat16)
    prep["w2_fold_t"] = _fold_deconv_weight(params["w2"]).T.astype(jnp.bfloat16)
    prep["b2_fold"] = jnp.tile(params["b2"], 8)
    del prep["w2"]
    return prep


def _bn_affine(stats, count, gamma, beta, eps=1e-5):
    """Per-channel scale/shift from packed (C, 2) [sum, sum-of-squares] partials.
    Biased variance == PyTorch training-mode normalisation.
    NOTE: one-pass E[y^2]-mean^2 in f32; fine here, consider Welford merges at very
    large batch*spatial sizes."""
    mean = stats[:, 0] / count
    var = jnp.maximum(stats[:, 1] / count - mean * mean, 0.0)
    scale = gamma * jax.lax.rsqrt(var + eps)
    return scale, beta - mean * scale


# ---------------------------------------------------------------------------
# DecoderBlock forward (NCDHW in / NCDHW out)
# ---------------------------------------------------------------------------
@jax.jit
def decoder_block_forward(x_ncdhw, prep):
    N, Cin, D, H, W = x_ncdhw.shape
    Cmid = prep["w1"].shape[0]
    Cf = prep["w3"].shape[0]
    S1 = D * H * W
    D2, H2, W2 = 2 * D, 2 * H, 2 * W
    S3 = D2 * H2 * W2
    tm1 = _pick_tile(S1)
    tm3 = _pick_tile(S3)

    # ---- conv1 (1x1x1): NCDHW is already channel-major -> free reshape ----------------
    x_cm = x_ncdhw.reshape(N, Cin, S1)
    y1, st1 = _conv_matmul_cm(x_cm, prep["w1"], prep["b1"], tm1)          # bf16
    scale1, shift1 = _bn_affine(st1.sum((0, 1)), N * S1, prep["g1"], prep["bt1"])

    # ---- deconv2: BN1+ReLU + 8-tap gather + parity-folded matmul, all in-kernel -------
    y2, st2 = _deconv_parity_cm(y1, scale1, shift1,
                                prep["w2_fold_t"], prep["b2_fold"], (D, H, W))  # bf16
    st2c = st2.sum(0).reshape(8, Cmid, 2).sum(0)
    scale2, shift2 = _bn_affine(st2c, N * S3, prep["g2"], prep["bt2"])

    # Single parity de-interleave, on the smallest (Cmid-channel, bf16) tensor:
    # (pd,ph,pw,co, d,h,w) -> (co, 2d+pd, 2h+ph, 2w+pw).  Final NCDHW reshape is free.
    a2 = jnp.transpose(y2.reshape(N, 2, 2, 2, Cmid, D, H, W),
                       (0, 4, 5, 1, 6, 2, 7, 3)).reshape(N, Cmid, S3)

    # ---- conv3 (1x1x1) with BN2+ReLU fused into the matmul input ----------------------
    y3, st3 = _bn_relu_conv_matmul_cm(a2, scale2, shift2,
                                      prep["w3"], prep["b3"], tm3)        # bf16
    scale3, shift3 = _bn_affine(st3.sum((0, 1)), N * S3, prep["g3"], prep["bt3"])

    # ---- BN3 + ReLU: lane-dense channel-major tiles; reshape to NCDHW is free ---------
    out = _bn_relu_cm(y3, scale3, shift3, tm3)                            # f32
    return out.reshape(N, Cf, D2, H2, W2)


# ---------------------------------------------------------------------------
# Pure-JAX reference (for the correctness check only)
# ---------------------------------------------------------------------------
def reference_forward(x_ncdhw, params, eps=1e-5):
    x = jnp.transpose(x_ncdhw, (0, 2, 3, 4, 1))                    # NDHWC

    def bn_relu(v, gamma, beta):
        mean = jnp.mean(v, axis=(0, 1, 2, 3), keepdims=True)
        var = jnp.mean((v - mean) ** 2, axis=(0, 1, 2, 3), keepdims=True)
        return jnp.maximum((v - mean) * jax.lax.rsqrt(var + eps) * gamma + beta, 0.0)

    y1 = jnp.einsum("ndhwc,oc->ndhwo", x, params["w1"]) + params["b1"]
    a1 = bn_relu(y1, params["g1"], params["bt1"])
    # ConvTranspose3d(k=3, s=2, p=1, op=1) == dilated conv with the flipped kernel.
    w2f = params["w2"][::-1, ::-1, ::-1]
    y2 = jax.lax.conv_general_dilated(
        a1, w2f, window_strides=(1, 1, 1), padding=((1, 2), (1, 2), (1, 2)),
        lhs_dilation=(2, 2, 2),
        dimension_numbers=("NDHWC", "DHWIO", "NDHWC")) + params["b2"]
    a2 = bn_relu(y2, params["g2"], params["bt2"])
    y3 = jnp.einsum("ndhwc,oc->ndhwo", a2, params["w3"]) + params["b3"]
    a3 = bn_relu(y3, params["g3"], params["bt3"])
    return jnp.transpose(a3, (0, 4, 1, 2, 3))                      # back to NCDHW


# ---------------------------------------------------------------------------
if __name__ == "__main__":
    in_channels, n_filters = 64, 32
    N, D, H, W = 2, 8, 8, 8
    Cmid = in_channels // 4

    ks = jax.random.split(jax.random.PRNGKey(0), 13)
    params = {
        "w1": 0.1 * jax.random.normal(ks[0], (Cmid, in_channels), jnp.float32),
        "b1": 0.1 * jax.random.normal(ks[1], (Cmid,), jnp.float32),
        "g1": 1.0 + 0.1 * jax.random.normal(ks[2], (Cmid,), jnp.float32),
        "bt1": 0.1 * jax.random.normal(ks[3], (Cmid,), jnp.float32),
        "w2": 0.1 * jax.random.normal(ks[4], (3, 3, 3, Cmid, Cmid), jnp.float32),
        "b2": 0.1 * jax.random.normal(ks[5], (Cmid,), jnp.float32),
        "g2": 1.0 + 0.1 * jax.random.normal(ks[6], (Cmid,), jnp.float32),
        "bt2": 0.1 * jax.random.normal(ks[7], (Cmid,), jnp.float32),
        "w3": 0.1 * jax.random.normal(ks[8], (n_filters, Cmid), jnp.float32),
        "b3": 0.1 * jax.random.normal(ks[9], (n_filters,), jnp.float32),
        "g3": 1.0 + 0.1 * jax.random.normal(ks[10], (n_filters,), jnp.float32),
        "bt3": 0.1 * jax.random.normal(ks[11], (n_filters,), jnp.float32),
    }
    x = jax.random.normal(ks[12], (N, in_channels, D, H, W), jnp.float32)   # NCDHW

    prep = prepare_params(params)                     # one-time weight folding / casts
    out = jax.block_until_ready(decoder_block_forward(x, prep))
    ref = jax.block_until_ready(reference_forward(x, params))

    assert out.shape == (N, n_filters, 2 * D, 2 * H, 2 * W), out.shape
    # bf16 MXU operands + bf16 intermediate storage (f32 accumulation / BN math)
    # vs an all-f32 reference -> loose tolerance.
    if not jnp.allclose(out, ref, atol=5e-2, rtol=5e-2):
        raise AssertionError(
            f"mismatch vs reference, max abs err = {float(jnp.max(jnp.abs(out - ref)))}")
    print("KERNEL_OK")
</pallas_src>

<mosaic_0001>
module attributes {stable_mosaic.version = 11 : i64} {
  func.func @_mm_stats_kernel(%arg0: i32, %arg1: i32, %arg2: memref<1x64x512xf32, #tpu.memory_space<vmem>>, %arg3: memref<16x64xbf16, #tpu.memory_space<vmem>>, %arg4: memref<16x1xf32, #tpu.memory_space<vmem>>, %arg5: memref<1x16x512xbf16, #tpu.memory_space<vmem>>, %arg6: memref<1x1x16x2xf32, #tpu.memory_space<vmem>>) attributes {dimension_semantics = [#tpu.dimension_semantics<parallel>, #tpu.dimension_semantics<parallel>], iteration_bounds = array<i64: 2, 1>, scalar_prefetch = 0 : i64, scratch_operands = 0 : i64, tpu.core_type = #tpu.core_type<tc>, window_params = [{transform_indices = @transform_0, window_bounds = array<i64: 1, 64, 512>}, {pipeline_mode = #tpu.pipeline_mode<synchronous>, transform_indices = @transform_1, window_bounds = array<i64: 16, 64>}, {pipeline_mode = #tpu.pipeline_mode<synchronous>, transform_indices = @transform_2, window_bounds = array<i64: 16, 1>}, {transform_indices = @transform_3, window_bounds = array<i64: 1, 16, 512>}, {transform_indices = @transform_4, window_bounds = array<i64: 1, 1, 16, 2>}]} {
    %c0 = arith.constant 0 : index
    %c0_0 = arith.constant 0 : index
    %0 = vector.load %arg3[%c0, %c0_0] : memref<16x64xbf16, #tpu.memory_space<vmem>>, vector<16x64xbf16>
    %c0_1 = arith.constant 0 : index
    %c0_2 = arith.constant 0 : index
    %c0_3 = arith.constant 0 : index
    %1 = vector.load %arg2[%c0_1, %c0_2, %c0_3] : memref<1x64x512xf32, #tpu.memory_space<vmem>>, vector<1x64x512xf32>
    %2 = vector.shape_cast %1 : vector<1x64x512xf32> to vector<64x512xf32>
    %3 = arith.truncf %2 : vector<64x512xf32> to vector<64x512xbf16>
    %cst = arith.constant dense<0.000000e+00> : vector<16x512xf32>
    %4 = tpu.matmul %0, %3, %cst {dimension_numbers = #tpu.dot_dimension_numbers<[1], [0], [0], [1], [0, 0, 1, 1], [], []>} : vector<16x64xbf16>, vector<64x512xbf16>, vector<16x512xf32> -> vector<16x512xf32>
    %c0_4 = arith.constant 0 : index
    %c0_5 = arith.constant 0 : index
    %5 = vector.load %arg4[%c0_4, %c0_5] : memref<16x1xf32, #tpu.memory_space<vmem>>, vector<16x1xf32>
    %6 = vector.broadcast %5 : vector<16x1xf32> to vector<16x512xf32>
    %7 = arith.addf %4, %6 : vector<16x512xf32>
    %cst_6 = arith.constant dense<0.000000e+00> : vector<16xf32>
    %8 = vector.multi_reduction <add>, %7, %cst_6 [1] : vector<16x512xf32> to vector<16xf32>
    %9 = vector.shape_cast %8 : vector<16xf32> to vector<16x1xf32>
    %10 = arith.mulf %7, %7 : vector<16x512xf32>
    %cst_7 = arith.constant dense<0.000000e+00> : vector<16xf32>
    %11 = vector.multi_reduction <add>, %10, %cst_7 [1] : vector<16x512xf32> to vector<16xf32>
    %12 = vector.shape_cast %11 : vector<16xf32> to vector<16x1xf32>
    %13 = tpu.concatenate %9, %12 in 1 : vector<16x1xf32>, vector<16x1xf32> -> vector<16x2xf32>
    %c0_8 = arith.constant 0 : index
    %c0_9 = arith.constant 0 : index
    %c0_10 = arith.constant 0 : index
    %c0_11 = arith.constant 0 : index
    %14 = vector.load %arg6[%c0_8, %c0_9, %c0_10, %c0_11] : memref<1x1x16x2xf32, #tpu.memory_space<vmem>>, vector<1x1x16x2xf32>
    %15 = vector.shape_cast %14 : vector<1x1x16x2xf32> to vector<16x2xf32>
    %16 = vector.shape_cast %13 : vector<16x2xf32> to vector<1x1x16x2xf32>
    tpu.vector_store %arg6[%c0_8, %c0_9, %c0_10, %c0_11], %16 {strides = array<i32>} : memref<1x1x16x2xf32, #tpu.memory_space<vmem>>, vector<1x1x16x2xf32>,
    %17 = arith.truncf %7 : vector<16x512xf32> to vector<16x512xbf16>
    %c0_12 = arith.constant 0 : index
    %c0_13 = arith.constant 0 : index
    %c0_14 = arith.constant 0 : index
    %18 = vector.load %arg5[%c0_12, %c0_13, %c0_14] : memref<1x16x512xbf16, #tpu.memory_space<vmem>>, vector<1x16x512xbf16>
    %19 = vector.shape_cast %18 : vector<1x16x512xbf16> to vector<16x512xbf16>
    %20 = vector.shape_cast %17 : vector<16x512xbf16> to vector<1x16x512xbf16>
    tpu.vector_store %arg5[%c0_12, %c0_13, %c0_14], %20 {strides = array<i32>} : memref<1x16x512xbf16, #tpu.memory_space<vmem>>, vector<1x16x512xbf16>,
    return
  }
  func.func @transform_0(%arg0: i32, %arg1: i32) -> (i32, i32, i32) {
    %c0_i32 = arith.constant 0 : i32
    %c0_i32_0 = arith.constant 0 : i32
    return %arg0, %c0_i32, %arg1 : i32, i32, i32
  }
  func.func @transform_1(%arg0: i32, %arg1: i32) -> (i32, i32) {
    %c0_i32 = arith.constant 0 : i32
    %c0_i32_0 = arith.constant 0 : i32
    %c0_i32_1 = arith.constant 0 : i32
    return %c0_i32, %c0_i32_0 : i32, i32
  }
  func.func @transform_2(%arg0: i32, %arg1: i32) -> (i32, i32) {
    %c0_i32 = arith.constant 0 : i32
    %c0_i32_0 = arith.constant 0 : i32
    %c0_i32_1 = arith.constant 0 : i32
    return %c0_i32, %c0_i32_0 : i32, i32
  }
  func.func @transform_3(%arg0: i32, %arg1: i32) -> (i32, i32, i32) {
    %c0_i32 = arith.constant 0 : i32
    %c0_i32_0 = arith.constant 0 : i32
    return %arg0, %c0_i32, %arg1 : i32, i32, i32
  }
  func.func @transform_4(%arg0: i32, %arg1: i32) -> (i32, i32, i32, i32) {
    %c0_i32 = arith.constant 0 : i32
    %c0_i32_0 = arith.constant 0 : i32
    %c0_i32_1 = arith.constant 0 : i32
    return %arg0, %arg1, %c0_i32, %c0_i32_0 : i32, i32, i32, i32
  }
}

module attributes {stable_mosaic.version = 11 : i64} {
  func.func @kernel(%arg0: i32, %arg1: memref<1x16x512xbf16, #tpu.memory_space<vmem>>, %arg2: memref<16x1xf32, #tpu.memory_space<vmem>>, %arg3: memref<16x1xf32, #tpu.memory_space<vmem>>, %arg4: memref<8x512xf32, #tpu.memory_space<vmem>>, %arg5: memref<128x128xbf16, #tpu.memory_space<vmem>>, %arg6: memref<128x1xf32, #tpu.memory_space<vmem>>, %arg7: memref<1x128x512xbf16, #tpu.memory_space<vmem>>, %arg8: memref<1x128x2xf32, #tpu.memory_space<vmem>>) attributes {dimension_semantics = [#tpu.dimension_semantics<parallel>], iteration_bounds = array<i64: 2>, scalar_prefetch = 0 : i64, scratch_operands = 0 : i64, tpu.core_type = #tpu.core_type<tc>, window_params = [{transform_indices = @transform_0, window_bounds = array<i64: 1, 16, 512>}, {pipeline_mode = #tpu.pipeline_mode<synchronous>, transform_indices = @transform_1, window_bounds = array<i64: 16, 1>}, {pipeline_mode = #tpu.pipeline_mode<synchronous>, transform_indices = @transform_2, window_bounds = array<i64: 16, 1>}, {pipeline_mode = #tpu.pipeline_mode<synchronous>, transform_indices = @transform_3, window_bounds = array<i64: 8, 512>}, {pipeline_mode = #tpu.pipeline_mode<synchronous>, transform_indices = @transform_4, window_bounds = array<i64: 128, 128>}, {pipeline_mode = #tpu.pipeline_mode<synchronous>, transform_indices = @transform_5, window_bounds = array<i64: 128, 1>}, {transform_indices = @transform_6, window_bounds = array<i64: 1, 128, 512>}, {transform_indices = @transform_7, window_bounds = array<i64: 1, 128, 2>}]} {
    %c0 = arith.constant 0 : index
    %c0_0 = arith.constant 0 : index
    %c0_1 = arith.constant 0 : index
    %0 = vector.load %arg1[%c0, %c0_0, %c0_1] : memref<1x16x512xbf16, #tpu.memory_space<vmem>>, vector<1x16x512xbf16>
    %1 = vector.shape_cast %0 : vector<1x16x512xbf16> to vector<16x512xbf16>
    %2 = arith.extf %1 : vector<16x512xbf16> to vector<16x512xf32>
    %c0_2 = arith.constant 0 : index
    %c0_3 = arith.constant 0 : index
    %3 = vector.load %arg2[%c0_2, %c0_3] : memref<16x1xf32, #tpu.memory_space<vmem>>, vector<16x1xf32>
    %4 = vector.broadcast %3 : vector<16x1xf32> to vector<16x512xf32>
    %5 = arith.mulf %2, %4 : vector<16x512xf32>
    %c0_4 = arith.constant 0 : index
    %c0_5 = arith.constant 0 : index
    %6 = vector.load %arg3[%c0_4, %c0_5] : memref<16x1xf32, #tpu.memory_space<vmem>>, vector<16x1xf32>
    %7 = vector.broadcast %6 : vector<16x1xf32> to vector<16x512xf32>
    %8 = arith.addf %5, %7 : vector<16x512xf32>
    %cst = arith.constant 0.000000e+00 : f32
    %9 = vector.broadcast %cst : f32 to vector<16x512xf32>
    %10 = arith.maximumf %8, %9 : vector<16x512xf32>
    %cst_6 = arith.constant 0.000000e+00 : f32
    %11 = vector.broadcast %cst_6 : f32 to vector<16x128xf32>
    %12 = tpu.concatenate %10, %11 in 1 : vector<16x512xf32>, vector<16x128xf32> -> vector<16x640xf32>
    %c0_7 = arith.constant 0 : index
    %c0_8 = arith.constant 0 : index
    %13 = vector.load %arg4[%c0_7, %c0_8] : memref<8x512xf32, #tpu.memory_space<vmem>>, vector<8x512xf32>
    %14 = vector.extract_strided_slice %12 {offsets = [0, 0], sizes = [16, 512], strides = [1, 1]} : vector<16x640xf32> to vector<16x512xf32>
    %15 = vector.extract_strided_slice %13 {offsets = [0, 0], sizes = [1, 512], strides = [1, 1]} : vector<8x512xf32> to vector<1x512xf32>
    %16 = vector.broadcast %15 : vector<1x512xf32> to vector<16x512xf32>
    %17 = arith.mulf %14, %16 : vector<16x512xf32>
    %18 = vector.extract_strided_slice %12 {offsets = [0, 1], sizes = [16, 512], strides = [1, 1]} : vector<16x640xf32> to vector<16x512xf32>
    %19 = vector.extract_strided_slice %13 {offsets = [1, 0], sizes = [1, 512], strides = [1, 1]} : vector<8x512xf32> to vector<1x512xf32>
    %20 = vector.broadcast %19 : vector<1x512xf32> to vector<16x512xf32>
    %21 = arith.mulf %18, %20 : vector<16x512xf32>
    %22 = vector.extract_strided_slice %12 {offsets = [0, 8], sizes = [16, 512], strides = [1, 1]} : vector<16x640xf32> to vector<16x512xf32>
    %23 = vector.extract_strided_slice %13 {offsets = [2, 0], sizes = [1, 512], strides = [1, 1]} : vector<8x512xf32> to vector<1x512xf32>
    %24 = vector.broadcast %23 : vector<1x512xf32> to vector<16x512xf32>
    %25 = arith.mulf %22, %24 : vector<16x512xf32>
    %26 = vector.extract_strided_slice %12 {offsets = [0, 9], sizes = [16, 512], strides = [1, 1]} : vector<16x640xf32> to vector<16x512xf32>
    %27 = vector.extract_strided_slice %13 {offsets = [3, 0], sizes = [1, 512], strides = [1, 1]} : vector<8x512xf32> to vector<1x512xf32>
    %28 = vector.broadcast %27 : vector<1x512xf32> to vector<16x512xf32>
    %29 = arith.mulf %26, %28 : vector<16x512xf32>
    %30 = vector.extract_strided_slice %12 {offsets = [0, 64], sizes = [16, 512], strides = [1, 1]} : vector<16x640xf32> to vector<16x512xf32>
    %31 = vector.extract_strided_slice %13 {offsets = [4, 0], sizes = [1, 512], strides = [1, 1]} : vector<8x512xf32> to vector<1x512xf32>
    %32 = vector.broadcast %31 : vector<1x512xf32> to vector<16x512xf32>
    %33 = arith.mulf %30, %32 : vector<16x512xf32>
    %34 = vector.extract_strided_slice %12 {offsets = [0, 65], sizes = [16, 512], strides = [1, 1]} : vector<16x640xf32> to vector<16x512xf32>
    %35 = vector.extract_strided_slice %13 {offsets = [5, 0], sizes = [1, 512], strides = [1, 1]} : vector<8x512xf32> to vector<1x512xf32>
    %36 = vector.broadcast %35 : vector<1x512xf32> to vector<16x512xf32>
    %37 = arith.mulf %34, %36 : vector<16x512xf32>
    %38 = vector.extract_strided_slice %12 {offsets = [0, 72], sizes = [16, 512], strides = [1, 1]} : vector<16x640xf32> to vector<16x512xf32>
    %39 = vector.extract_strided_slice %13 {offsets = [6, 0], sizes = [1, 512], strides = [1, 1]} : vector<8x512xf32> to vector<1x512xf32>
    %40 = vector.broadcast %39 : vector<1x512xf32> to vector<16x512xf32>
    %41 = arith.mulf %38, %40 : vector<16x512xf32>
    %42 = vector.extract_strided_slice %12 {offsets = [0, 73], sizes = [16, 512], strides = [1, 1]} : vector<16x640xf32> to vector<16x512xf32>
    %43 = vector.extract_strided_slice %13 {offsets = [7, 0], sizes = [1, 512], strides = [1, 1]} : vector<8x512xf32> to vector<1x512xf32>
    %44 = vector.broadcast %43 : vector<1x512xf32> to vector<16x512xf32>
    %45 = arith.mulf %42, %44 : vector<16x512xf32>
    %46 = tpu.concatenate %17, %21, %25, %29, %33, %37, %41, %45 in 0 : vector<16x512xf32>, vector<16x512xf32>, vector<16x512xf32>, vector<16x512xf32>, vector<16x512xf32>, vector<16x512xf32>, vector<16x512xf32>, vector<16x512xf32> -> vector<128x512xf32>
    %47 = arith.truncf %46 : vector<128x512xf32> to vector<128x512xbf16>
    %c0_9 = arith.constant 0 : index
    %c0_10 = arith.constant 0 : index
    %48 = vector.load %arg5[%c0_9, %c0_10] : memref<128x128xbf16, #tpu.memory_space<vmem>>, vector<128x128xbf16>
    %cst_11 = arith.constant dense<0.000000e+00> : vector<128x512xf32>
    %49 = tpu.matmul %48, %47, %cst_11 {dimension_numbers = #tpu.dot_dimension_numbers<[1], [0], [0], [1], [0, 0, 1, 1], [], []>} : vector<128x128xbf16>, vector<128x512xbf16>, vector<128x512xf32> -> vector<128x512xf32>
    %c0_12 = arith.constant 0 : index
    %c0_13 = arith.constant 0 : index
    %50 = vector.load %arg6[%c0_12, %c0_13] : memref<128x1xf32, #tpu.memory_space<vmem>>, vector<128x1xf32>
    %51 = vector.broadcast %50 : vector<128x1xf32> to vector<128x512xf32>
    %52 = arith.addf %49, %51 : vector<128x512xf32>
    %cst_14 = arith.constant dense<0.000000e+00> : vector<128xf32>
    %53 = vector.multi_reduction <add>, %52, %cst_14 [1] : vector<128x512xf32> to vector<128xf32>
    %54 = vector.shape_cast %53 : vector<128xf32> to vector<128x1xf32>
    %55 = arith.mulf %52, %52 : vector<128x512xf32>
    %cst_15 = arith.constant dense<0.000000e+00> : vector<128xf32>
    %56 = vector.multi_reduction <add>, %55, %cst_15 [1] : vector<128x512xf32> to vector<128xf32>
    %57 = vector.shape_cast %56 : vector<128xf32> to vector<128x1xf32>
    %58 = tpu.concatenate %54, %57 in 1 : vector<128x1xf32>, vector<128x1xf32> -> vector<128x2xf32>
    %c0_16 = arith.constant 0 : index
    %c0_17 = arith.constant 0 : index
    %c0_18 = arith.constant 0 : index
    %59 = vector.load %arg8[%c0_16, %c0_17, %c0_18] : memref<1x128x2xf32, #tpu.memory_space<vmem>>, vector<1x128x2xf32>
    %60 = vector.shape_cast %59 : vector<1x128x2xf32> to vector<128x2xf32>
    %61 = vector.shape_cast %58 : vector<128x2xf32> to vector<1x128x2xf32>
    tpu.vector_store %arg8[%c0_16, %c0_17, %c0_18], %61 {strides = array<i32>} : memref<1x128x2xf32, #tpu.memory_space<vmem>>, vector<1x128x2xf32>,
    %62 = arith.truncf %52 : vector<128x512xf32> to vector<128x512xbf16>
    %c0_19 = arith.constant 0 : index
    %c0_20 = arith.constant 0 : index
    %c0_21 = arith.constant 0 : index
    %63 = vector.load %arg7[%c0_19, %c0_20, %c0_21] : memref<1x128x512xbf16, #tpu.memory_space<vmem>>, vector<1x128x512xbf16>
    %64 = vector.shape_cast %63 : vector<1x128x512xbf16> to vector<128x512xbf16>
    %65 = vector.shape_cast %62 : vector<128x512xbf16> to vector<1x128x512xbf16>
    tpu.vector_store %arg7[%c0_19, %c0_20, %c0_21], %65 {strides = array<i32>} : memref<1x128x512xbf16, #tpu.memory_space<vmem>>, vector<1x128x512xbf16>,
    return
  }
  func.func @transform_0(%arg0: i32) -> (i32, i32, i32) {
    %c0_i32 = arith.constant 0 : i32
    %c0_i32_0 = arith.constant 0 : i32
    %c0_i32_1 = arith.constant 0 : i32
    return %arg0, %c0_i32, %c0_i32_0 : i32, i32, i32
  }
  func.func @transform_1(%arg0: i32) -> (i32, i32) {
    %c0_i32 = arith.constant 0 : i32
    %c0_i32_0 = arith.constant 0 : i32
    %c0_i32_1 = arith.constant 0 : i32
    return %c0_i32, %c0_i32_0 : i32, i32
  }
  func.func @transform_2(%arg0: i32) -> (i32, i32) {
    %c0_i32 = arith.constant 0 : i32
    %c0_i32_0 = arith.constant 0 : i32
    %c0_i32_1 = arith.constant 0 : i32
    return %c0_i32, %c0_i32_0 : i32, i32
  }
  func.func @transform_3(%arg0: i32) -> (i32, i32) {
    %c0_i32 = arith.constant 0 : i32
    %c0_i32_0 = arith.constant 0 : i32
    %c0_i32_1 = arith.constant 0 : i32
    return %c0_i32, %c0_i32_0 : i32, i32
  }
  func.func @transform_4(%arg0: i32) -> (i32, i32) {
    %c0_i32 = arith.constant 0 : i32
    %c0_i32_0 = arith.constant 0 : i32
    %c0_i32_1 = arith.constant 0 : i32
    return %c0_i32, %c0_i32_0 : i32, i32
  }
  func.func @transform_5(%arg0: i32) -> (i32, i32) {
    %c0_i32 = arith.constant 0 : i32
    %c0_i32_0 = arith.constant 0 : i32
    %c0_i32_1 = arith.constant 0 : i32
    return %c0_i32, %c0_i32_0 : i32, i32
  }
  func.func @transform_6(%arg0: i32) -> (i32, i32, i32) {
    %c0_i32 = arith.constant 0 : i32
    %c0_i32_0 = arith.constant 0 : i32
    %c0_i32_1 = arith.constant 0 : i32
    return %arg0, %c0_i32, %c0_i32_0 : i32, i32, i32
  }
  func.func @transform_7(%arg0: i32) -> (i32, i32, i32) {
    %c0_i32 = arith.constant 0 : i32
    %c0_i32_0 = arith.constant 0 : i32
    %c0_i32_1 = arith.constant 0 : i32
    return %arg0, %c0_i32, %c0_i32_0 : i32, i32, i32
  }
}

module attributes {stable_mosaic.version = 11 : i64} {
  func.func @_bn_relu_mm_stats_kernel(%arg0: i32, %arg1: i32, %arg2: memref<1x16x2048xbf16, #tpu.memory_space<vmem>>, %arg3: memref<16x1xf32, #tpu.memory_space<vmem>>, %arg4: memref<16x1xf32, #tpu.memory_space<vmem>>, %arg5: memref<32x16xbf16, #tpu.memory_space<vmem>>, %arg6: memref<32x1xf32, #tpu.memory_space<vmem>>, %arg7: memref<1x32x2048xbf16, #tpu.memory_space<vmem>>, %arg8: memref<1x1x32x2xf32, #tpu.memory_space<vmem>>) attributes {dimension_semantics = [#tpu.dimension_semantics<parallel>, #tpu.dimension_semantics<parallel>], iteration_bounds = array<i64: 2, 2>, scalar_prefetch = 0 : i64, scratch_operands = 0 : i64, tpu.core_type = #tpu.core_type<tc>, window_params = [{transform_indices = @transform_0, window_bounds = array<i64: 1, 16, 2048>}, {pipeline_mode = #tpu.pipeline_mode<synchronous>, transform_indices = @transform_1, window_bounds = array<i64: 16, 1>}, {pipeline_mode = #tpu.pipeline_mode<synchronous>, transform_indices = @transform_2, window_bounds = array<i64: 16, 1>}, {pipeline_mode = #tpu.pipeline_mode<synchronous>, transform_indices = @transform_3, window_bounds = array<i64: 32, 16>}, {pipeline_mode = #tpu.pipeline_mode<synchronous>, transform_indices = @transform_4, window_bounds = array<i64: 32, 1>}, {transform_indices = @transform_5, window_bounds = array<i64: 1, 32, 2048>}, {transform_indices = @transform_6, window_bounds = array<i64: 1, 1, 32, 2>}]} {
    %c0 = arith.constant 0 : index
    %c0_0 = arith.constant 0 : index
    %c0_1 = arith.constant 0 : index
    %0 = vector.load %arg2[%c0, %c0_0, %c0_1] : memref<1x16x2048xbf16, #tpu.memory_space<vmem>>, vector<1x16x2048xbf16>
    %1 = vector.shape_cast %0 : vector<1x16x2048xbf16> to vector<16x2048xbf16>
    %2 = arith.extf %1 : vector<16x2048xbf16> to vector<16x2048xf32>
    %c0_2 = arith.constant 0 : index
    %c0_3 = arith.constant 0 : index
    %3 = vector.load %arg3[%c0_2, %c0_3] : memref<16x1xf32, #tpu.memory_space<vmem>>, vector<16x1xf32>
    %4 = vector.broadcast %3 : vector<16x1xf32> to vector<16x2048xf32>
    %5 = arith.mulf %2, %4 : vector<16x2048xf32>
    %c0_4 = arith.constant 0 : index
    %c0_5 = arith.constant 0 : index
    %6 = vector.load %arg4[%c0_4, %c0_5] : memref<16x1xf32, #tpu.memory_space<vmem>>, vector<16x1xf32>
    %7 = vector.broadcast %6 : vector<16x1xf32> to vector<16x2048xf32>
    %8 = arith.addf %5, %7 : vector<16x2048xf32>
    %cst = arith.constant 0.000000e+00 : f32
    %9 = vector.broadcast %cst : f32 to vector<16x2048xf32>
    %10 = arith.maximumf %8, %9 : vector<16x2048xf32>
    %c0_6 = arith.constant 0 : index
    %c0_7 = arith.constant 0 : index
    %11 = vector.load %arg5[%c0_6, %c0_7] : memref<32x16xbf16, #tpu.memory_space<vmem>>, vector<32x16xbf16>
    %12 = arith.truncf %10 : vector<16x2048xf32> to vector<16x2048xbf16>
    %cst_8 = arith.constant dense<0.000000e+00> : vector<32x2048xf32>
    %13 = tpu.matmul %11, %12, %cst_8 {dimension_numbers = #tpu.dot_dimension_numbers<[1], [0], [0], [1], [0, 0, 1, 1], [], []>} : vector<32x16xbf16>, vector<16x2048xbf16>, vector<32x2048xf32> -> vector<32x2048xf32>
    %c0_9 = arith.constant 0 : index
    %c0_10 = arith.constant 0 : index
    %14 = vector.load %arg6[%c0_9, %c0_10] : memref<32x1xf32, #tpu.memory_space<vmem>>, vector<32x1xf32>
    %15 = vector.broadcast %14 : vector<32x1xf32> to vector<32x2048xf32>
    %16 = arith.addf %13, %15 : vector<32x2048xf32>
    %cst_11 = arith.constant dense<0.000000e+00> : vector<32xf32>
    %17 = vector.multi_reduction <add>, %16, %cst_11 [1] : vector<32x2048xf32> to vector<32xf32>
    %18 = vector.shape_cast %17 : vector<32xf32> to vector<32x1xf32>
    %19 = arith.mulf %16, %16 : vector<32x2048xf32>
    %cst_12 = arith.constant dense<0.000000e+00> : vector<32xf32>
    %20 = vector.multi_reduction <add>, %19, %cst_12 [1] : vector<32x2048xf32> to vector<32xf32>
    %21 = vector.shape_cast %20 : vector<32xf32> to vector<32x1xf32>
    %22 = tpu.concatenate %18, %21 in 1 : vector<32x1xf32>, vector<32x1xf32> -> vector<32x2xf32>
    %c0_13 = arith.constant 0 : index
    %c0_14 = arith.constant 0 : index
    %c0_15 = arith.constant 0 : index
    %c0_16 = arith.constant 0 : index
    %23 = vector.load %arg8[%c0_13, %c0_14, %c0_15, %c0_16] : memref<1x1x32x2xf32, #tpu.memory_space<vmem>>, vector<1x1x32x2xf32>
    %24 = vector.shape_cast %23 : vector<1x1x32x2xf32> to vector<32x2xf32>
    %25 = vector.shape_cast %22 : vector<32x2xf32> to vector<1x1x32x2xf32>
    tpu.vector_store %arg8[%c0_13, %c0_14, %c0_15, %c0_16], %25 {strides = array<i32>} : memref<1x1x32x2xf32, #tpu.memory_space<vmem>>, vector<1x1x32x2xf32>,
    %26 = arith.truncf %16 : vector<32x2048xf32> to vector<32x2048xbf16>
    %c0_17 = arith.constant 0 : index
    %c0_18 = arith.constant 0 : index
    %c0_19 = arith.constant 0 : index
    %27 = vector.load %arg7[%c0_17, %c0_18, %c0_19] : memref<1x32x2048xbf16, #tpu.memory_space<vmem>>, vector<1x32x2048xbf16>
    %28 = vector.shape_cast %27 : vector<1x32x2048xbf16> to vector<32x2048xbf16>
    %29 = vector.shape_cast %26 : vector<32x2048xbf16> to vector<1x32x2048xbf16>
    tpu.vector_store %arg7[%c0_17, %c0_18, %c0_19], %29 {strides = array<i32>} : memref<1x32x2048xbf16, #tpu.memory_space<vmem>>, vector<1x32x2048xbf16>,
    return
  }
  func.func @transform_0(%arg0: i32, %arg1: i32) -> (i32, i32, i32) {
    %c0_i32 = arith.constant 0 : i32
    %c0_i32_0 = arith.constant 0 : i32
    return %arg0, %c0_i32, %arg1 : i32, i32, i32
  }
  func.func @transform_1(%arg0: i32, %arg1: i32) -> (i32, i32) {
    %c0_i32 = arith.constant 0 : i32
    %c0_i32_0 = arith.constant 0 : i32
    %c0_i32_1 = arith.constant 0 : i32
    return %c0_i32, %c0_i32_0 : i32, i32
  }
  func.func @transform_2(%arg0: i32, %arg1: i32) -> (i32, i32) {
    %c0_i32 = arith.constant 0 : i32
    %c0_i32_0 = arith.constant 0 : i32
    %c0_i32_1 = arith.constant 0 : i32
    return %c0_i32, %c0_i32_0 : i32, i32
  }
  func.func @transform_3(%arg0: i32, %arg1: i32) -> (i32, i32) {
    %c0_i32 = arith.constant 0 : i32
    %c0_i32_0 = arith.constant 0 : i32
    %c0_i32_1 = arith.constant 0 : i32
    return %c0_i32, %c0_i32_0 : i32, i32
  }
  func.func @transform_4(%arg0: i32, %arg1: i32) -> (i32, i32) {
    %c0_i32 = arith.constant 0 : i32
    %c0_i32_0 = arith.constant 0 : i32
    %c0_i32_1 = arith.constant 0 : i32
    return %c0_i32, %c0_i32_0 : i32, i32
  }
  func.func @transform_5(%arg0: i32, %arg1: i32) -> (i32, i32, i32) {
    %c0_i32 = arith.constant 0 : i32
    %c0_i32_0 = arith.constant 0 : i32
    return %arg0, %c0_i32, %arg1 : i32, i32, i32
  }
  func.func @transform_6(%arg0: i32, %arg1: i32) -> (i32, i32, i32, i32) {
    %c0_i32 = arith.constant 0 : i32
    %c0_i32_0 = arith.constant 0 : i32
    %c0_i32_1 = arith.constant 0 : i32
    return %arg0, %arg1, %c0_i32, %c0_i32_0 : i32, i32, i32, i32
  }
}

module attributes {stable_mosaic.version = 11 : i64} {
  func.func @_bn_relu_kernel(%arg0: i32, %arg1: i32, %arg2: memref<1x32x2048xbf16, #tpu.memory_space<vmem>>, %arg3: memref<32x1xf32, #tpu.memory_space<vmem>>, %arg4: memref<32x1xf32, #tpu.memory_space<vmem>>, %arg5: memref<1x32x2048xf32, #tpu.memory_space<vmem>>) attributes {dimension_semantics = [#tpu.dimension_semantics<parallel>, #tpu.dimension_semantics<parallel>], iteration_bounds = array<i64: 2, 2>, scalar_prefetch = 0 : i64, scratch_operands = 0 : i64, tpu.core_type = #tpu.core_type<tc>, window_params = [{transform_indices = @transform_0, window_bounds = array<i64: 1, 32, 2048>}, {pipeline_mode = #tpu.pipeline_mode<synchronous>, transform_indices = @transform_1, window_bounds = array<i64: 32, 1>}, {pipeline_mode = #tpu.pipeline_mode<synchronous>, transform_indices = @transform_2, window_bounds = array<i64: 32, 1>}, {transform_indices = @transform_3, window_bounds = array<i64: 1, 32, 2048>}]} {
    %c0 = arith.constant 0 : index
    %c0_0 = arith.constant 0 : index
    %c0_1 = arith.constant 0 : index
    %0 = vector.load %arg2[%c0, %c0_0, %c0_1] : memref<1x32x2048xbf16, #tpu.memory_space<vmem>>, vector<1x32x2048xbf16>
    %1 = vector.shape_cast %0 : vector<1x32x2048xbf16> to vector<32x2048xbf16>
    %2 = arith.extf %1 : vector<32x2048xbf16> to vector<32x2048xf32>
    %c0_2 = arith.constant 0 : index
    %c0_3 = arith.constant 0 : index
    %3 = vector.load %arg3[%c0_2, %c0_3] : memref<32x1xf32, #tpu.memory_space<vmem>>, vector<32x1xf32>
    %4 = vector.broadcast %3 : vector<32x1xf32> to vector<32x2048xf32>
    %5 = arith.mulf %2, %4 : vector<32x2048xf32>
    %c0_4 = arith.constant 0 : index
    %c0_5 = arith.constant 0 : index
    %6 = vector.load %arg4[%c0_4, %c0_5] : memref<32x1xf32, #tpu.memory_space<vmem>>, vector<32x1xf32>
    %7 = vector.broadcast %6 : vector<32x1xf32> to vector<32x2048xf32>
    %8 = arith.addf %5, %7 : vector<32x2048xf32>
    %cst = arith.constant 0.000000e+00 : f32
    %9 = vector.broadcast %cst : f32 to vector<32x2048xf32>
    %10 = arith.maximumf %8, %9 : vector<32x2048xf32>
    %c0_6 = arith.constant 0 : index
    %c0_7 = arith.constant 0 : index
    %c0_8 = arith.constant 0 : index
    %11 = vector.load %arg5[%c0_6, %c0_7, %c0_8] : memref<1x32x2048xf32, #tpu.memory_space<vmem>>, vector<1x32x2048xf32>
    %12 = vector.shape_cast %11 : vector<1x32x2048xf32> to vector<32x2048xf32>
    %13 = vector.shape_cast %10 : vector<32x2048xf32> to vector<1x32x2048xf32>
    tpu.vector_store %arg5[%c0_6, %c0_7, %c0_8], %13 {strides = array<i32>} : memref<1x32x2048xf32, #tpu.memory_space<vmem>>, vector<1x32x2048xf32>,
    return
  }
  func.func @transform_0(%arg0: i32, %arg1: i32) -> (i32, i32, i32) {
    %c0_i32 = arith.constant 0 : i32
    %c0_i32_0 = arith.constant 0 : i32
    return %arg0, %c0_i32, %arg1 : i32, i32, i32
  }
  func.func @transform_1(%arg0: i32, %arg1: i32) -> (i32, i32) {
    %c0_i32 = arith.constant 0 : i32
    %c0_i32_0 = arith.constant 0 : i32
    %c0_i32_1 = arith.constant 0 : i32
    return %c0_i32, %c0_i32_0 : i32, i32
  }
  func.func @transform_2(%arg0: i32, %arg1: i32) -> (i32, i32) {
    %c0_i32 = arith.constant 0 : i32
    %c0_i32_0 = arith.constant 0 : i32
    %c0_i32_1 = arith.constant 0 : i32
    return %c0_i32, %c0_i32_0 : i32, i32
  }
  func.func @transform_3(%arg0: i32, %arg1: i32) -> (i32, i32, i32) {
    %c0_i32 = arith.constant 0 : i32
    %c0_i32_0 = arith.constant 0 : i32
    return %arg0, %c0_i32, %arg1 : i32, i32, i32
  }
}

</mosaic_0001>

<llo_original>
// kernel: decoder_block_forward.4
$region0: #{decoder_block_forward.4}
  #allocation0 [shape = 'u32[]', space=smem, size = 0x4, offset = 0x4, fixed_abs, tag = 'smem constant byte address 0x4 - core index']
  #allocation1 [shape = 'u32[144,128]{1,0:T(1,128)}', space=vmem, size = 0x12000, scoped, tag = 'internal scratch']
  %s0 = inlined_call_operand.vmem [shape: f32[2,64,512], index: 0, kind: input, shape index: {}]
  %s1 = inlined_call_operand.hbm [shape: bf16[16,64], index: 1, kind: input, shape index: {}]
  %s2 = inlined_call_operand.vmem [shape: f32[16,1], index: 2, kind: input, shape index: {}]
  %s3 = inlined_call_operand.vmem [shape: bf16[2,16,512], index: 3, kind: output, shape index: {0}]
  %s4 = inlined_call_operand.vmem [shape: f32[2,1,16,2], index: 4, kind: output, shape index: {1}]
  %5 = xla_tuple %s3, %s4
  %s6 = sld [smem:[#allocation0]]
  $region57: #{decoder_block_forward.4} parent=0
    _
  %s8 = ssub.s32 1, %s6
  %s9 = scalar_select 0, %s8, %s6
  $region1: #{decoder_block_forward.4} parent=0
    #allocation2 [shape = 'u8[4096]{0}', space=vmem, size = 0x1000, scoped, tag = 'input window, operand 1, single buffered']
    #allocation3 [shape = 's32[2]{0}', space=sflag, size = 0x8, scoped, tag = 'scoped memory for decoder_block_forward.4']
    %10 = vsyncpa [#allocation3], 0
    loop: start=0, step=1, limit=4
    $region2: #{decoder_block_forward.4} parent=1 // loop_pre_header
      _
    $region3: #{decoder_block_forward.4} parent=1 // loop_header
      %s12 = sphi 0, %s16
      %p13 = scmp.ge.s32.totalorder %s12, 4
      %s19 = sphi 0, %s31
      %s20 = sphi 0, %s27
      %s21 = sphi 0, %s19
      %s22 = sphi 0, %s20
      %s23 = sphi 0, %s21
      %s24 = sphi 0, %s22
      %s36 = sphi 0, %s38
      %s39 = sphi 0, %s36
      %s40 = sphi 0, %s39
      %s56 = sphi 0, %s40
      %s60 = sphi 0, %s60
      %s62 = sphi 0, %s60
      %s63 = sphi 0, %s62
      %s77 = sphi 0, %s63
      %s81 = sphi 0, %s81
      %s83 = sphi 0, %s81
      %s84 = sphi 0, %s83
      %s98 = sphi 0, %s84
      %s106 = sphi 0, %s108
      %s109 = sphi 0, %s106
      %s110 = sphi 0, %s109
      %s126 = sphi 0, %s110
      %s134 = sphi 0, %s136
      %s137 = sphi 0, %s134
      %s138 = sphi 0, %s137
      %s154 = sphi 0, %s138
    $region4: #{decoder_block_forward.4} parent=1 // loop_header_branch
      %15 = sbr.rel (%p13) target = $region8
    $region5: #{decoder_block_forward.4} parent=1 // loop_body
      %s17 = ssub.s32 %s12, 1
      %s18 = ssub.s32 %s12, 2
      %s25 = sadd.s32 1, %s20
      %p26 = scmp.ge.s32.totalorder %s25, 1
      %s27 = scalar_select %p26, 0, %s25
      %s28 = sadd.s32 1, %s19
      %s29 = scalar_select %p26, %s28, %s19
      %p30 = scmp.ge.s32.totalorder %s29, 2
      %s31 = scalar_select %p30, 0, %s29
      %s32 = ssub.s32 %s19, %s31
      %s33 = ssub.s32 %s20, %s27
      %s34 = sor.u32 %s32, %s33
      %p35 = scmp.eq.s32.totalorder %s34, 0
      %s37 = sadd.s32 %s36, 1
      %s38 = scalar_select %p35, %s36, %s37
      %p41 = pneg %p35
      %p42 = scmp.eq.s32.totalorder %s12, 1
      %p43 = por %p41, %p42
      %p44 = scmp.ne.s32.totalorder %s36, %s39
      %p45 = scmp.eq.s32.totalorder %s12, 0
      %p46 = por %p44, %p45
      %p47 = scmp.ne.s32.totalorder %s36, %s39
      %p48 = scmp.eq.s32.totalorder %s17, 1
      %p49 = por %p47, %p48
      %p50 = scmp.ne.s32.totalorder %s39, %s40
      %p51 = scmp.eq.s32.totalorder %s17, 0
      %p52 = por %p50, %p51
      %p53 = scmp.ne.s32.totalorder %s39, %s40
      %p54 = scmp.eq.s32.totalorder %s18, 1
      %p55 = por %p53, %p54
      %p57 = scmp.ne.s32.totalorder %s40, %s56
      %p58 = scmp.eq.s32.totalorder %s18, 0
      %p59 = por %p57, %p58
      %s61 = sadd.s32 %s60, 1
      %p64 = scmp.eq.s32.totalorder %s12, 1
      %p65 = scmp.ne.s32.totalorder %s60, %s62
      %p66 = scmp.eq.s32.totalorder %s12, 0
      %p67 = por %p65, %p66
      %p68 = scmp.ne.s32.totalorder %s60, %s62
      %p69 = scmp.eq.s32.totalorder %s17, 1
      %p70 = por %p68, %p69
      %p71 = scmp.ne.s32.totalorder %s62, %s63
      %p72 = scmp.eq.s32.totalorder %s17, 0
      %p73 = por %p71, %p72
      %p74 = scmp.ne.s32.totalorder %s62, %s63
      %p75 = scmp.eq.s32.totalorder %s18, 1
      %p76 = por %p74, %p75
      %p78 = scmp.ne.s32.totalorder %s63, %s77
      %p79 = scmp.eq.s32.totalorder %s18, 0
      %p80 = por %p78, %p79
      %s82 = sadd.s32 %s81, 1
      %p85 = scmp.eq.s32.totalorder %s12, 1
      %p86 = scmp.ne.s32.totalorder %s81, %s83
      %p87 = scmp.eq.s32.totalorder %s12, 0
      %p88 = por %p86, %p87
      %p89 = scmp.ne.s32.totalorder %s81, %s83
      %p90 = scmp.eq.s32.totalorder %s17, 1
      %p91 = por %p89, %p90
      %p92 = scmp.ne.s32.totalorder %s83, %s84
      %p93 = scmp.eq.s32.totalorder %s17, 0
      %p94 = por %p92, %p93
      %p95 = scmp.ne.s32.totalorder %s83, %s84
      %p96 = scmp.eq.s32.totalorder %s18, 1
      %p97 = por %p95, %p96
      %p99 = scmp.ne.s32.totalorder %s84, %s98
      %p100 = scmp.eq.s32.totalorder %s18, 0
      %p101 = por %p99, %p100
      %s102 = ssub.s32 %s19, %s31
      %s103 = ssub.s32 %s20, %s27
      %s104 = sor.u32 %s102, %s103
      %p105 = scmp.eq.s32.totalorder %s104, 0
      %s107 = sadd.s32 %s106, 1
      %s108 = scalar_select %p105, %s106, %s107
      %p111 = pneg %p105
      %p112 = scmp.eq.s32.totalorder %s12, 1
      %p113 = por %p111, %p112
      %p114 = scmp.ne.s32.totalorder %s106, %s109
      %p115 = scmp.eq.s32.totalorder %s12, 0
      %p116 = por %p114, %p115
      %p117 = scmp.ne.s32.totalorder %s106, %s109
      %p118 = scmp.eq.s32.totalorder %s17, 1
      %p119 = por %p117, %p118
      %p120 = scmp.ne.s32.totalorder %s109, %s110
      %p121 = scmp.eq.s32.totalorder %s17, 0
      %p122 = por %p120, %p121
      %p123 = scmp.ne.s32.totalorder %s109, %s110
      %p124 = scmp.eq.s32.totalorder %s18, 1
      %p125 = por %p123, %p124
      %p127 = scmp.ne.s32.totalorder %s110, %s126
      %p128 = scmp.eq.s32.totalorder %s18, 0
      %p129 = por %p127, %p128
      %s130 = ssub.s32 %s19, %s31
      %s131 = ssub.s32 %s20, %s27
      %s132 = sor.u32 %s130, %s131
      %p133 = scmp.eq.s32.totalorder %s132, 0
      %s135 = sadd.s32 %s134, 1
      %s136 = scalar_select %p133, %s134, %s135
      %p139 = pneg %p133
      %p140 = scmp.eq.s32.totalorder %s12, 1
      %p141 = por %p139, %p140
      %p142 = scmp.ne.s32.totalorder %s134, %s137
      %p143 = scmp.eq.s32.totalorder %s12, 0
      %p144 = por %p142, %p143
      %p145 = scmp.ne.s32.totalorder %s134, %s137
      %p146 = scmp.eq.s32.totalorder %s17, 1
      %p147 = por %p145, %p146
      %p148 = scmp.ne.s32.totalorder %s137, %s138
      %p149 = scmp.eq.s32.totalorder %s17, 0
      %p150 = por %p148, %p149
      %p151 = scmp.ne.s32.totalorder %s137, %s138
      %p152 = scmp.eq.s32.totalorder %s18, 1
      %p153 = por %p151, %p152
      %p155 = scmp.ne.s32.totalorder %s138, %s154
      %p156 = scmp.eq.s32.totalorder %s18, 0
      %p157 = por %p155, %p156
      %p158 = scmp.le.s32.totalorder 1, %s12
      %p159 = scmp.lt.s32.totalorder %s12, 3
      %p160 = pnand %p158, %p159
      %p161 = pneg %p160
      // Predicated region
      $region9: #{decoder_block_forward.4} parent=5 // pred_check
        _
      $region10: #{decoder_block_forward.4} parent=5 // pred_check_branch
        %163 = sbr.rel (%p160) target = $region12
      $region11: #{decoder_block_forward.4} parent=5 // pred_region
        %s164 = ssub.s32 %s12, 1
        // Predicated region
        $region13: #{decoder_block_forward.4} parent=11 // pred_check
          %p165 = pneg %p73
        $region14: #{decoder_block_forward.4} parent=11 // pred_check_branch
          %167 = sbr.rel (%p165) target = $region16
        $region15: #{decoder_block_forward.4} parent=11 // pred_region
          %s169 = ssub.s32 128, 128
          %170 = vsyncadd [#allocation3], %s169
          %s171 = sshll.u32 [#allocation2], 4
          %s172 = int_to_ptr.vmem [resolvable:$true] %s171
          %177 = dma.hbm_to_vmem [thread:$0]  %s1, 128, %s172, [#allocation3], 64, 64, 4
        $region16: #{decoder_block_forward.4} parent=11 // pred_fallthru
          _
        // Predicated region
        $region17: #{decoder_block_forward.4} parent=11 // pred_check
          %p178 = pneg %p94
        $region18: #{decoder_block_forward.4} parent=11 // pred_check_branch
          %180 = sbr.rel (%p178) target = $region20
        $region19: #{decoder_block_forward.4} parent=11 // pred_region
          _
        $region20: #{decoder_block_forward.4} parent=11 // pred_fallthru
          _
      $region12: #{decoder_block_forward.4} parent=5 // pred_fallthru
        _
      %p181 = scmp.lt.s32.totalorder %s12, 2
      // Predicated region
      $region21: #{decoder_block_forward.4} parent=5 // pred_check
        %p182 = pneg %p181
      $region22: #{decoder_block_forward.4} parent=5 // pred_check_branch
        %184 = sbr.rel (%p182) target = $region24
      $region23: #{decoder_block_forward.4} parent=5 // pred_region
        // Predicated region
        $region25: #{decoder_block_forward.4} parent=23 // pred_check
          %p185 = pneg %p46
        $region26: #{decoder_block_forward.4} parent=23 // pred_check_branch
          %187 = sbr.rel (%p185) target = $region28
        $region27: #{decoder_block_forward.4} parent=23 // pred_region
          %s188 = smul.u32 4, %s20
          %p189 = scmp.lt.s32.totalorder %s19, 1
          %s190 = scalar_select %p189, %s19, 1
          %p191 = scmp.lt.s32.totalorder %s188, 3
          %s192 = scalar_select %p191, %s188, 3
          %s193 = smul.addr %s190, 32
          %s194 = sadd.s32 %s192, %s193
          %s195 = smul.addr %s194, 8
          %s196 = scalar_lea.vmem %s0, %s195
          %s197 = smul.u32 4, %s20
        $region28: #{decoder_block_forward.4} parent=23 // pred_fallthru
          _
      $region24: #{decoder_block_forward.4} parent=5 // pred_fallthru
        _
      %p198 = scmp.le.s32.totalorder 1, %s12
      %p199 = scmp.lt.s32.totalorder %s12, 3
      %p200 = pnand %p198, %p199
      %p201 = pneg %p200
      // Predicated region
      $region29: #{decoder_block_forward.4} parent=5 // pred_check
        _
      $region30: #{decoder_block_forward.4} parent=5 // pred_check_branch
        %203 = sbr.rel (%p200) target = $region32
      $region31: #{decoder_block_forward.4} parent=5 // pred_region
        %s204 = ssub.s32 %s12, 1
        // Predicated region
        $region33: #{decoder_block_forward.4} parent=31 // pred_check
          %p205 = pneg %p73
        $region34: #{decoder_block_forward.4} parent=31 // pred_check_branch
          %207 = sbr.rel (%p205) target = $region36
        $region35: #{decoder_block_forward.4} parent=31 // pred_region
          %208 = dma.done [#allocation3], 128
        $region36: #{decoder_block_forward.4} parent=31 // pred_fallthru
          _
        %s209 = smul.u32 4, %s22
        %p210 = scmp.lt.s32.totalorder %s21, 1
        %s211 = scalar_select %p210, %s21, 1
        %p212 = scmp.lt.s32.totalorder %s209, 3
        %s213 = scalar_select %p212, %s209, 3
        %s214 = smul.addr %s211, 32
        %s215 = sadd.s32 %s213, %s214
        %s216 = smul.addr %s215, 8
        %s217 = scalar_lea.vmem %s0, %s216
        %p218 = pneg %p52
        %p219 = pneg %p49
        %p220 = pneg %p73
        %p221 = pneg %p70
        %p222 = pneg %p94
        %p223 = pneg %p91
        %p224 = pneg %p122
        %p225 = pneg %p119
        %s226 = smul.u32 4, %s22
        %p227 = scmp.lt.s32.totalorder %s21, 1
        %s228 = scalar_select %p227, %s21, 1
        %p229 = scmp.lt.s32.totalorder %s226, 3
        %s230 = scalar_select %p229, %s226, 3
        %s231 = smul.addr %s228, 8
        %s232 = sadd.s32 %s230, %s231
        %s233 = smul.addr %s232, 4
        %s234 = scalar_lea.vmem %s3, %s233
        %p235 = pneg %p150
        %p236 = pneg %p147
        %p237 = scmp.lt.s32.totalorder %s21, 1
        %s238 = scalar_select %p237, %s21, 1
        %p239 = scmp.lt.s32.totalorder %s22, 0
        %s240 = scalar_select %p239, %s22, 0
        %s241 = smul.addr %s240, 2
        %s242 = smul.addr %s238, 2
        %s243 = sadd.s32 %s241, %s242
        %s244 = smul.addr %s243, 8
        %s245 = scalar_lea.vmem %s4, %s244
        %s246 = smul.u32 4, %s22
        %p247 = scmp.lt.s32.totalorder %s21, 1
        %s248 = scalar_select %p247, %s21, 1
        %p249 = scmp.lt.s32.totalorder %s246, 3
        %s250 = scalar_select %p249, %s246, 3
        %s251 = smul.addr %s248, 32
        %s252 = sadd.s32 %s250, %s251
        %s253 = smul.addr %s252, 8
        %s254 = scalar_lea.vmem %s0, %s253
        %s255 = smul.u32 4, %s22
        %s256 = smul.u32 4, %s22
        %p257 = scmp.lt.s32.totalorder %s21, 1
        %s258 = scalar_select %p257, %s21, 1
        %p259 = scmp.lt.s32.totalorder %s256, 3
        %s260 = scalar_select %p259, %s256, 3
        %s261 = smul.addr %s258, 8
        %s262 = sadd.s32 %s260, %s261
        %s263 = smul.addr %s262, 4
        %s264 = scalar_lea.vmem %s3, %s263
        %s265 = smul.u32 4, %s22
        %p266 = scmp.lt.s32.totalorder %s21, 1
        %s267 = scalar_select %p266, %s21, 1
        %p268 = scmp.lt.s32.totalorder %s22, 0
        %s269 = scalar_select %p268, %s22, 0
        %s270 = smul.addr %s269, 2
        %s271 = smul.addr %s267, 2
        %s272 = sadd.s32 %s270, %s271
        %s273 = smul.addr %s272, 8
        %s274 = scalar_lea.vmem %s4, %s273
        %v276 = vld [vmem:[#allocation2] sm:$0xf]
        %v277 = vld [vmem:[#allocation2 + $0x4] sm:$0xf]
        %v278 = vld [vmem:[%s254] sm:$0xff]
        %v279 = vld [vmem:[%s254 + $0x8] sm:$0xff]
        %v280 = vld [vmem:[%s254 + $0x10] sm:$0xff]
        %v281 = vld [vmem:[%s254 + $0x18] sm:$0xff]
        %v282 = vld [vmem:[%s254 + $0x20] sm:$0xff]
        %v283 = vld [vmem:[%s254 + $0x28] sm:$0xff]
        %v284 = vld [vmem:[%s254 + $0x30] sm:$0xff]
        %v285 = vld [vmem:[%s254 + $0x38] sm:$0xff]
        %v286 = vld [vmem:[%s254 + $0x40] sm:$0xff]
        %v287 = vld [vmem:[%s254 + $0x48] sm:$0xff]
        %v288 = vld [vmem:[%s254 + $0x50] sm:$0xff]
        %v289 = vld [vmem:[%s254 + $0x58] sm:$0xff]
        %v290 = vld [vmem:[%s254 + $0x60] sm:$0xff]
        %v291 = vld [vmem:[%s254 + $0x68] sm:$0xff]
        %v292 = vld [vmem:[%s254 + $0x70] sm:$0xff]
        %v293 = vld [vmem:[%s254 + $0x78] sm:$0xff]
        %v294 = vld [vmem:[%s254 + $0x80] sm:$0xff]
        %v295 = vld [vmem:[%s254 + $0x88] sm:$0xff]
        %v296 = vld [vmem:[%s254 + $0x90] sm:$0xff]
        %v297 = vld [vmem:[%s254 + $0x98] sm:$0xff]
        %v298 = vld [vmem:[%s254 + $0xa0] sm:$0xff]
        %v299 = vld [vmem:[%s254 + $0xa8] sm:$0xff]
        %v300 = vld [vmem:[%s254 + $0xb0] sm:$0xff]
        %v301 = vld [vmem:[%s254 + $0xb8] sm:$0xff]
        %v302 = vld [vmem:[%s254 + $0xc0] sm:$0xff]
        %v303 = vld [vmem:[%s254 + $0xc8] sm:$0xff]
        %v304 = vld [vmem:[%s254 + $0xd0] sm:$0xff]
        %v305 = vld [vmem:[%s254 + $0xd8] sm:$0xff]
        %v306 = vld [vmem:[%s254 + $0xe0] sm:$0xff]
        %v307 = vld [vmem:[%s254 + $0xe8] sm:$0xff]
        %v308 = vld [vmem:[%s254 + $0xf0] sm:$0xff]
        %v309 = vld [vmem:[%s254 + $0xf8] sm:$0xff]
        %v310 = vpack.c.bf16 %v282, %v278
        %v311 = vpack.c.bf16 %v283, %v279
        %v312 = vpack.c.bf16 %v284, %v280
        %v313 = vpack.c.bf16 %v285, %v281
        %v314 = vpack.c.bf16 %v290, %v286
        %v315 = vpack.c.bf16 %v291, %v287
        %v316 = vpack.c.bf16 %v292, %v288
        %v317 = vpack.c.bf16 %v293, %v289
        %v318 = vpack.c.bf16 %v298, %v294
        %v319 = vpack.c.bf16 %v299, %v295
        %v320 = vpack.c.bf16 %v300, %v296
        %v321 = vpack.c.bf16 %v301, %v297
        %v322 = vpack.c.bf16 %v306, %v302
        %v323 = vpack.c.bf16 %v307, %v303
        %v324 = vpack.c.bf16 %v308, %v304
        %v325 = vpack.c.bf16 %v309, %v305
        %v326 = vld [vmem:[%s2] sm:$0xff]
        %v327 = vld [vmem:[%s2 + $0x8] sm:$0xff]
        %329 = vset.pattern.permute.xlu0 0
        %330 = vperm.xlu0 %329, %v326
        %v331 = vpop.permute.xlu0 %330
        %334 = vset.pattern.permute.xlu0 0
        %335 = vperm.xlu0 %334, %v327
        %v336 = vpop.permute.xlu0 %335
        %v340 = vunpack.c.l.b16 %v276
        %v341 = vunpack.c.l.b16 %v277
        %v342 = vpack.c.b16 %v341, %v340
        %vm343 = vcmask 523264
        %v345 = vsel %vm343, %v342, 0
        %347 = vmatprep.subr.bf16.mxu0 %v311
        %348 = vmatpush1.bf16.msra.mxu0 %v310
        %349 = vmatprep.subr.bf16.mxu0 %v315
        %350 = vmatpush1.bf16.msra.mxu0 %v314
        %351 = vmatprep.subr.bf16.mxu0 %v319
        %352 = vmatpush1.bf16.msra.mxu0 %v318
        %353 = vmatprep.subr.bf16.mxu0 %v323
        %354 = vmatpush1.bf16.msra.mxu0 %v322
        %355 = vmatprep.subr.bf16.mxu0 0
        %356 = vmatpush1.bf16.msra.mxu0 0
        %357 = vmatprep.subr.bf16.mxu0 0
        %358 = vmatpush1.bf16.msra.mxu0 0
        %359 = vmatprep.subr.bf16.mxu0 0
        %360 = vmatpush1.bf16.msra.mxu0 0
        %361 = vmatprep.subr.bf16.mxu0 0
        %362 = vmatpush1.bf16.msra.mxu0 0
        %363 = vmatprep.subr.bf16.mxu0 0
        %364 = vmatpush1.bf16.msra.mxu0 0
        %365 = vmatprep.subr.bf16.mxu0 0
        %366 = vmatpush1.bf16.msra.mxu0 0
        %367 = vmatprep.subr.bf16.mxu0 0
        %368 = vmatpush1.bf16.msra.mxu0 0
        %369 = vmatprep.subr.bf16.mxu0 0
        %370 = vmatpush1.bf16.msra.mxu0 0
        %371 = vmatprep.subr.bf16.mxu0 0
        %372 = vmatpush1.bf16.msra.mxu0 0
        %373 = vmatprep.subr.bf16.mxu0 0
        %374 = vmatpush1.bf16.msra.mxu0 0
        %375 = vmatprep.subr.bf16.mxu0 0
        %376 = vmatpush1.bf16.msra.mxu0 0
        %377 = vmatprep.subr.bf16.mxu0 0
        %378 = vmatpush1.bf16.msra.mxu0 0
        %379 = vmatprep.mubr.bf16.mxu0 0
        %380 = vmatmul.mubr.bf16.gmra.mrb[0].mxu0 %v345
        %v381 = vpop.f32.mrb[0].mxu0
        %v382 = vadd.f32 %v331, %v381
        %v383 = vpop.f32.mrb[0].mxu0
        %v384 = vadd.f32 %v331, %v383
        %v385 = vpop.f32.mrb[0].mxu0
        %v386 = vadd.f32 %v336, %v385
        %v387 = vpop.f32.mrb[0].mxu0
        %v388 = vadd.f32 %v336, %v387
        %389 = vdwg.mxu0
        %390 = vmatprep.subr.bf16.mxu0 %v313
        %391 = vmatpush1.bf16.msra.mxu0 %v312
        %392 = vmatprep.subr.bf16.mxu0 %v317
        %393 = vmatpush1.bf16.msra.mxu0 %v316
        %394 = vmatprep.subr.bf16.mxu0 %v321
        %395 = vmatpush1.bf16.msra.mxu0 %v320
        %396 = vmatprep.subr.bf16.mxu0 %v325
        %397 = vmatpush1.bf16.msra.mxu0 %v324
        %398 = vmatprep.subr.bf16.mxu0 0
        %399 = vmatpush1.bf16.msra.mxu0 0
        %400 = vmatprep.subr.bf16.mxu0 0
        %401 = vmatpush1.bf16.msra.mxu0 0
        %402 = vmatprep.subr.bf16.mxu0 0
        %403 = vmatpush1.bf16.msra.mxu0 0
        %404 = vmatprep.subr.bf16.mxu0 0
        %405 = vmatpush1.bf16.msra.mxu0 0
        %406 = vmatprep.subr.bf16.mxu0 0
        %407 = vmatpush1.bf16.msra.mxu0 0
        %408 = vmatprep.subr.bf16.mxu0 0
        %409 = vmatpush1.bf16.msra.mxu0 0
        %410 = vmatprep.subr.bf16.mxu0 0
        %411 = vmatpush1.bf16.msra.mxu0 0
        %412 = vmatprep.subr.bf16.mxu0 0
        %413 = vmatpush1.bf16.msra.mxu0 0
        %414 = vmatprep.subr.bf16.mxu0 0
        %415 = vmatpush1.bf16.msra.mxu0 0
        %416 = vmatprep.subr.bf16.mxu0 0
        %417 = vmatpush1.bf16.msra.mxu0 0
        %418 = vmatprep.subr.bf16.mxu0 0
        %419 = vmatpush1.bf16.msra.mxu0 0
        %420 = vmatprep.subr.bf16.mxu0 0
        %421 = vmatpush1.bf16.msra.mxu0 0
        %422 = vmatprep.mubr.bf16.mxu0 0
        %423 = vmatmul.mubr.bf16.gmra.mrb[0].mxu0 %v345
        %v424 = vpop.f32.mrb[0].mxu0
        %v425 = vadd.f32 %v331, %v424
        %v426 = vpop.f32.mrb[0].mxu0
        %v427 = vadd.f32 %v331, %v426
        %v428 = vpop.f32.mrb[0].mxu0
        %v429 = vadd.f32 %v336, %v428
        %v430 = vpop.f32.mrb[0].mxu0
        %v431 = vadd.f32 %v336, %v430
        %432 = vdwg.mxu0
        %v433 = vadd.f32 %v382, %v384
        %v434 = vadd.f32 %v433, %v425
        %v435 = vadd.f32 %v434, %v427
        %436 = vadd.xlane.f32.xlu0 %v435
        %v437 = vpop.xlane.xlu0 %436
        %v438 = vadd.f32 %v386, %v388
        %v439 = vadd.f32 %v438, %v429
        %v440 = vadd.f32 %v439, %v431
        %441 = vadd.xlane.f32.xlu0 %v440
        %v442 = vpop.xlane.xlu0 %441
        %v443 = vmul.f32 %v382, %v382
        %v444 = vmul.f32 %v384, %v384
        %v445 = vmul.f32 %v425, %v425
        %v446 = vmul.f32 %v427, %v427
        %v447 = vmul.f32 %v386, %v386
        %v448 = vmul.f32 %v388, %v388
        %v449 = vmul.f32 %v429, %v429
        %v450 = vmul.f32 %v431, %v431
        %v451 = vadd.f32 %v443, %v444
        %v452 = vadd.f32 %v451, %v445
        %v453 = vadd.f32 %v452, %v446
        %454 = vadd.xlane.f32.xlu0 %v453
        %v455 = vpop.xlane.xlu0 %454
        %v456 = vadd.f32 %v447, %v448
        %v457 = vadd.f32 %v456, %v449
        %v458 = vadd.f32 %v457, %v450
        %459 = vadd.xlane.f32.xlu0 %v458
        %v460 = vpop.xlane.xlu0 %459
        %vm461 = vcmask 7168
        %v462 = vsel %vm461, %v437, %v455
        %v463 = vsel %vm461, %v442, %v460
        %vm464 = vcmask 15360
        %465 = vst.msk [vmem:[%s274] sm:$0xff] %vm464, %v462
        %466 = vst.msk [vmem:[%s274 + $0x8] sm:$0xff] %vm464, %v463
        %v467 = vpack.c.bf16 %v386, %v382
        %v468 = vpack.c.bf16 %v388, %v384
        %v469 = vpack.c.bf16 %v429, %v425
        %v470 = vpack.c.bf16 %v431, %v427
        %v475 = vunpack.c.l.b16 %v467
        %v476 = vunpack.c.l.b16 %v468
        %v477 = vunpack.c.l.b16 %v469
        %v478 = vunpack.c.l.b16 %v470
        %v479 = vunpack.c.h.b16 %v467
        %v480 = vunpack.c.h.b16 %v468
        %v481 = vunpack.c.h.b16 %v469
        %v482 = vunpack.c.h.b16 %v470
        %v483 = vpack.c.b16 %v476, %v475
        %v484 = vpack.c.b16 %v478, %v477
        %v485 = vpack.c.b16 %v480, %v479
        %v486 = vpack.c.b16 %v482, %v481
        %491 = vst [vmem:[%s264] sm:$0xff] %v483
        %492 = vst [vmem:[%s264 + $0x8] sm:$0xff] %v484
        %493 = vst [vmem:[%s264 + $0x10] sm:$0xff] %v485
        %494 = vst [vmem:[%s264 + $0x18] sm:$0xff] %v486
        %s495 = smul.u32 4, %s22
        %p496 = scmp.lt.s32.totalorder %s21, 1
        %s497 = scalar_select %p496, %s21, 1
        %p498 = scmp.lt.s32.totalorder %s495, 3
        %s499 = scalar_select %p498, %s495, 3
        %s500 = smul.addr %s497, 8
        %s501 = sadd.s32 %s499, %s500
        %s502 = smul.addr %s501, 4
        %s503 = scalar_lea.vmem %s3, %s502
        %p504 = scmp.lt.s32.totalorder %s21, 1
        %s505 = scalar_select %p504, %s21, 1
        %p506 = scmp.lt.s32.totalorder %s22, 0
        %s507 = scalar_select %p506, %s22, 0
        %s508 = smul.addr %s507, 2
        %s509 = smul.addr %s505, 2
        %s510 = sadd.s32 %s508, %s509
        %s511 = smul.addr %s510, 8
        %s512 = scalar_lea.vmem %s4, %s511
        // Predicated region
        $region37: #{decoder_block_forward.4} parent=31 // pred_check
          %p513 = pneg %p119
        $region38: #{decoder_block_forward.4} parent=31 // pred_check_branch
          %515 = sbr.rel (%p513) target = $region40
        $region39: #{decoder_block_forward.4} parent=31 // pred_region
          %s516 = smul.u32 4, %s22
        $region40: #{decoder_block_forward.4} parent=31 // pred_fallthru
          _
        // Predicated region
        $region41: #{decoder_block_forward.4} parent=31 // pred_check
          %p517 = pneg %p147
        $region42: #{decoder_block_forward.4} parent=31 // pred_check_branch
          %519 = sbr.rel (%p517) target = $region44
        $region43: #{decoder_block_forward.4} parent=31 // pred_region
          _
        $region44: #{decoder_block_forward.4} parent=31 // pred_fallthru
          _
      $region32: #{decoder_block_forward.4} parent=5 // pred_fallthru
        _
      %p520 = scmp.le.s32.totalorder 2, %s12
      // Predicated region
      $region45: #{decoder_block_forward.4} parent=5 // pred_check
        %p521 = pneg %p520
      $region46: #{decoder_block_forward.4} parent=5 // pred_check_branch
        %523 = sbr.rel (%p521) target = $region48
      $region47: #{decoder_block_forward.4} parent=5 // pred_region
        %s524 = ssub.s32 %s12, 2
        // Predicated region
        $region49: #{decoder_block_forward.4} parent=47 // pred_check
          %p525 = pneg %p125
        $region50: #{decoder_block_forward.4} parent=47 // pred_check_branch
          %527 = sbr.rel (%p525) target = $region52
        $region51: #{decoder_block_forward.4} parent=47 // pred_region
          %s528 = smul.u32 4, %s24
          %p529 = scmp.lt.s32.totalorder %s23, 1
          %s530 = scalar_select %p529, %s23, 1
          %p531 = scmp.lt.s32.totalorder %s528, 3
          %s532 = scalar_select %p531, %s528, 3
          %s533 = smul.addr %s530, 8
          %s534 = sadd.s32 %s532, %s533
          %s535 = smul.addr %s534, 4
          %s536 = scalar_lea.vmem %s3, %s535
        $region52: #{decoder_block_forward.4} parent=47 // pred_fallthru
          _
        // Predicated region
        $region53: #{decoder_block_forward.4} parent=47 // pred_check
          %p537 = pneg %p153
        $region54: #{decoder_block_forward.4} parent=47 // pred_check_branch
          %539 = sbr.rel (%p537) target = $region56
        $region55: #{decoder_block_forward.4} parent=47 // pred_region
          %p540 = scmp.lt.s32.totalorder %s23, 1
          %s541 = scalar_select %p540, %s23, 1
          %p542 = scmp.lt.s32.totalorder %s24, 0
          %s543 = scalar_select %p542, %s24, 0
          %s544 = smul.addr %s543, 2
          %s545 = smul.addr %s541, 2
          %s546 = sadd.s32 %s544, %s545
          %s547 = smul.addr %s546, 8
          %s548 = scalar_lea.vmem %s4, %s547
        $region56: #{decoder_block_forward.4} parent=47 // pred_fallthru
          _
      $region48: #{decoder_block_forward.4} parent=5 // pred_fallthru
        _
    $region6: #{decoder_block_forward.4} parent=1 // loop_footer
      %s16 = sadd.s32 1, %s12
    $region7: #{decoder_block_forward.4} parent=1 // loop_footer_branch
      %11 = sbr.rel target = $region3
    $region8: #{decoder_block_forward.4} parent=1 // loop_exit
      _
    %549 = vsyncpa [#allocation3], 1
    %s550 = scalar_lea.sflag [#allocation3], 1
    %551 = vsyncpa %s550, 1

// kernel: decoder_block_forward.5
$region0: #{decoder_block_forward.5}
  #allocation0 [shape = 'u32[]', space=smem, size = 0x4, offset = 0x4, fixed_abs, tag = 'smem constant byte address 0x4 - core index']
  #allocation1 [shape = 'u32[144,128]{1,0:T(1,128)}', space=vmem, size = 0x12000, scoped, tag = 'internal scratch']
  %s0 = inlined_call_operand.vmem [shape: bf16[2,16,512], index: 0, kind: input, shape index: {}]
  %s1 = inlined_call_operand.vmem [shape: f32[16,1], index: 1, kind: input, shape index: {}]
  %s2 = inlined_call_operand.vmem [shape: f32[16,1], index: 2, kind: input, shape index: {}]
  %s3 = inlined_call_operand.vmem [shape: f32[8,512], index: 3, kind: input, shape index: {}]
  %s4 = inlined_call_operand.hbm [shape: bf16[128,128], index: 4, kind: input, shape index: {}]
  %s5 = inlined_call_operand.vmem [shape: f32[128,1], index: 5, kind: input, shape index: {}]
  %s6 = inlined_call_operand.vmem [shape: bf16[2,128,512], index: 6, kind: output, shape index: {0}]
  %s7 = inlined_call_operand.vmem [shape: f32[2,128,2], index: 7, kind: output, shape index: {1}]
  %8 = xla_tuple %s6, %s7
  %s9 = sld [smem:[#allocation0]]
  $region69: #{decoder_block_forward.5} parent=0
    _
  %s11 = ssub.s32 1, %s9
  %s12 = scalar_select 0, %s11, %s9
  $region1: #{decoder_block_forward.5} parent=0
    #allocation2 [shape = 'u8[32768]{0}', space=vmem, size = 0x8000, scoped, tag = 'input window, operand 4, single buffered']
    #allocation3 [shape = 's32[2]{0}', space=sflag, size = 0x8, scoped, tag = 'scoped memory for decoder_block_forward.5']
    %13 = vsyncpa [#allocation3], 0
    loop: start=0, step=1, limit=4
    $region2: #{decoder_block_forward.5} parent=1 // loop_pre_header
      _
    $region3: #{decoder_block_forward.5} parent=1 // loop_header
      %s15 = sphi 0, %s19
      %p16 = scmp.ge.s32.totalorder %s15, 4
      %s25 = sphi 0, %s27
      %s28 = sphi 0, %s25
      %s29 = sphi 0, %s28
      %s45 = sphi 0, %s29
      %s49 = sphi 0, %s49
      %s51 = sphi 0, %s49
      %s52 = sphi 0, %s51
      %s66 = sphi 0, %s52
      %s70 = sphi 0, %s70
      %s72 = sphi 0, %s70
      %s73 = sphi 0, %s72
      %s87 = sphi 0, %s73
      %s91 = sphi 0, %s91
      %s93 = sphi 0, %s91
      %s94 = sphi 0, %s93
      %s108 = sphi 0, %s94
      %s112 = sphi 0, %s112
      %s114 = sphi 0, %s112
      %s115 = sphi 0, %s114
      %s129 = sphi 0, %s115
      %s133 = sphi 0, %s133
      %s135 = sphi 0, %s133
      %s136 = sphi 0, %s135
      %s150 = sphi 0, %s136
      %s156 = sphi 0, %s158
      %s159 = sphi 0, %s156
      %s160 = sphi 0, %s159
      %s176 = sphi 0, %s160
      %s182 = sphi 0, %s184
      %s185 = sphi 0, %s182
      %s186 = sphi 0, %s185
      %s202 = sphi 0, %s186
    $region4: #{decoder_block_forward.5} parent=1 // loop_header_branch
      %18 = sbr.rel (%p16) target = $region8
    $region5: #{decoder_block_forward.5} parent=1 // loop_body
      %s20 = ssub.s32 %s15, 1
      %s21 = ssub.s32 %s15, 2
      %s22 = sadd.s32 %s15, 1
      %s23 = ssub.s32 %s15, %s22
      %p24 = scmp.eq.s32.totalorder %s23, 0
      %s26 = sadd.s32 %s25, 1
      %s27 = scalar_select %p24, %s25, %s26
      %p30 = pneg %p24
      %p31 = scmp.eq.s32.totalorder %s15, 1
      %p32 = por %p30, %p31
      %p33 = scmp.ne.s32.totalorder %s25, %s28
      %p34 = scmp.eq.s32.totalorder %s15, 0
      %p35 = por %p33, %p34
      %p36 = scmp.ne.s32.totalorder %s25, %s28
      %p37 = scmp.eq.s32.totalorder %s20, 1
      %p38 = por %p36, %p37
      %p39 = scmp.ne.s32.totalorder %s28, %s29
      %p40 = scmp.eq.s32.totalorder %s20, 0
      %p41 = por %p39, %p40
      %p42 = scmp.ne.s32.totalorder %s28, %s29
      %p43 = scmp.eq.s32.totalorder %s21, 1
      %p44 = por %p42, %p43
      %p46 = scmp.ne.s32.totalorder %s29, %s45
      %p47 = scmp.eq.s32.totalorder %s21, 0
      %p48 = por %p46, %p47
      %s50 = sadd.s32 %s49, 1
      %p53 = scmp.eq.s32.totalorder %s15, 1
      %p54 = scmp.ne.s32.totalorder %s49, %s51
      %p55 = scmp.eq.s32.totalorder %s15, 0
      %p56 = por %p54, %p55
      %p57 = scmp.ne.s32.totalorder %s49, %s51
      %p58 = scmp.eq.s32.totalorder %s20, 1
      %p59 = por %p57, %p58
      %p60 = scmp.ne.s32.totalorder %s51, %s52
      %p61 = scmp.eq.s32.totalorder %s20, 0
      %p62 = por %p60, %p61
      %p63 = scmp.ne.s32.totalorder %s51, %s52
      %p64 = scmp.eq.s32.totalorder %s21, 1
      %p65 = por %p63, %p64
      %p67 = scmp.ne.s32.totalorder %s52, %s66
      %p68 = scmp.eq.s32.totalorder %s21, 0
      %p69 = por %p67, %p68
      %s71 = sadd.s32 %s70, 1
      %p74 = scmp.eq.s32.totalorder %s15, 1
      %p75 = scmp.ne.s32.totalorder %s70, %s72
      %p76 = scmp.eq.s32.totalorder %s15, 0
      %p77 = por %p75, %p76
      %p78 = scmp.ne.s32.totalorder %s70, %s72
      %p79 = scmp.eq.s32.totalorder %s20, 1
      %p80 = por %p78, %p79
      %p81 = scmp.ne.s32.totalorder %s72, %s73
      %p82 = scmp.eq.s32.totalorder %s20, 0
      %p83 = por %p81, %p82
      %p84 = scmp.ne.s32.totalorder %s72, %s73
      %p85 = scmp.eq.s32.totalorder %s21, 1
      %p86 = por %p84, %p85
      %p88 = scmp.ne.s32.totalorder %s73, %s87
      %p89 = scmp.eq.s32.totalorder %s21, 0
      %p90 = por %p88, %p89
      %s92 = sadd.s32 %s91, 1
      %p95 = scmp.eq.s32.totalorder %s15, 1
      %p96 = scmp.ne.s32.totalorder %s91, %s93
      %p97 = scmp.eq.s32.totalorder %s15, 0
      %p98 = por %p96, %p97
      %p99 = scmp.ne.s32.totalorder %s91, %s93
      %p100 = scmp.eq.s32.totalorder %s20, 1
      %p101 = por %p99, %p100
      %p102 = scmp.ne.s32.totalorder %s93, %s94
      %p103 = scmp.eq.s32.totalorder %s20, 0
      %p104 = por %p102, %p103
      %p105 = scmp.ne.s32.totalorder %s93, %s94
      %p106 = scmp.eq.s32.totalorder %s21, 1
      %p107 = por %p105, %p106
      %p109 = scmp.ne.s32.totalorder %s94, %s108
      %p110 = scmp.eq.s32.totalorder %s21, 0
      %p111 = por %p109, %p110
      %s113 = sadd.s32 %s112, 1
      %p116 = scmp.eq.s32.totalorder %s15, 1
      %p117 = scmp.ne.s32.totalorder %s112, %s114
      %p118 = scmp.eq.s32.totalorder %s15, 0
      %p119 = por %p117, %p118
      %p120 = scmp.ne.s32.totalorder %s112, %s114
      %p121 = scmp.eq.s32.totalorder %s20, 1
      %p122 = por %p120, %p121
      %p123 = scmp.ne.s32.totalorder %s114, %s115
      %p124 = scmp.eq.s32.totalorder %s20, 0
      %p125 = por %p123, %p124
      %p126 = scmp.ne.s32.totalorder %s114, %s115
      %p127 = scmp.eq.s32.totalorder %s21, 1
      %p128 = por %p126, %p127
      %p130 = scmp.ne.s32.totalorder %s115, %s129
      %p131 = scmp.eq.s32.totalorder %s21, 0
      %p132 = por %p130, %p131
      %s134 = sadd.s32 %s133, 1
      %p137 = scmp.eq.s32.totalorder %s15, 1
      %p138 = scmp.ne.s32.totalorder %s133, %s135
      %p139 = scmp.eq.s32.totalorder %s15, 0
      %p140 = por %p138, %p139
      %p141 = scmp.ne.s32.totalorder %s133, %s135
      %p142 = scmp.eq.s32.totalorder %s20, 1
      %p143 = por %p141, %p142
      %p144 = scmp.ne.s32.totalorder %s135, %s136
      %p145 = scmp.eq.s32.totalorder %s20, 0
      %p146 = por %p144, %p145
      %p147 = scmp.ne.s32.totalorder %s135, %s136
      %p148 = scmp.eq.s32.totalorder %s21, 1
      %p149 = por %p147, %p148
      %p151 = scmp.ne.s32.totalorder %s136, %s150
      %p152 = scmp.eq.s32.totalorder %s21, 0
      %p153 = por %p151, %p152
      %s154 = ssub.s32 %s15, %s22
      %p155 = scmp.eq.s32.totalorder %s154, 0
      %s157 = sadd.s32 %s156, 1
      %s158 = scalar_select %p155, %s156, %s157
      %p161 = pneg %p155
      %p162 = scmp.eq.s32.totalorder %s15, 1
      %p163 = por %p161, %p162
      %p164 = scmp.ne.s32.totalorder %s156, %s159
      %p165 = scmp.eq.s32.totalorder %s15, 0
      %p166 = por %p164, %p165
      %p167 = scmp.ne.s32.totalorder %s156, %s159
      %p168 = scmp.eq.s32.totalorder %s20, 1
      %p169 = por %p167, %p168
      %p170 = scmp.ne.s32.totalorder %s159, %s160
      %p171 = scmp.eq.s32.totalorder %s20, 0
      %p172 = por %p170, %p171
      %p173 = scmp.ne.s32.totalorder %s159, %s160
      %p174 = scmp.eq.s32.totalorder %s21, 1
      %p175 = por %p173, %p174
      %p177 = scmp.ne.s32.totalorder %s160, %s176
      %p178 = scmp.eq.s32.totalorder %s21, 0
      %p179 = por %p177, %p178
      %s180 = ssub.s32 %s15, %s22
      %p181 = scmp.eq.s32.totalorder %s180, 0
      %s183 = sadd.s32 %s182, 1
      %s184 = scalar_select %p181, %s182, %s183
      %p187 = pneg %p181
      %p188 = scmp.eq.s32.totalorder %s15, 1
      %p189 = por %p187, %p188
      %p190 = scmp.ne.s32.totalorder %s182, %s185
      %p191 = scmp.eq.s32.totalorder %s15, 0
      %p192 = por %p190, %p191
      %p193 = scmp.ne.s32.totalorder %s182, %s185
      %p194 = scmp.eq.s32.totalorder %s20, 1
      %p195 = por %p193, %p194
      %p196 = scmp.ne.s32.totalorder %s185, %s186
      %p197 = scmp.eq.s32.totalorder %s20, 0
      %p198 = por %p196, %p197
      %p199 = scmp.ne.s32.totalorder %s185, %s186
      %p200 = scmp.eq.s32.totalorder %s21, 1
      %p201 = por %p199, %p200
      %p203 = scmp.ne.s32.totalorder %s186, %s202
      %p204 = scmp.eq.s32.totalorder %s21, 0
      %p205 = por %p203, %p204
      %p206 = scmp.le.s32.totalorder 1, %s15
      %p207 = scmp.lt.s32.totalorder %s15, 3
      %p208 = pnand %p206, %p207
      %p209 = pneg %p208
      // Predicated region
      $region9: #{decoder_block_forward.5} parent=5 // pred_check
        _
      $region10: #{decoder_block_forward.5} parent=5 // pred_check_branch
        %211 = sbr.rel (%p208) target = $region12
      $region11: #{decoder_block_forward.5} parent=5 // pred_region
        %s212 = ssub.s32 %s15, 1
        // Predicated region
        $region13: #{decoder_block_forward.5} parent=11 // pred_check
          %p213 = pneg %p62
        $region14: #{decoder_block_forward.5} parent=11 // pred_check_branch
          %215 = sbr.rel (%p213) target = $region16
        $region15: #{decoder_block_forward.5} parent=11 // pred_region
          _
        $region16: #{decoder_block_forward.5} parent=11 // pred_fallthru
          _
        // Predicated region
        $region17: #{decoder_block_forward.5} parent=11 // pred_check
          %p216 = pneg %p83
        $region18: #{decoder_block_forward.5} parent=11 // pred_check_branch
          %218 = sbr.rel (%p216) target = $region20
        $region19: #{decoder_block_forward.5} parent=11 // pred_region
          _
        $region20: #{decoder_block_forward.5} parent=11 // pred_fallthru
          _
        // Predicated region
        $region21: #{decoder_block_forward.5} parent=11 // pred_check
          %p219 = pneg %p104
        $region22: #{decoder_block_forward.5} parent=11 // pred_check_branch
          %221 = sbr.rel (%p219) target = $region24
        $region23: #{decoder_block_forward.5} parent=11 // pred_region
          _
        $region24: #{decoder_block_forward.5} parent=11 // pred_fallthru
          _
        // Predicated region
        $region25: #{decoder_block_forward.5} parent=11 // pred_check
          %p222 = pneg %p125
        $region26: #{decoder_block_forward.5} parent=11 // pred_check_branch
          %224 = sbr.rel (%p222) target = $region28
        $region27: #{decoder_block_forward.5} parent=11 // pred_region
          %s226 = ssub.s32 1024, 1024
          %227 = vsyncadd [#allocation3], %s226
          %s228 = sshll.u32 [#allocation2], 4
          %s229 = int_to_ptr.vmem [resolvable:$true] %s228
          %234 = dma.hbm_to_vmem [thread:$0]  %s4, 1024, %s229, [#allocation3], 64, 64, 4
        $region28: #{decoder_block_forward.5} parent=11 // pred_fallthru
          _
        // Predicated region
        $region29: #{decoder_block_forward.5} parent=11 // pred_check
          %p235 = pneg %p146
        $region30: #{decoder_block_forward.5} parent=11 // pred_check_branch
          %237 = sbr.rel (%p235) target = $region32
        $region31: #{decoder_block_forward.5} parent=11 // pred_region
          _
        $region32: #{decoder_block_forward.5} parent=11 // pred_fallthru
          _
      $region12: #{decoder_block_forward.5} parent=5 // pred_fallthru
        _
      %p238 = scmp.lt.s32.totalorder %s15, 2
      // Predicated region
      $region33: #{decoder_block_forward.5} parent=5 // pred_check
        %p239 = pneg %p238
      $region34: #{decoder_block_forward.5} parent=5 // pred_check_branch
        %241 = sbr.rel (%p239) target = $region36
      $region35: #{decoder_block_forward.5} parent=5 // pred_region
        // Predicated region
        $region37: #{decoder_block_forward.5} parent=35 // pred_check
          %p242 = pneg %p35
        $region38: #{decoder_block_forward.5} parent=35 // pred_check_branch
          %244 = sbr.rel (%p242) target = $region40
        $region39: #{decoder_block_forward.5} parent=35 // pred_region
          %p245 = scmp.lt.s32.totalorder %s15, 1
          %s246 = scalar_select %p245, %s15, 1
          %s247 = smul.addr %s246, 8
          %s248 = smul.addr %s247, 4
          %s249 = scalar_lea.vmem %s0, %s248
        $region40: #{decoder_block_forward.5} parent=35 // pred_fallthru
          _
      $region36: #{decoder_block_forward.5} parent=5 // pred_fallthru
        _
      %p250 = scmp.le.s32.totalorder 1, %s15
      %p251 = scmp.lt.s32.totalorder %s15, 3
      %p252 = pnand %p250, %p251
      %p253 = pneg %p252
      // Predicated region
      $region41: #{decoder_block_forward.5} parent=5 // pred_check
        _
      $region42: #{decoder_block_forward.5} parent=5 // pred_check_branch
        %255 = sbr.rel (%p252) target = $region44
      $region43: #{decoder_block_forward.5} parent=5 // pred_region
        %s256 = ssub.s32 %s15, 1
        // Predicated region
        $region45: #{decoder_block_forward.5} parent=43 // pred_check
          %p257 = pneg %p125
        $region46: #{decoder_block_forward.5} parent=43 // pred_check_branch
          %259 = sbr.rel (%p257) target = $region48
        $region47: #{decoder_block_forward.5} parent=43 // pred_region
          %260 = dma.done [#allocation3], 1024
        $region48: #{decoder_block_forward.5} parent=43 // pred_fallthru
          _
        %p261 = scmp.lt.s32.totalorder %s20, 1
        %s262 = scalar_select %p261, %s20, 1
        %s263 = smul.addr %s262, 8
        %s264 = smul.addr %s263, 4
        %s265 = scalar_lea.vmem %s0, %s264
        %p266 = pneg %p41
        %p267 = pneg %p38
        %p268 = pneg %p62
        %p269 = pneg %p59
        %p270 = pneg %p83
        %p271 = pneg %p80
        %p272 = pneg %p104
        %p273 = pneg %p101
        %p274 = pneg %p125
        %p275 = pneg %p122
        %p276 = pneg %p146
        %p277 = pneg %p143
        %p278 = pneg %p172
        %p279 = pneg %p169
        %p280 = scmp.lt.s32.totalorder %s20, 1
        %s281 = scalar_select %p280, %s20, 1
        %s282 = smul.addr %s281, 64
        %s283 = smul.addr %s282, 4
        %s284 = scalar_lea.vmem %s6, %s283
        %p285 = pneg %p198
        %p286 = pneg %p195
        %p287 = scmp.lt.s32.totalorder %s20, 1
        %s288 = scalar_select %p287, %s20, 1
        %s289 = smul.addr %s288, 16
        %s290 = smul.addr %s289, 8
        %s291 = scalar_lea.vmem %s7, %s290
        %p292 = scmp.lt.s32.totalorder %s20, 1
        %s293 = scalar_select %p292, %s20, 1
        %s294 = smul.addr %s293, 8
        %s295 = smul.addr %s294, 4
        %s296 = scalar_lea.vmem %s0, %s295
        %p297 = scmp.lt.s32.totalorder %s20, 1
        %s298 = scalar_select %p297, %s20, 1
        %s299 = smul.addr %s298, 64
        %s300 = smul.addr %s299, 4
        %s301 = scalar_lea.vmem %s6, %s300
        %p302 = scmp.lt.s32.totalorder %s20, 1
        %s303 = scalar_select %p302, %s20, 1
        %s304 = smul.addr %s303, 16
        %s305 = smul.addr %s304, 8
        %s306 = scalar_lea.vmem %s7, %s305
        %v308 = vld [vmem:[%s296] sm:$0xff]
        %v309 = vld [vmem:[%s296 + $0x8] sm:$0xff]
        %v310 = vld [vmem:[%s296 + $0x10] sm:$0xff]
        %v311 = vld [vmem:[%s296 + $0x18] sm:$0xff]
        %v312 = vunpack.c.l.bf16 %v308
        %v313 = vunpack.c.h.bf16 %v308
        %v314 = vunpack.c.l.bf16 %v309
        %v315 = vunpack.c.h.bf16 %v309
        %v316 = vunpack.c.l.bf16 %v310
        %v317 = vunpack.c.h.bf16 %v310
        %v318 = vunpack.c.l.bf16 %v311
        %v319 = vunpack.c.h.bf16 %v311
        %v320 = vld [vmem:[%s1] sm:$0xff]
        %v321 = vld [vmem:[%s1 + $0x8] sm:$0xff]
        %323 = vset.pattern.permute.xlu0 0
        %324 = vperm.xlu0 %323, %v320
        %v325 = vpop.permute.xlu0 %324
        %328 = vset.pattern.permute.xlu0 0
        %329 = vperm.xlu0 %328, %v321
        %v330 = vpop.permute.xlu0 %329
        %v332 = vmul.f32 %v312, %v325
        %v333 = vmul.f32 %v313, %v325
        %v334 = vmul.f32 %v314, %v325
        %v335 = vmul.f32 %v315, %v325
        %v336 = vmul.f32 %v316, %v330
        %v337 = vmul.f32 %v317, %v330
        %v338 = vmul.f32 %v318, %v330
        %v339 = vmul.f32 %v319, %v330
        %v340 = vld [vmem:[%s2] sm:$0xff]
        %v341 = vld [vmem:[%s2 + $0x8] sm:$0xff]
        %343 = vset.pattern.permute.xlu0 0
        %344 = vperm.xlu0 %343, %v340
        %v345 = vpop.permute.xlu0 %344
        %348 = vset.pattern.permute.xlu0 0
        %349 = vperm.xlu0 %348, %v341
        %v350 = vpop.permute.xlu0 %349
        %v352 = vadd.f32 %v332, %v345
        %v353 = vadd.f32 %v333, %v345
        %v354 = vadd.f32 %v334, %v345
        %v355 = vadd.f32 %v335, %v345
        %v356 = vadd.f32 %v336, %v350
        %v357 = vadd.f32 %v337, %v350
        %v358 = vadd.f32 %v338, %v350
        %v359 = vadd.f32 %v339, %v350
        %v360 = vmax.f32 %v352, 0.0
        %v361 = vmax.f32 %v353, 0.0
        %v362 = vmax.f32 %v354, 0.0
        %v363 = vmax.f32 %v355, 0.0
        %v364 = vmax.f32 %v356, 0.0
        %v365 = vmax.f32 %v357, 0.0
        %v366 = vmax.f32 %v358, 0.0
        %v367 = vmax.f32 %v359, 0.0
        %v368 = vld [vmem:[%s3] sm:$0xff]
        %v369 = vld [vmem:[%s3 + $0x8] sm:$0xff]
        %v370 = vld [vmem:[%s3 + $0x10] sm:$0xff]
        %v371 = vld [vmem:[%s3 + $0x18] sm:$0xff]
        %v372 = vlaneseq
        %v373 = vshrl.u32 %v372, 7
        %v374 = vsub.s32 0, %v373
        %v375 = vrot.slane %v368, %v374
        %v376 = vlaneseq
        %v377 = vshrl.u32 %v376, 7
        %v378 = vsub.s32 0, %v377
        %v379 = vrot.slane %v369, %v378
        %v380 = vlaneseq
        %v381 = vshrl.u32 %v380, 7
        %v382 = vsub.s32 0, %v381
        %v383 = vrot.slane %v370, %v382
        %v384 = vlaneseq
        %v385 = vshrl.u32 %v384, 7
        %v386 = vsub.s32 0, %v385
        %v387 = vrot.slane %v371, %v386
        %v388 = vmul.f32 %v360, %v375
        %v389 = vmul.f32 %v361, %v379
        %v390 = vmul.f32 %v362, %v383
        %v391 = vmul.f32 %v363, %v387
        %v392 = vmul.f32 %v364, %v375
        %v393 = vmul.f32 %v365, %v379
        %v394 = vmul.f32 %v366, %v383
        %v395 = vmul.f32 %v367, %v387
        %v396 = vlaneseq
        %v397 = vshrl.u32 %v396, 7
        %v398 = vsub.s32 1, %v397
        %v399 = vrot.slane %v368, %v398
        %v400 = vlaneseq
        %v401 = vshrl.u32 %v400, 7
        %v402 = vsub.s32 1, %v401
        %v403 = vrot.slane %v369, %v402
        %v404 = vlaneseq
        %v405 = vshrl.u32 %v404, 7
        %v406 = vsub.s32 1, %v405
        %v407 = vrot.slane %v370, %v406
        %v408 = vlaneseq
        %v409 = vshrl.u32 %v408, 7
        %v410 = vsub.s32 1, %v409
        %v411 = vrot.slane %v371, %v410
        %416 = vrot.lane.b32.xlu0 %v399, 1
        %v417 = vpop.permute.xlu0 %416
        %418 = vrot.lane.b32.xlu0 %v403, 1
        %v419 = vpop.permute.xlu0 %418
        %420 = vrot.lane.b32.xlu0 %v407, 1
        %v421 = vpop.permute.xlu0 %420
        %422 = vrot.lane.b32.xlu0 %v411, 1
        %v423 = vpop.permute.xlu0 %422
        %vm424 = vcmask 7168
        %v425 = vsel %vm424, %v417, %v419
        %v426 = vsel %vm424, %v419, %v421
        %v427 = vsel %vm424, %v421, %v423
        %v433 = vmul.f32 %v360, %v417
        %v434 = vmul.f32 %v361, %v425
        %v435 = vmul.f32 %v362, %v426
        %v436 = vmul.f32 %v363, %v427
        %v437 = vmul.f32 %v423, 0.0
        %v438 = vmul.f32 %v364, %v417
        %v439 = vmul.f32 %v365, %v425
        %v440 = vmul.f32 %v366, %v426
        %v441 = vmul.f32 %v367, %v427
        %v442 = vlaneseq
        %v443 = vshrl.u32 %v442, 7
        %v444 = vsub.s32 2, %v443
        %v445 = vrot.slane %v368, %v444
        %v446 = vlaneseq
        %v447 = vshrl.u32 %v446, 7
        %v448 = vsub.s32 2, %v447
        %v449 = vrot.slane %v369, %v448
        %v450 = vlaneseq
        %v451 = vshrl.u32 %v450, 7
        %v452 = vsub.s32 2, %v451
        %v453 = vrot.slane %v370, %v452
        %v454 = vlaneseq
        %v455 = vshrl.u32 %v454, 7
        %v456 = vsub.s32 2, %v455
        %v457 = vrot.slane %v371, %v456
        %462 = vrot.lane.b32.xlu0 %v445, 8
        %v463 = vpop.permute.xlu0 %462
        %464 = vrot.lane.b32.xlu0 %v449, 8
        %v465 = vpop.permute.xlu0 %464
        %466 = vrot.lane.b32.xlu0 %v453, 8
        %v467 = vpop.permute.xlu0 %466
        %468 = vrot.lane.b32.xlu0 %v457, 8
        %v469 = vpop.permute.xlu0 %468
        %vm470 = vcmask 64512
        %v471 = vsel %vm470, %v463, %v465
        %v472 = vsel %vm470, %v465, %v467
        %v473 = vsel %vm470, %v467, %v469
        %v479 = vmul.f32 %v360, %v463
        %v480 = vmul.f32 %v361, %v471
        %v481 = vmul.f32 %v362, %v472
        %v482 = vmul.f32 %v363, %v473
        %v483 = vmul.f32 %v469, 0.0
        %v484 = vmul.f32 %v364, %v463
        %v485 = vmul.f32 %v365, %v471
        %v486 = vmul.f32 %v366, %v472
        %v487 = vmul.f32 %v367, %v473
        %v488 = vlaneseq
        %v489 = vshrl.u32 %v488, 7
        %v490 = vsub.s32 3, %v489
        %v491 = vrot.slane %v368, %v490
        %v492 = vlaneseq
        %v493 = vshrl.u32 %v492, 7
        %v494 = vsub.s32 3, %v493
        %v495 = vrot.slane %v369, %v494
        %v496 = vlaneseq
        %v497 = vshrl.u32 %v496, 7
        %v498 = vsub.s32 3, %v497
        %v499 = vrot.slane %v370, %v498
        %v500 = vlaneseq
        %v501 = vshrl.u32 %v500, 7
        %v502 = vsub.s32 3, %v501
        %v503 = vrot.slane %v371, %v502
        %508 = vrot.lane.b32.xlu0 %v491, 9
        %v509 = vpop.permute.xlu0 %508
        %510 = vrot.lane.b32.xlu0 %v495, 9
        %v511 = vpop.permute.xlu0 %510
        %512 = vrot.lane.b32.xlu0 %v499, 9
        %v513 = vpop.permute.xlu0 %512
        %514 = vrot.lane.b32.xlu0 %v503, 9
        %v515 = vpop.permute.xlu0 %514
        %vm516 = vcmask 72704
        %v517 = vsel %vm516, %v509, %v511
        %v518 = vsel %vm516, %v511, %v513
        %v519 = vsel %vm516, %v513, %v515
        %v525 = vmul.f32 %v360, %v509
        %v526 = vmul.f32 %v361, %v517
        %v527 = vmul.f32 %v362, %v518
        %v528 = vmul.f32 %v363, %v519
        %v529 = vmul.f32 %v515, 0.0
        %v530 = vmul.f32 %v364, %v509
        %v531 = vmul.f32 %v365, %v517
        %v532 = vmul.f32 %v366, %v518
        %v533 = vmul.f32 %v367, %v519
        %v534 = vlaneseq
        %v535 = vshrl.u32 %v534, 7
        %v536 = vsub.s32 4, %v535
        %v537 = vrot.slane %v368, %v536
        %v538 = vlaneseq
        %v539 = vshrl.u32 %v538, 7
        %v540 = vsub.s32 4, %v539
        %v541 = vrot.slane %v369, %v540
        %v542 = vlaneseq
        %v543 = vshrl.u32 %v542, 7
        %v544 = vsub.s32 4, %v543
        %v545 = vrot.slane %v370, %v544
        %v546 = vlaneseq
        %v547 = vshrl.u32 %v546, 7
        %v548 = vsub.s32 4, %v547
        %v549 = vrot.slane %v371, %v548
        %554 = vrot.lane.b32.xlu0 %v537, 64
        %v555 = vpop.permute.xlu0 %554
        %556 = vrot.lane.b32.xlu0 %v541, 64
        %v557 = vpop.permute.xlu0 %556
        %558 = vrot.lane.b32.xlu0 %v545, 64
        %v559 = vpop.permute.xlu0 %558
        %560 = vrot.lane.b32.xlu0 %v549, 64
        %v561 = vpop.permute.xlu0 %560
        %vm562 = vcmask 523264
        %v563 = vsel %vm562, %v555, %v557
        %v564 = vsel %vm562, %v557, %v559
        %v565 = vsel %vm562, %v559, %v561
        %v571 = vmul.f32 %v360, %v555
        %v572 = vmul.f32 %v361, %v563
        %v573 = vmul.f32 %v362, %v564
        %v574 = vmul.f32 %v363, %v565
        %v575 = vmul.f32 %v561, 0.0
        %v576 = vmul.f32 %v364, %v555
        %v577 = vmul.f32 %v365, %v563
        %v578 = vmul.f32 %v366, %v564
        %v579 = vmul.f32 %v367, %v565
        %v580 = vlaneseq
        %v581 = vshrl.u32 %v580, 7
        %v582 = vsub.s32 5, %v581
        %v583 = vrot.slane %v368, %v582
        %v584 = vlaneseq
        %v585 = vshrl.u32 %v584, 7
        %v586 = vsub.s32 5, %v585
        %v587 = vrot.slane %v369, %v586
        %v588 = vlaneseq
        %v589 = vshrl.u32 %v588, 7
        %v590 = vsub.s32 5, %v589
        %v591 = vrot.slane %v370, %v590
        %v592 = vlaneseq
        %v593 = vshrl.u32 %v592, 7
        %v594 = vsub.s32 5, %v593
        %v595 = vrot.slane %v371, %v594
        %600 = vrot.lane.b32.xlu0 %v583, 65
        %v601 = vpop.permute.xlu0 %600
        %602 = vrot.lane.b32.xlu0 %v587, 65
        %v603 = vpop.permute.xlu0 %602
        %604 = vrot.lane.b32.xlu0 %v591, 65
        %v605 = vpop.permute.xlu0 %604
        %606 = vrot.lane.b32.xlu0 %v595, 65
        %v607 = vpop.permute.xlu0 %606
        %vm608 = vcmask 531456
        %v609 = vsel %vm608, %v601, %v603
        %v610 = vsel %vm608, %v603, %v605
        %v611 = vsel %vm608, %v605, %v607
        %v617 = vmul.f32 %v360, %v601
        %v618 = vmul.f32 %v361, %v609
        %v619 = vmul.f32 %v362, %v610
        %v620 = vmul.f32 %v363, %v611
        %v621 = vmul.f32 %v607, 0.0
        %v622 = vmul.f32 %v364, %v601
        %v623 = vmul.f32 %v365, %v609
        %v624 = vmul.f32 %v366, %v610
        %v625 = vmul.f32 %v367, %v611
        %v626 = vlaneseq
        %v627 = vshrl.u32 %v626, 7
        %v628 = vsub.s32 6, %v627
        %v629 = vrot.slane %v368, %v628
        %v630 = vlaneseq
        %v631 = vshrl.u32 %v630, 7
        %v632 = vsub.s32 6, %v631
        %v633 = vrot.slane %v369, %v632
        %v634 = vlaneseq
        %v635 = vshrl.u32 %v634, 7
        %v636 = vsub.s32 6, %v635
        %v637 = vrot.slane %v370, %v636
        %v638 = vlaneseq
        %v639 = vshrl.u32 %v638, 7
        %v640 = vsub.s32 6, %v639
        %v641 = vrot.slane %v371, %v640
        %646 = vrot.lane.b32.xlu0 %v629, 72
        %v647 = vpop.permute.xlu0 %646
        %648 = vrot.lane.b32.xlu0 %v633, 72
        %v649 = vpop.permute.xlu0 %648
        %650 = vrot.lane.b32.xlu0 %v637, 72
        %v651 = vpop.permute.xlu0 %650
        %652 = vrot.lane.b32.xlu0 %v641, 72
        %v653 = vpop.permute.xlu0 %652
        %vm654 = vcmask 588800
        %v655 = vsel %vm654, %v647, %v649
        %v656 = vsel %vm654, %v649, %v651
        %v657 = vsel %vm654, %v651, %v653
        %v663 = vmul.f32 %v360, %v647
        %v664 = vmul.f32 %v361, %v655
        %v665 = vmul.f32 %v362, %v656
        %v666 = vmul.f32 %v363, %v657
        %v667 = vmul.f32 %v653, 0.0
        %v668 = vmul.f32 %v364, %v647
        %v669 = vmul.f32 %v365, %v655
        %v670 = vmul.f32 %v366, %v656
        %v671 = vmul.f32 %v367, %v657
        %v672 = vlaneseq
        %v673 = vshrl.u32 %v672, 7
        %v674 = vsub.s32 7, %v673
        %v675 = vrot.slane %v368, %v674
        %v676 = vlaneseq
        %v677 = vshrl.u32 %v676, 7
        %v678 = vsub.s32 7, %v677
        %v679 = vrot.slane %v369, %v678
        %v680 = vlaneseq
        %v681 = vshrl.u32 %v680, 7
        %v682 = vsub.s32 7, %v681
        %v683 = vrot.slane %v370, %v682
        %v684 = vlaneseq
        %v685 = vshrl.u32 %v684, 7
        %v686 = vsub.s32 7, %v685
        %v687 = vrot.slane %v371, %v686
        %692 = vrot.lane.b32.xlu0 %v675, 73
        %v693 = vpop.permute.xlu0 %692
        %694 = vrot.lane.b32.xlu0 %v679, 73
        %v695 = vpop.permute.xlu0 %694
        %696 = vrot.lane.b32.xlu0 %v683, 73
        %v697 = vpop.permute.xlu0 %696
        %698 = vrot.lane.b32.xlu0 %v687, 73
        %v699 = vpop.permute.xlu0 %698
        %vm700 = vcmask 596992
        %v701 = vsel %vm700, %v693, %v695
        %v702 = vsel %vm700, %v695, %v697
        %v703 = vsel %vm700, %v697, %v699
        %v709 = vmul.f32 %v360, %v693
        %v710 = vmul.f32 %v361, %v701
        %v711 = vmul.f32 %v362, %v702
        %v712 = vmul.f32 %v363, %v703
        %v713 = vmul.f32 %v699, 0.0
        %v714 = vmul.f32 %v364, %v693
        %v715 = vmul.f32 %v365, %v701
        %v716 = vmul.f32 %v366, %v702
        %v717 = vmul.f32 %v367, %v703
        %727 = vrot.lane.b32.xlu0 %v433, 127
        %v728 = vpop.permute.xlu0 %727
        %729 = vrot.lane.b32.xlu0 %v434, 127
        %v730 = vpop.permute.xlu0 %729
        %731 = vrot.lane.b32.xlu0 %v435, 127
        %v732 = vpop.permute.xlu0 %731
        %733 = vrot.lane.b32.xlu0 %v436, 127
        %v734 = vpop.permute.xlu0 %733
        %735 = vrot.lane.b32.xlu0 %v437, 127
        %v736 = vpop.permute.xlu0 %735
        %737 = vrot.lane.b32.xlu0 %v438, 127
        %v738 = vpop.permute.xlu0 %737
        %739 = vrot.lane.b32.xlu0 %v439, 127
        %v740 = vpop.permute.xlu0 %739
        %741 = vrot.lane.b32.xlu0 %v440, 127
        %v742 = vpop.permute.xlu0 %741
        %743 = vrot.lane.b32.xlu0 %v441, 127
        %v744 = vpop.permute.xlu0 %743
        %vm745 = vcmask 1039360
        %v746 = vsel %vm745, %v728, %v730
        %v747 = vsel %vm745, %v730, %v732
        %v748 = vsel %vm745, %v732, %v734
        %v749 = vsel %vm745, %v734, %v736
        %v750 = vsel %vm745, %v738, %v740
        %v751 = vsel %vm745, %v740, %v742
        %v752 = vsel %vm745, %v742, %v744
        %v753 = vsel %vm745, %v744, %v736
        %771 = vrot.lane.b32.xlu0 %v479, 120
        %v772 = vpop.permute.xlu0 %771
        %773 = vrot.lane.b32.xlu0 %v480, 120
        %v774 = vpop.permute.xlu0 %773
        %775 = vrot.lane.b32.xlu0 %v481, 120
        %v776 = vpop.permute.xlu0 %775
        %777 = vrot.lane.b32.xlu0 %v482, 120
        %v778 = vpop.permute.xlu0 %777
        %779 = vrot.lane.b32.xlu0 %v483, 120
        %v780 = vpop.permute.xlu0 %779
        %781 = vrot.lane.b32.xlu0 %v484, 120
        %v782 = vpop.permute.xlu0 %781
        %783 = vrot.lane.b32.xlu0 %v485, 120
        %v784 = vpop.permute.xlu0 %783
        %785 = vrot.lane.b32.xlu0 %v486, 120
        %v786 = vpop.permute.xlu0 %785
        %787 = vrot.lane.b32.xlu0 %v487, 120
        %v788 = vpop.permute.xlu0 %787
        %vm789 = vcmask 982016
        %v790 = vsel %vm789, %v772, %v774
        %v791 = vsel %vm789, %v774, %v776
        %v792 = vsel %vm789, %v776, %v778
        %v793 = vsel %vm789, %v778, %v780
        %v794 = vsel %vm789, %v782, %v784
        %v795 = vsel %vm789, %v784, %v786
        %v796 = vsel %vm789, %v786, %v788
        %v797 = vsel %vm789, %v788, %v780
        %815 = vrot.lane.b32.xlu0 %v525, 119
        %v816 = vpop.permute.xlu0 %815
        %817 = vrot.lane.b32.xlu0 %v526, 119
        %v818 = vpop.permute.xlu0 %817
        %819 = vrot.lane.b32.xlu0 %v527, 119
        %v820 = vpop.permute.xlu0 %819
        %821 = vrot.lane.b32.xlu0 %v528, 119
        %v822 = vpop.permute.xlu0 %821
        %823 = vrot.lane.b32.xlu0 %v529, 119
        %v824 = vpop.permute.xlu0 %823
        %825 = vrot.lane.b32.xlu0 %v530, 119
        %v826 = vpop.permute.xlu0 %825
        %827 = vrot.lane.b32.xlu0 %v531, 119
        %v828 = vpop.permute.xlu0 %827
        %829 = vrot.lane.b32.xlu0 %v532, 119
        %v830 = vpop.permute.xlu0 %829
        %831 = vrot.lane.b32.xlu0 %v533, 119
        %v832 = vpop.permute.xlu0 %831
        %vm833 = vcmask 973824
        %v834 = vsel %vm833, %v816, %v818
        %v835 = vsel %vm833, %v818, %v820
        %v836 = vsel %vm833, %v820, %v822
        %v837 = vsel %vm833, %v822, %v824
        %v838 = vsel %vm833, %v826, %v828
        %v839 = vsel %vm833, %v828, %v830
        %v840 = vsel %vm833, %v830, %v832
        %v841 = vsel %vm833, %v832, %v824
        %859 = vrot.lane.b32.xlu0 %v571, 64
        %v860 = vpop.permute.xlu0 %859
        %861 = vrot.lane.b32.xlu0 %v572, 64
        %v862 = vpop.permute.xlu0 %861
        %863 = vrot.lane.b32.xlu0 %v573, 64
        %v864 = vpop.permute.xlu0 %863
        %865 = vrot.lane.b32.xlu0 %v574, 64
        %v866 = vpop.permute.xlu0 %865
        %867 = vrot.lane.b32.xlu0 %v575, 64
        %v868 = vpop.permute.xlu0 %867
        %869 = vrot.lane.b32.xlu0 %v576, 64
        %v870 = vpop.permute.xlu0 %869
        %871 = vrot.lane.b32.xlu0 %v577, 64
        %v872 = vpop.permute.xlu0 %871
        %873 = vrot.lane.b32.xlu0 %v578, 64
        %v874 = vpop.permute.xlu0 %873
        %875 = vrot.lane.b32.xlu0 %v579, 64
        %v876 = vpop.permute.xlu0 %875
        %v877 = vsel %vm562, %v860, %v862
        %v878 = vsel %vm562, %v862, %v864
        %v879 = vsel %vm562, %v864, %v866
        %v880 = vsel %vm562, %v866, %v868
        %v881 = vsel %vm562, %v870, %v872
        %v882 = vsel %vm562, %v872, %v874
        %v883 = vsel %vm562, %v874, %v876
        %v884 = vsel %vm562, %v876, %v868
        %902 = vrot.lane.b32.xlu0 %v617, 63
        %v903 = vpop.permute.xlu0 %902
        %904 = vrot.lane.b32.xlu0 %v618, 63
        %v905 = vpop.permute.xlu0 %904
        %906 = vrot.lane.b32.xlu0 %v619, 63
        %v907 = vpop.permute.xlu0 %906
        %908 = vrot.lane.b32.xlu0 %v620, 63
        %v909 = vpop.permute.xlu0 %908
        %910 = vrot.lane.b32.xlu0 %v621, 63
        %v911 = vpop.permute.xlu0 %910
        %912 = vrot.lane.b32.xlu0 %v622, 63
        %v913 = vpop.permute.xlu0 %912
        %914 = vrot.lane.b32.xlu0 %v623, 63
        %v915 = vpop.permute.xlu0 %914
        %916 = vrot.lane.b32.xlu0 %v624, 63
        %v917 = vpop.permute.xlu0 %916
        %918 = vrot.lane.b32.xlu0 %v625, 63
        %v919 = vpop.permute.xlu0 %918
        %vm920 = vcmask 515072
        %v921 = vsel %vm920, %v903, %v905
        %v922 = vsel %vm920, %v905, %v907
        %v923 = vsel %vm920, %v907, %v909
        %v924 = vsel %vm920, %v909, %v911
        %v925 = vsel %vm920, %v913, %v915
        %v926 = vsel %vm920, %v915, %v917
        %v927 = vsel %vm920, %v917, %v919
        %v928 = vsel %vm920, %v919, %v911
        %946 = vrot.lane.b32.xlu0 %v663, 56
        %v947 = vpop.permute.xlu0 %946
        %948 = vrot.lane.b32.xlu0 %v664, 56
        %v949 = vpop.permute.xlu0 %948
        %950 = vrot.lane.b32.xlu0 %v665, 56
        %v951 = vpop.permute.xlu0 %950
        %952 = vrot.lane.b32.xlu0 %v666, 56
        %v953 = vpop.permute.xlu0 %952
        %954 = vrot.lane.b32.xlu0 %v667, 56
        %v955 = vpop.permute.xlu0 %954
        %956 = vrot.lane.b32.xlu0 %v668, 56
        %v957 = vpop.permute.xlu0 %956
        %958 = vrot.lane.b32.xlu0 %v669, 56
        %v959 = vpop.permute.xlu0 %958
        %960 = vrot.lane.b32.xlu0 %v670, 56
        %v961 = vpop.permute.xlu0 %960
        %962 = vrot.lane.b32.xlu0 %v671, 56
        %v963 = vpop.permute.xlu0 %962
        %vm964 = vcmask 457728
        %v965 = vsel %vm964, %v947, %v949
        %v966 = vsel %vm964, %v949, %v951
        %v967 = vsel %vm964, %v951, %v953
        %v968 = vsel %vm964, %v953, %v955
        %v969 = vsel %vm964, %v957, %v959
        %v970 = vsel %vm964, %v959, %v961
        %v971 = vsel %vm964, %v961, %v963
        %v972 = vsel %vm964, %v963, %v955
        %990 = vrot.lane.b32.xlu0 %v709, 55
        %v991 = vpop.permute.xlu0 %990
        %992 = vrot.lane.b32.xlu0 %v710, 55
        %v993 = vpop.permute.xlu0 %992
        %994 = vrot.lane.b32.xlu0 %v711, 55
        %v995 = vpop.permute.xlu0 %994
        %996 = vrot.lane.b32.xlu0 %v712, 55
        %v997 = vpop.permute.xlu0 %996
        %998 = vrot.lane.b32.xlu0 %v713, 55
        %v999 = vpop.permute.xlu0 %998
        %1000 = vrot.lane.b32.xlu0 %v714, 55
        %v1001 = vpop.permute.xlu0 %1000
        %1002 = vrot.lane.b32.xlu0 %v715, 55
        %v1003 = vpop.permute.xlu0 %1002
        %1004 = vrot.lane.b32.xlu0 %v716, 55
        %v1005 = vpop.permute.xlu0 %1004
        %1006 = vrot.lane.b32.xlu0 %v717, 55
        %v1007 = vpop.permute.xlu0 %1006
        %vm1008 = vcmask 449536
        %v1009 = vsel %vm1008, %v991, %v993
        %v1010 = vsel %vm1008, %v993, %v995
        %v1011 = vsel %vm1008, %v995, %v997
        %v1012 = vsel %vm1008, %v997, %v999
        %v1013 = vsel %vm1008, %v1001, %v1003
        %v1014 = vsel %vm1008, %v1003, %v1005
        %v1015 = vsel %vm1008, %v1005, %v1007
        %v1016 = vsel %vm1008, %v1007, %v999
        %v1025 = vpack.c.bf16 %v392, %v388
        %v1026 = vpack.c.bf16 %v393, %v389
        %v1027 = vpack.c.bf16 %v394, %v390
        %v1028 = vpack.c.bf16 %v395, %v391
        %v1029 = vpack.c.bf16 %v750, %v746
        %v1030 = vpack.c.bf16 %v751, %v747
        %v1031 = vpack.c.bf16 %v752, %v748
        %v1032 = vpack.c.bf16 %v753, %v749
        %v1033 = vpack.c.bf16 %v794, %v790
        %v1034 = vpack.c.bf16 %v795, %v791
        %v1035 = vpack.c.bf16 %v796, %v792
        %v1036 = vpack.c.bf16 %v797, %v793
        %v1037 = vpack.c.bf16 %v838, %v834
        %v1038 = vpack.c.bf16 %v839, %v835
        %v1039 = vpack.c.bf16 %v840, %v836
        %v1040 = vpack.c.bf16 %v841, %v837
        %v1041 = vpack.c.bf16 %v881, %v877
        %v1042 = vpack.c.bf16 %v882, %v878
        %v1043 = vpack.c.bf16 %v883, %v879
        %v1044 = vpack.c.bf16 %v884, %v880
        %v1045 = vpack.c.bf16 %v925, %v921
        %v1046 = vpack.c.bf16 %v926, %v922
        %v1047 = vpack.c.bf16 %v927, %v923
        %v1048 = vpack.c.bf16 %v928, %v924
        %v1049 = vpack.c.bf16 %v969, %v965
        %v1050 = vpack.c.bf16 %v970, %v966
        %v1051 = vpack.c.bf16 %v971, %v967
        %v1052 = vpack.c.bf16 %v972, %v968
        %v1053 = vpack.c.bf16 %v1013, %v1009
        %v1054 = vpack.c.bf16 %v1014, %v1010
        %v1055 = vpack.c.bf16 %v1015, %v1011
        %v1056 = vpack.c.bf16 %v1016, %v1012
        %v1057 = vld [vmem:[#allocation2] sm:$0xf]
        %v1058 = vld [vmem:[#allocation2 + $0x4] sm:$0xf]
        %v1059 = vld [vmem:[#allocation2 + $0x8] sm:$0xf]
        %v1060 = vld [vmem:[#allocation2 + $0xc] sm:$0xf]
        %v1061 = vld [vmem:[#allocation2 + $0x10] sm:$0xf]
        %v1062 = vld [vmem:[#allocation2 + $0x14] sm:$0xf]
        %v1063 = vld [vmem:[#allocation2 + $0x18] sm:$0xf]
        %v1064 = vld [vmem:[#allocation2 + $0x1c] sm:$0xf]
        %v1065 = vld [vmem:[#allocation2 + $0x20] sm:$0xf]
        %v1066 = vld [vmem:[#allocation2 + $0x24] sm:$0xf]
        %v1067 = vld [vmem:[#allocation2 + $0x28] sm:$0xf]
        %v1068 = vld [vmem:[#allocation2 + $0x2c] sm:$0xf]
        %v1069 = vld [vmem:[#allocation2 + $0x30] sm:$0xf]
        %v1070 = vld [vmem:[#allocation2 + $0x34] sm:$0xf]
        %v1071 = vld [vmem:[#allocation2 + $0x38] sm:$0xf]
        %v1072 = vld [vmem:[#allocation2 + $0x3c] sm:$0xf]
        %v1073 = vld [vmem:[%s5] sm:$0xff]
        %v1074 = vld [vmem:[%s5 + $0x8] sm:$0xff]
        %v1075 = vld [vmem:[%s5 + $0x10] sm:$0xff]
        %v1076 = vld [vmem:[%s5 + $0x18] sm:$0xff]
        %v1077 = vld [vmem:[%s5 + $0x20] sm:$0xff]
        %v1078 = vld [vmem:[%s5 + $0x28] sm:$0xff]
        %v1079 = vld [vmem:[%s5 + $0x30] sm:$0xff]
        %v1080 = vld [vmem:[%s5 + $0x38] sm:$0xff]
        %v1081 = vld [vmem:[%s5 + $0x40] sm:$0xff]
        %v1082 = vld [vmem:[%s5 + $0x48] sm:$0xff]
        %v1083 = vld [vmem:[%s5 + $0x50] sm:$0xff]
        %v1084 = vld [vmem:[%s5 + $0x58] sm:$0xff]
        %v1085 = vld [vmem:[%s5 + $0x60] sm:$0xff]
        %v1086 = vld [vmem:[%s5 + $0x68] sm:$0xff]
        %v1087 = vld [vmem:[%s5 + $0x70] sm:$0xff]
        %v1088 = vld [vmem:[%s5 + $0x78] sm:$0xff]
        %1090 = vset.pattern.permute.xlu0 0
        %1091 = vperm.xlu0 %1090, %v1073
        %v1092 = vpop.permute.xlu0 %1091
        %1095 = vset.pattern.permute.xlu0 0
        %1096 = vperm.xlu0 %1095, %v1074
        %v1097 = vpop.permute.xlu0 %1096
        %1100 = vset.pattern.permute.xlu0 0
        %1101 = vperm.xlu0 %1100, %v1075
        %v1102 = vpop.permute.xlu0 %1101
        %1105 = vset.pattern.permute.xlu0 0
        %1106 = vperm.xlu0 %1105, %v1076
        %v1107 = vpop.permute.xlu0 %1106
        %1110 = vset.pattern.permute.xlu0 0
        %1111 = vperm.xlu0 %1110, %v1077
        %v1112 = vpop.permute.xlu0 %1111
        %1115 = vset.pattern.permute.xlu0 0
        %1116 = vperm.xlu0 %1115, %v1078
        %v1117 = vpop.permute.xlu0 %1116
        %1120 = vset.pattern.permute.xlu0 0
        %1121 = vperm.xlu0 %1120, %v1079
        %v1122 = vpop.permute.xlu0 %1121
        %1125 = vset.pattern.permute.xlu0 0
        %1126 = vperm.xlu0 %1125, %v1080
        %v1127 = vpop.permute.xlu0 %1126
        %1130 = vset.pattern.permute.xlu0 0
        %1131 = vperm.xlu0 %1130, %v1081
        %v1132 = vpop.permute.xlu0 %1131
        %1135 = vset.pattern.permute.xlu0 0
        %1136 = vperm.xlu0 %1135, %v1082
        %v1137 = vpop.permute.xlu0 %1136
        %1140 = vset.pattern.permute.xlu0 0
        %1141 = vperm.xlu0 %1140, %v1083
        %v1142 = vpop.permute.xlu0 %1141
        %1145 = vset.pattern.permute.xlu0 0
        %1146 = vperm.xlu0 %1145, %v1084
        %v1147 = vpop.permute.xlu0 %1146
        %1150 = vset.pattern.permute.xlu0 0
        %1151 = vperm.xlu0 %1150, %v1085
        %v1152 = vpop.permute.xlu0 %1151
        %1155 = vset.pattern.permute.xlu0 0
        %1156 = vperm.xlu0 %1155, %v1086
        %v1157 = vpop.permute.xlu0 %1156
        %1160 = vset.pattern.permute.xlu0 0
        %1161 = vperm.xlu0 %1160, %v1087
        %v1162 = vpop.permute.xlu0 %1161
        %1165 = vset.pattern.permute.xlu0 0
        %1166 = vperm.xlu0 %1165, %v1088
        %v1167 = vpop.permute.xlu0 %1166
        %v1185 = vunpack.c.l.b16 %v1057
        %v1186 = vunpack.c.l.b16 %v1058
        %v1187 = vunpack.c.l.b16 %v1059
        %v1188 = vunpack.c.l.b16 %v1060
        %v1189 = vunpack.c.l.b16 %v1061
        %v1190 = vunpack.c.l.b16 %v1062
        %v1191 = vunpack.c.l.b16 %v1063
        %v1192 = vunpack.c.l.b16 %v1064
        %v1193 = vunpack.c.l.b16 %v1065
        %v1194 = vunpack.c.l.b16 %v1066
        %v1195 = vunpack.c.l.b16 %v1067
        %v1196 = vunpack.c.l.b16 %v1068
        %v1197 = vunpack.c.l.b16 %v1069
        %v1198 = vunpack.c.l.b16 %v1070
        %v1199 = vunpack.c.l.b16 %v1071
        %v1200 = vunpack.c.l.b16 %v1072
        %v1201 = vpack.c.b16 %v1186, %v1185
        %v1202 = vpack.c.b16 %v1188, %v1187
        %v1203 = vpack.c.b16 %v1190, %v1189
        %v1204 = vpack.c.b16 %v1192, %v1191
        %v1205 = vpack.c.b16 %v1194, %v1193
        %v1206 = vpack.c.b16 %v1196, %v1195
        %v1207 = vpack.c.b16 %v1198, %v1197
        %v1208 = vpack.c.b16 %v1200, %v1199
        %1217 = vmatprep.subr.bf16.mxu0 %v1026
        %1218 = vmatpush1.bf16.msra.mxu0 %v1025
        %1219 = vmatprep.subr.bf16.mxu0 %v1030
        %1220 = vmatpush1.bf16.msra.mxu0 %v1029
        %1221 = vmatprep.subr.bf16.mxu0 %v1034
        %1222 = vmatpush1.bf16.msra.mxu0 %v1033
        %1223 = vmatprep.subr.bf16.mxu0 %v1038
        %1224 = vmatpush1.bf16.msra.mxu0 %v1037
        %1225 = vmatprep.subr.bf16.mxu0 %v1042
        %1226 = vmatpush1.bf16.msra.mxu0 %v1041
        %1227 = vmatprep.subr.bf16.mxu0 %v1046
        %1228 = vmatpush1.bf16.msra.mxu0 %v1045
        %1229 = vmatprep.subr.bf16.mxu0 %v1050
        %1230 = vmatpush1.bf16.msra.mxu0 %v1049
        %1231 = vmatprep.subr.bf16.mxu0 %v1054
        %1232 = vmatpush1.bf16.msra.mxu0 %v1053
        %1233 = vmatprep.subr.bf16.mxu0 0
        %1234 = vmatpush1.bf16.msra.mxu0 0
        %1235 = vmatprep.subr.bf16.mxu0 0
        %1236 = vmatpush1.bf16.msra.mxu0 0
        %1237 = vmatprep.subr.bf16.mxu0 0
        %1238 = vmatpush1.bf16.msra.mxu0 0
        %1239 = vmatprep.subr.bf16.mxu0 0
        %1240 = vmatpush1.bf16.msra.mxu0 0
        %1241 = vmatprep.subr.bf16.mxu0 0
        %1242 = vmatpush1.bf16.msra.mxu0 0
        %1243 = vmatprep.subr.bf16.mxu0 0
        %1244 = vmatpush1.bf16.msra.mxu0 0
        %1245 = vmatprep.subr.bf16.mxu0 0
        %1246 = vmatpush1.bf16.msra.mxu0 0
        %1247 = vmatprep.subr.bf16.mxu0 0
        %1248 = vmatpush1.bf16.msra.mxu0 0
        %1249 = vmatprep.mubr.bf16.mxu0 0
        %1250 = vmatmul.mubr.bf16.gmra.mrb[0].mxu0 %v1201
        %v1251 = vpop.f32.mrb[0].mxu0
        %v1252 = vadd.f32 %v1092, %v1251
        %v1253 = vpop.f32.mrb[0].mxu0
        %v1254 = vadd.f32 %v1092, %v1253
        %v1255 = vpop.f32.mrb[0].mxu0
        %v1256 = vadd.f32 %v1097, %v1255
        %v1257 = vpop.f32.mrb[0].mxu0
        %v1258 = vadd.f32 %v1097, %v1257
        %1259 = vmatprep.mubr.bf16.mxu0 0
        %1260 = vmatmul.mubr.bf16.gmra.mrb[0].mxu0 %v1202
        %v1261 = vpop.f32.mrb[0].mxu0
        %v1262 = vadd.f32 %v1102, %v1261
        %v1263 = vpop.f32.mrb[0].mxu0
        %v1264 = vadd.f32 %v1102, %v1263
        %v1265 = vpop.f32.mrb[0].mxu0
        %v1266 = vadd.f32 %v1107, %v1265
        %v1267 = vpop.f32.mrb[0].mxu0
        %v1268 = vadd.f32 %v1107, %v1267
        %1269 = vmatprep.mubr.bf16.mxu0 0
        %1270 = vmatmul.mubr.bf16.gmra.mrb[0].mxu0 %v1203
        %v1271 = vpop.f32.mrb[0].mxu0
        %v1272 = vadd.f32 %v1112, %v1271
        %v1273 = vpop.f32.mrb[0].mxu0
        %v1274 = vadd.f32 %v1112, %v1273
        %v1275 = vpop.f32.mrb[0].mxu0
        %v1276 = vadd.f32 %v1117, %v1275
        %v1277 = vpop.f32.mrb[0].mxu0
        %v1278 = vadd.f32 %v1117, %v1277
        %1279 = vmatprep.mubr.bf16.mxu0 0
        %1280 = vmatmul.mubr.bf16.gmra.mrb[0].mxu0 %v1204
        %v1281 = vpop.f32.mrb[0].mxu0
        %v1282 = vadd.f32 %v1122, %v1281
        %v1283 = vpop.f32.mrb[0].mxu0
        %v1284 = vadd.f32 %v1122, %v1283
        %v1285 = vpop.f32.mrb[0].mxu0
        %v1286 = vadd.f32 %v1127, %v1285
        %v1287 = vpop.f32.mrb[0].mxu0
        %v1288 = vadd.f32 %v1127, %v1287
        %1289 = vmatprep.mubr.bf16.mxu0 0
        %1290 = vmatmul.mubr.bf16.gmra.mrb[0].mxu0 %v1205
        %v1291 = vpop.f32.mrb[0].mxu0
        %v1292 = vadd.f32 %v1132, %v1291
        %v1293 = vpop.f32.mrb[0].mxu0
        %v1294 = vadd.f32 %v1132, %v1293
        %v1295 = vpop.f32.mrb[0].mxu0
        %v1296 = vadd.f32 %v1137, %v1295
        %v1297 = vpop.f32.mrb[0].mxu0
        %v1298 = vadd.f32 %v1137, %v1297
        %1299 = vmatprep.mubr.bf16.mxu0 0
        %1300 = vmatmul.mubr.bf16.gmra.mrb[0].mxu0 %v1206
        %v1301 = vpop.f32.mrb[0].mxu0
        %v1302 = vadd.f32 %v1142, %v1301
        %v1303 = vpop.f32.mrb[0].mxu0
        %v1304 = vadd.f32 %v1142, %v1303
        %v1305 = vpop.f32.mrb[0].mxu0
        %v1306 = vadd.f32 %v1147, %v1305
        %v1307 = vpop.f32.mrb[0].mxu0
        %v1308 = vadd.f32 %v1147, %v1307
        %1309 = vmatprep.mubr.bf16.mxu0 0
        %1310 = vmatmul.mubr.bf16.gmra.mrb[0].mxu0 %v1207
        %v1311 = vpop.f32.mrb[0].mxu0
        %v1312 = vadd.f32 %v1152, %v1311
        %v1313 = vpop.f32.mrb[0].mxu0
        %v1314 = vadd.f32 %v1152, %v1313
        %v1315 = vpop.f32.mrb[0].mxu0
        %v1316 = vadd.f32 %v1157, %v1315
        %v1317 = vpop.f32.mrb[0].mxu0
        %v1318 = vadd.f32 %v1157, %v1317
        %1319 = vmatprep.mubr.bf16.mxu0 0
        %1320 = vmatmul.mubr.bf16.gmra.mrb[0].mxu0 %v1208
        %v1321 = vpop.f32.mrb[0].mxu0
        %v1322 = vadd.f32 %v1162, %v1321
        %v1323 = vpop.f32.mrb[0].mxu0
        %v1324 = vadd.f32 %v1162, %v1323
        %v1325 = vpop.f32.mrb[0].mxu0
        %v1326 = vadd.f32 %v1167, %v1325
        %v1327 = vpop.f32.mrb[0].mxu0
        %v1328 = vadd.f32 %v1167, %v1327
        %1329 = vdwg.mxu0
        %1330 = vmatprep.subr.bf16.mxu0 %v1028
        %1331 = vmatpush1.bf16.msra.mxu0 %v1027
        %1332 = vmatprep.subr.bf16.mxu0 %v1032
        %1333 = vmatpush1.bf16.msra.mxu0 %v1031
        %1334 = vmatprep.subr.bf16.mxu0 %v1036
        %1335 = vmatpush1.bf16.msra.mxu0 %v1035
        %1336 = vmatprep.subr.bf16.mxu0 %v1040
        %1337 = vmatpush1.bf16.msra.mxu0 %v1039
        %1338 = vmatprep.subr.bf16.mxu0 %v1044
        %1339 = vmatpush1.bf16.msra.mxu0 %v1043
        %1340 = vmatprep.subr.bf16.mxu0 %v1048
        %1341 = vmatpush1.bf16.msra.mxu0 %v1047
        %1342 = vmatprep.subr.bf16.mxu0 %v1052
        %1343 = vmatpush1.bf16.msra.mxu0 %v1051
        %1344 = vmatprep.subr.bf16.mxu0 %v1056
        %1345 = vmatpush1.bf16.msra.mxu0 %v1055
        %1346 = vmatprep.subr.bf16.mxu0 0
        %1347 = vmatpush1.bf16.msra.mxu0 0
        %1348 = vmatprep.subr.bf16.mxu0 0
        %1349 = vmatpush1.bf16.msra.mxu0 0
        %1350 = vmatprep.subr.bf16.mxu0 0
        %1351 = vmatpush1.bf16.msra.mxu0 0
        %1352 = vmatprep.subr.bf16.mxu0 0
        %1353 = vmatpush1.bf16.msra.mxu0 0
        %1354 = vmatprep.subr.bf16.mxu0 0
        %1355 = vmatpush1.bf16.msra.mxu0 0
        %1356 = vmatprep.subr.bf16.mxu0 0
        %1357 = vmatpush1.bf16.msra.mxu0 0
        %1358 = vmatprep.subr.bf16.mxu0 0
        %1359 = vmatpush1.bf16.msra.mxu0 0
        %1360 = vmatprep.subr.bf16.mxu0 0
        %1361 = vmatpush1.bf16.msra.mxu0 0
        %1362 = vmatprep.mubr.bf16.mxu0 0
        %1363 = vmatmul.mubr.bf16.gmra.mrb[0].mxu0 %v1201
        %v1364 = vpop.f32.mrb[0].mxu0
        %v1365 = vadd.f32 %v1092, %v1364
        %v1366 = vpop.f32.mrb[0].mxu0
        %v1367 = vadd.f32 %v1092, %v1366
        %v1368 = vpop.f32.mrb[0].mxu0
        %v1369 = vadd.f32 %v1097, %v1368
        %v1370 = vpop.f32.mrb[0].mxu0
        %v1371 = vadd.f32 %v1097, %v1370
        %1372 = vmatprep.mubr.bf16.mxu0 0
        %1373 = vmatmul.mubr.bf16.gmra.mrb[0].mxu0 %v1202
        %v1374 = vpop.f32.mrb[0].mxu0
        %v1375 = vadd.f32 %v1102, %v1374
        %v1376 = vpop.f32.mrb[0].mxu0
        %v1377 = vadd.f32 %v1102, %v1376
        %v1378 = vpop.f32.mrb[0].mxu0
        %v1379 = vadd.f32 %v1107, %v1378
        %v1380 = vpop.f32.mrb[0].mxu0
        %v1381 = vadd.f32 %v1107, %v1380
        %1382 = vmatprep.mubr.bf16.mxu0 0
        %1383 = vmatmul.mubr.bf16.gmra.mrb[0].mxu0 %v1203
        %v1384 = vpop.f32.mrb[0].mxu0
        %v1385 = vadd.f32 %v1112, %v1384
        %v1386 = vpop.f32.mrb[0].mxu0
        %v1387 = vadd.f32 %v1112, %v1386
        %v1388 = vpop.f32.mrb[0].mxu0
        %v1389 = vadd.f32 %v1117, %v1388
        %v1390 = vpop.f32.mrb[0].mxu0
        %v1391 = vadd.f32 %v1117, %v1390
        %1392 = vmatprep.mubr.bf16.mxu0 0
        %1393 = vmatmul.mubr.bf16.gmra.mrb[0].mxu0 %v1204
        %v1394 = vpop.f32.mrb[0].mxu0
        %v1395 = vadd.f32 %v1122, %v1394
        %v1396 = vpop.f32.mrb[0].mxu0
        %v1397 = vadd.f32 %v1122, %v1396
        %v1398 = vpop.f32.mrb[0].mxu0
        %v1399 = vadd.f32 %v1127, %v1398
        %v1400 = vpop.f32.mrb[0].mxu0
        %v1401 = vadd.f32 %v1127, %v1400
        %1402 = vmatprep.mubr.bf16.mxu0 0
        %1403 = vmatmul.mubr.bf16.gmra.mrb[0].mxu0 %v1205
        %v1404 = vpop.f32.mrb[0].mxu0
        %v1405 = vadd.f32 %v1132, %v1404
        %v1406 = vpop.f32.mrb[0].mxu0
        %v1407 = vadd.f32 %v1132, %v1406
        %v1408 = vpop.f32.mrb[0].mxu0
        %v1409 = vadd.f32 %v1137, %v1408
        %v1410 = vpop.f32.mrb[0].mxu0
        %v1411 = vadd.f32 %v1137, %v1410
        %1412 = vmatprep.mubr.bf16.mxu0 0
        %1413 = vmatmul.mubr.bf16.gmra.mrb[0].mxu0 %v1206
        %v1414 = vpop.f32.mrb[0].mxu0
        %v1415 = vadd.f32 %v1142, %v1414
        %v1416 = vpop.f32.mrb[0].mxu0
        %v1417 = vadd.f32 %v1142, %v1416
        %v1418 = vpop.f32.mrb[0].mxu0
        %v1419 = vadd.f32 %v1147, %v1418
        %v1420 = vpop.f32.mrb[0].mxu0
        %v1421 = vadd.f32 %v1147, %v1420
        %1422 = vmatprep.mubr.bf16.mxu0 0
        %1423 = vmatmul.mubr.bf16.gmra.mrb[0].mxu0 %v1207
        %v1424 = vpop.f32.mrb[0].mxu0
        %v1425 = vadd.f32 %v1152, %v1424
        %v1426 = vpop.f32.mrb[0].mxu0
        %v1427 = vadd.f32 %v1152, %v1426
        %v1428 = vpop.f32.mrb[0].mxu0
        %v1429 = vadd.f32 %v1157, %v1428
        %v1430 = vpop.f32.mrb[0].mxu0
        %v1431 = vadd.f32 %v1157, %v1430
        %1432 = vmatprep.mubr.bf16.mxu0 0
        %1433 = vmatmul.mubr.bf16.gmra.mrb[0].mxu0 %v1208
        %v1434 = vpop.f32.mrb[0].mxu0
        %v1435 = vadd.f32 %v1162, %v1434
        %v1436 = vpop.f32.mrb[0].mxu0
        %v1437 = vadd.f32 %v1162, %v1436
        %v1438 = vpop.f32.mrb[0].mxu0
        %v1439 = vadd.f32 %v1167, %v1438
        %v1440 = vpop.f32.mrb[0].mxu0
        %v1441 = vadd.f32 %v1167, %v1440
        %1442 = vdwg.mxu0
        %v1443 = vadd.f32 %v1252, %v1254
        %v1444 = vadd.f32 %v1443, %v1365
        %v1445 = vadd.f32 %v1444, %v1367
        %1446 = vadd.xlane.f32.xlu0 %v1445
        %v1447 = vpop.xlane.xlu0 %1446
        %v1448 = vadd.f32 %v1256, %v1258
        %v1449 = vadd.f32 %v1448, %v1369
        %v1450 = vadd.f32 %v1449, %v1371
        %1451 = vadd.xlane.f32.xlu0 %v1450
        %v1452 = vpop.xlane.xlu0 %1451
        %v1453 = vadd.f32 %v1262, %v1264
        %v1454 = vadd.f32 %v1453, %v1375
        %v1455 = vadd.f32 %v1454, %v1377
        %1456 = vadd.xlane.f32.xlu0 %v1455
        %v1457 = vpop.xlane.xlu0 %1456
        %v1458 = vadd.f32 %v1266, %v1268
        %v1459 = vadd.f32 %v1458, %v1379
        %v1460 = vadd.f32 %v1459, %v1381
        %1461 = vadd.xlane.f32.xlu0 %v1460
        %v1462 = vpop.xlane.xlu0 %1461
        %v1463 = vadd.f32 %v1272, %v1274
        %v1464 = vadd.f32 %v1463, %v1385
        %v1465 = vadd.f32 %v1464, %v1387
        %1466 = vadd.xlane.f32.xlu0 %v1465
        %v1467 = vpop.xlane.xlu0 %1466
        %v1468 = vadd.f32 %v1276, %v1278
        %v1469 = vadd.f32 %v1468, %v1389
        %v1470 = vadd.f32 %v1469, %v1391
        %1471 = vadd.xlane.f32.xlu0 %v1470
        %v1472 = vpop.xlane.xlu0 %1471
        %v1473 = vadd.f32 %v1282, %v1284
        %v1474 = vadd.f32 %v1473, %v1395
        %v1475 = vadd.f32 %v1474, %v1397
        %1476 = vadd.xlane.f32.xlu0 %v1475
        %v1477 = vpop.xlane.xlu0 %1476
        %v1478 = vadd.f32 %v1286, %v1288
        %v1479 = vadd.f32 %v1478, %v1399
        %v1480 = vadd.f32 %v1479, %v1401
        %1481 = vadd.xlane.f32.xlu0 %v1480
        %v1482 = vpop.xlane.xlu0 %1481
        %v1483 = vadd.f32 %v1292, %v1294
        %v1484 = vadd.f32 %v1483, %v1405
        %v1485 = vadd.f32 %v1484, %v1407
        %1486 = vadd.xlane.f32.xlu0 %v1485
        %v1487 = vpop.xlane.xlu0 %1486
        %v1488 = vadd.f32 %v1296, %v1298
        %v1489 = vadd.f32 %v1488, %v1409
        %v1490 = vadd.f32 %v1489, %v1411
        %1491 = vadd.xlane.f32.xlu0 %v1490
        %v1492 = vpop.xlane.xlu0 %1491
        %v1493 = vadd.f32 %v1302, %v1304
        %v1494 = vadd.f32 %v1493, %v1415
        %v1495 = vadd.f32 %v1494, %v1417
        %1496 = vadd.xlane.f32.xlu0 %v1495
        %v1497 = vpop.xlane.xlu0 %1496
        %v1498 = vadd.f32 %v1306, %v1308
        %v1499 = vadd.f32 %v1498, %v1419
        %v1500 = vadd.f32 %v1499, %v1421
        %1501 = vadd.xlane.f32.xlu0 %v1500
        %v1502 = vpop.xlane.xlu0 %1501
        %v1503 = vadd.f32 %v1312, %v1314
        %v1504 = vadd.f32 %v1503, %v1425
        %v1505 = vadd.f32 %v1504, %v1427
        %1506 = vadd.xlane.f32.xlu0 %v1505
        %v1507 = vpop.xlane.xlu0 %1506
        %v1508 = vadd.f32 %v1316, %v1318
        %v1509 = vadd.f32 %v1508, %v1429
        %v1510 = vadd.f32 %v1509, %v1431
        %1511 = vadd.xlane.f32.xlu0 %v1510
        %v1512 = vpop.xlane.xlu0 %1511
        %v1513 = vadd.f32 %v1322, %v1324
        %v1514 = vadd.f32 %v1513, %v1435
        %v1515 = vadd.f32 %v1514, %v1437
        %1516 = vadd.xlane.f32.xlu0 %v1515
        %v1517 = vpop.xlane.xlu0 %1516
        %v1518 = vadd.f32 %v1326, %v1328
        %v1519 = vadd.f32 %v1518, %v1439
        %v1520 = vadd.f32 %v1519, %v1441
        %1521 = vadd.xlane.f32.xlu0 %v1520
        %v1522 = vpop.xlane.xlu0 %1521
        %v1523 = vmul.f32 %v1252, %v1252
        %v1524 = vmul.f32 %v1254, %v1254
        %v1525 = vmul.f32 %v1365, %v1365
        %v1526 = vmul.f32 %v1367, %v1367
        %v1527 = vmul.f32 %v1256, %v1256
        %v1528 = vmul.f32 %v1258, %v1258
        %v1529 = vmul.f32 %v1369, %v1369
        %v1530 = vmul.f32 %v1371, %v1371
        %v1531 = vmul.f32 %v1262, %v1262
        %v1532 = vmul.f32 %v1264, %v1264
        %v1533 = vmul.f32 %v1375, %v1375
        %v1534 = vmul.f32 %v1377, %v1377
        %v1535 = vmul.f32 %v1266, %v1266
        %v1536 = vmul.f32 %v1268, %v1268
        %v1537 = vmul.f32 %v1379, %v1379
        %v1538 = vmul.f32 %v1381, %v1381
        %v1539 = vmul.f32 %v1272, %v1272
        %v1540 = vmul.f32 %v1274, %v1274
        %v1541 = vmul.f32 %v1385, %v1385
        %v1542 = vmul.f32 %v1387, %v1387
        %v1543 = vmul.f32 %v1276, %v1276
        %v1544 = vmul.f32 %v1278, %v1278
        %v1545 = vmul.f32 %v1389, %v1389
        %v1546 = vmul.f32 %v1391, %v1391
        %v1547 = vmul.f32 %v1282, %v1282
        %v1548 = vmul.f32 %v1284, %v1284
        %v1549 = vmul.f32 %v1395, %v1395
        %v1550 = vmul.f32 %v1397, %v1397
        %v1551 = vmul.f32 %v1286, %v1286
        %v1552 = vmul.f32 %v1288, %v1288
        %v1553 = vmul.f32 %v1399, %v1399
        %v1554 = vmul.f32 %v1401, %v1401
        %v1555 = vmul.f32 %v1292, %v1292
        %v1556 = vmul.f32 %v1294, %v1294
        %v1557 = vmul.f32 %v1405, %v1405
        %v1558 = vmul.f32 %v1407, %v1407
        %v1559 = vmul.f32 %v1296, %v1296
        %v1560 = vmul.f32 %v1298, %v1298
        %v1561 = vmul.f32 %v1409, %v1409
        %v1562 = vmul.f32 %v1411, %v1411
        %v1563 = vmul.f32 %v1302, %v1302
        %v1564 = vmul.f32 %v1304, %v1304
        %v1565 = vmul.f32 %v1415, %v1415
        %v1566 = vmul.f32 %v1417, %v1417
        %v1567 = vmul.f32 %v1306, %v1306
        %v1568 = vmul.f32 %v1308, %v1308
        %v1569 = vmul.f32 %v1419, %v1419
        %v1570 = vmul.f32 %v1421, %v1421
        %v1571 = vmul.f32 %v1312, %v1312
        %v1572 = vmul.f32 %v1314, %v1314
        %v1573 = vmul.f32 %v1425, %v1425
        %v1574 = vmul.f32 %v1427, %v1427
        %v1575 = vmul.f32 %v1316, %v1316
        %v1576 = vmul.f32 %v1318, %v1318
        %v1577 = vmul.f32 %v1429, %v1429
        %v1578 = vmul.f32 %v1431, %v1431
        %v1579 = vmul.f32 %v1322, %v1322
        %v1580 = vmul.f32 %v1324, %v1324
        %v1581 = vmul.f32 %v1435, %v1435
        %v1582 = vmul.f32 %v1437, %v1437
        %v1583 = vmul.f32 %v1326, %v1326
        %v1584 = vmul.f32 %v1328, %v1328
        %v1585 = vmul.f32 %v1439, %v1439
        %v1586 = vmul.f32 %v1441, %v1441
        %v1587 = vadd.f32 %v1523, %v1524
        %v1588 = vadd.f32 %v1587, %v1525
        %v1589 = vadd.f32 %v1588, %v1526
        %1590 = vadd.xlane.f32.xlu0 %v1589
        %v1591 = vpop.xlane.xlu0 %1590
        %v1592 = vadd.f32 %v1527, %v1528
        %v1593 = vadd.f32 %v1592, %v1529
        %v1594 = vadd.f32 %v1593, %v1530
        %1595 = vadd.xlane.f32.xlu0 %v1594
        %v1596 = vpop.xlane.xlu0 %1595
        %v1597 = vadd.f32 %v1531, %v1532
        %v1598 = vadd.f32 %v1597, %v1533
        %v1599 = vadd.f32 %v1598, %v1534
        %1600 = vadd.xlane.f32.xlu0 %v1599
        %v1601 = vpop.xlane.xlu0 %1600
        %v1602 = vadd.f32 %v1535, %v1536
        %v1603 = vadd.f32 %v1602, %v1537
        %v1604 = vadd.f32 %v1603, %v1538
        %1605 = vadd.xlane.f32.xlu0 %v1604
        %v1606 = vpop.xlane.xlu0 %1605
        %v1607 = vadd.f32 %v1539, %v1540
        %v1608 = vadd.f32 %v1607, %v1541
        %v1609 = vadd.f32 %v1608, %v1542
        %1610 = vadd.xlane.f32.xlu0 %v1609
        %v1611 = vpop.xlane.xlu0 %1610
        %v1612 = vadd.f32 %v1543, %v1544
        %v1613 = vadd.f32 %v1612, %v1545
        %v1614 = vadd.f32 %v1613, %v1546
        %1615 = vadd.xlane.f32.xlu0 %v1614
        %v1616 = vpop.xlane.xlu0 %1615
        %v1617 = vadd.f32 %v1547, %v1548
        %v1618 = vadd.f32 %v1617, %v1549
        %v1619 = vadd.f32 %v1618, %v1550
        %1620 = vadd.xlane.f32.xlu0 %v1619
        %v1621 = vpop.xlane.xlu0 %1620
        %v1622 = vadd.f32 %v1551, %v1552
        %v1623 = vadd.f32 %v1622, %v1553
        %v1624 = vadd.f32 %v1623, %v1554
        %1625 = vadd.xlane.f32.xlu0 %v1624
        %v1626 = vpop.xlane.xlu0 %1625
        %v1627 = vadd.f32 %v1555, %v1556
        %v1628 = vadd.f32 %v1627, %v1557
        %v1629 = vadd.f32 %v1628, %v1558
        %1630 = vadd.xlane.f32.xlu0 %v1629
        %v1631 = vpop.xlane.xlu0 %1630
        %v1632 = vadd.f32 %v1559, %v1560
        %v1633 = vadd.f32 %v1632, %v1561
        %v1634 = vadd.f32 %v1633, %v1562
        %1635 = vadd.xlane.f32.xlu0 %v1634
        %v1636 = vpop.xlane.xlu0 %1635
        %v1637 = vadd.f32 %v1563, %v1564
        %v1638 = vadd.f32 %v1637, %v1565
        %v1639 = vadd.f32 %v1638, %v1566
        %1640 = vadd.xlane.f32.xlu0 %v1639
        %v1641 = vpop.xlane.xlu0 %1640
        %v1642 = vadd.f32 %v1567, %v1568
        %v1643 = vadd.f32 %v1642, %v1569
        %v1644 = vadd.f32 %v1643, %v1570
        %1645 = vadd.xlane.f32.xlu0 %v1644
        %v1646 = vpop.xlane.xlu0 %1645
        %v1647 = vadd.f32 %v1571, %v1572
        %v1648 = vadd.f32 %v1647, %v1573
        %v1649 = vadd.f32 %v1648, %v1574
        %1650 = vadd.xlane.f32.xlu0 %v1649
        %v1651 = vpop.xlane.xlu0 %1650
        %v1652 = vadd.f32 %v1575, %v1576
        %v1653 = vadd.f32 %v1652, %v1577
        %v1654 = vadd.f32 %v1653, %v1578
        %1655 = vadd.xlane.f32.xlu0 %v1654
        %v1656 = vpop.xlane.xlu0 %1655
        %v1657 = vadd.f32 %v1579, %v1580
        %v1658 = vadd.f32 %v1657, %v1581
        %v1659 = vadd.f32 %v1658, %v1582
        %1660 = vadd.xlane.f32.xlu0 %v1659
        %v1661 = vpop.xlane.xlu0 %1660
        %v1662 = vadd.f32 %v1583, %v1584
        %v1663 = vadd.f32 %v1662, %v1585
        %v1664 = vadd.f32 %v1663, %v1586
        %1665 = vadd.xlane.f32.xlu0 %v1664
        %v1666 = vpop.xlane.xlu0 %1665
        %v1667 = vsel %vm424, %v1447, %v1591
        %v1668 = vsel %vm424, %v1452, %v1596
        %v1669 = vsel %vm424, %v1457, %v1601
        %v1670 = vsel %vm424, %v1462, %v1606
        %v1671 = vsel %vm424, %v1467, %v1611
        %v1672 = vsel %vm424, %v1472, %v1616
        %v1673 = vsel %vm424, %v1477, %v1621
        %v1674 = vsel %vm424, %v1482, %v1626
        %v1675 = vsel %vm424, %v1487, %v1631
        %v1676 = vsel %vm424, %v1492, %v1636
        %v1677 = vsel %vm424, %v1497, %v1641
        %v1678 = vsel %vm424, %v1502, %v1646
        %v1679 = vsel %vm424, %v1507, %v1651
        %v1680 = vsel %vm424, %v1512, %v1656
        %v1681 = vsel %vm424, %v1517, %v1661
        %v1682 = vsel %vm424, %v1522, %v1666
        %vm1683 = vcmask 15360
        %1684 = vst.msk [vmem:[%s306] sm:$0xff] %vm1683, %v1667
        %1685 = vst.msk [vmem:[%s306 + $0x8] sm:$0xff] %vm1683, %v1668
        %1686 = vst.msk [vmem:[%s306 + $0x10] sm:$0xff] %vm1683, %v1669
        %1687 = vst.msk [vmem:[%s306 + $0x18] sm:$0xff] %vm1683, %v1670
        %1688 = vst.msk [vmem:[%s306 + $0x20] sm:$0xff] %vm1683, %v1671
        %1689 = vst.msk [vmem:[%s306 + $0x28] sm:$0xff] %vm1683, %v1672
        %1690 = vst.msk [vmem:[%s306 + $0x30] sm:$0xff] %vm1683, %v1673
        %1691 = vst.msk [vmem:[%s306 + $0x38] sm:$0xff] %vm1683, %v1674
        %1692 = vst.msk [vmem:[%s306 + $0x40] sm:$0xff] %vm1683, %v1675
        %1693 = vst.msk [vmem:[%s306 + $0x48] sm:$0xff] %vm1683, %v1676
        %1694 = vst.msk [vmem:[%s306 + $0x50] sm:$0xff] %vm1683, %v1677
        %1695 = vst.msk [vmem:[%s306 + $0x58] sm:$0xff] %vm1683, %v1678
        %1696 = vst.msk [vmem:[%s306 + $0x60] sm:$0xff] %vm1683, %v1679
        %1697 = vst.msk [vmem:[%s306 + $0x68] sm:$0xff] %vm1683, %v1680
        %1698 = vst.msk [vmem:[%s306 + $0x70] sm:$0xff] %vm1683, %v1681
        %1699 = vst.msk [vmem:[%s306 + $0x78] sm:$0xff] %vm1683, %v1682
        %v1700 = vpack.c.bf16 %v1256, %v1252
        %v1701 = vpack.c.bf16 %v1258, %v1254
        %v1702 = vpack.c.bf16 %v1369, %v1365
        %v1703 = vpack.c.bf16 %v1371, %v1367
        %v1704 = vpack.c.bf16 %v1266, %v1262
        %v1705 = vpack.c.bf16 %v1268, %v1264
        %v1706 = vpack.c.bf16 %v1379, %v1375
        %v1707 = vpack.c.bf16 %v1381, %v1377
        %v1708 = vpack.c.bf16 %v1276, %v1272
        %v1709 = vpack.c.bf16 %v1278, %v1274
        %v1710 = vpack.c.bf16 %v1389, %v1385
        %v1711 = vpack.c.bf16 %v1391, %v1387
        %v1712 = vpack.c.bf16 %v1286, %v1282
        %v1713 = vpack.c.bf16 %v1288, %v1284
        %v1714 = vpack.c.bf16 %v1399, %v1395
        %v1715 = vpack.c.bf16 %v1401, %v1397
        %v1716 = vpack.c.bf16 %v1296, %v1292
        %v1717 = vpack.c.bf16 %v1298, %v1294
        %v1718 = vpack.c.bf16 %v1409, %v1405
        %v1719 = vpack.c.bf16 %v1411, %v1407
        %v1720 = vpack.c.bf16 %v1306, %v1302
        %v1721 = vpack.c.bf16 %v1308, %v1304
        %v1722 = vpack.c.bf16 %v1419, %v1415
        %v1723 = vpack.c.bf16 %v1421, %v1417
        %v1724 = vpack.c.bf16 %v1316, %v1312
        %v1725 = vpack.c.bf16 %v1318, %v1314
        %v1726 = vpack.c.bf16 %v1429, %v1425
        %v1727 = vpack.c.bf16 %v1431, %v1427
        %v1728 = vpack.c.bf16 %v1326, %v1322
        %v1729 = vpack.c.bf16 %v1328, %v1324
        %v1730 = vpack.c.bf16 %v1439, %v1435
        %v1731 = vpack.c.bf16 %v1441, %v1437
        %v1764 = vunpack.c.l.b16 %v1700
        %v1765 = vunpack.c.l.b16 %v1701
        %v1766 = vunpack.c.l.b16 %v1702
        %v1767 = vunpack.c.l.b16 %v1703
        %v1768 = vunpack.c.h.b16 %v1700
        %v1769 = vunpack.c.h.b16 %v1701
        %v1770 = vunpack.c.h.b16 %v1702
        %v1771 = vunpack.c.h.b16 %v1703
        %v1772 = vunpack.c.l.b16 %v1704
        %v1773 = vunpack.c.l.b16 %v1705
        %v1774 = vunpack.c.l.b16 %v1706
        %v1775 = vunpack.c.l.b16 %v1707
        %v1776 = vunpack.c.h.b16 %v1704
        %v1777 = vunpack.c.h.b16 %v1705
        %v1778 = vunpack.c.h.b16 %v1706
        %v1779 = vunpack.c.h.b16 %v1707
        %v1780 = vunpack.c.l.b16 %v1708
        %v1781 = vunpack.c.l.b16 %v1709
        %v1782 = vunpack.c.l.b16 %v1710
        %v1783 = vunpack.c.l.b16 %v1711
        %v1784 = vunpack.c.h.b16 %v1708
        %v1785 = vunpack.c.h.b16 %v1709
        %v1786 = vunpack.c.h.b16 %v1710
        %v1787 = vunpack.c.h.b16 %v1711
        %v1788 = vunpack.c.l.b16 %v1712
        %v1789 = vunpack.c.l.b16 %v1713
        %v1790 = vunpack.c.l.b16 %v1714
        %v1791 = vunpack.c.l.b16 %v1715
        %v1792 = vunpack.c.h.b16 %v1712
        %v1793 = vunpack.c.h.b16 %v1713
        %v1794 = vunpack.c.h.b16 %v1714
        %v1795 = vunpack.c.h.b16 %v1715
        %v1796 = vunpack.c.l.b16 %v1716
        %v1797 = vunpack.c.l.b16 %v1717
        %v1798 = vunpack.c.l.b16 %v1718
        %v1799 = vunpack.c.l.b16 %v1719
        %v1800 = vunpack.c.h.b16 %v1716
        %v1801 = vunpack.c.h.b16 %v1717
        %v1802 = vunpack.c.h.b16 %v1718
        %v1803 = vunpack.c.h.b16 %v1719
        %v1804 = vunpack.c.l.b16 %v1720
        %v1805 = vunpack.c.l.b16 %v1721
        %v1806 = vunpack.c.l.b16 %v1722
        %v1807 = vunpack.c.l.b16 %v1723
        %v1808 = vunpack.c.h.b16 %v1720
        %v1809 = vunpack.c.h.b16 %v1721
        %v1810 = vunpack.c.h.b16 %v1722
        %v1811 = vunpack.c.h.b16 %v1723
        %v1812 = vunpack.c.l.b16 %v1724
        %v1813 = vunpack.c.l.b16 %v1725
        %v1814 = vunpack.c.l.b16 %v1726
        %v1815 = vunpack.c.l.b16 %v1727
        %v1816 = vunpack.c.h.b16 %v1724
        %v1817 = vunpack.c.h.b16 %v1725
        %v1818 = vunpack.c.h.b16 %v1726
        %v1819 = vunpack.c.h.b16 %v1727
        %v1820 = vunpack.c.l.b16 %v1728
        %v1821 = vunpack.c.l.b16 %v1729
        %v1822 = vunpack.c.l.b16 %v1730
        %v1823 = vunpack.c.l.b16 %v1731
        %v1824 = vunpack.c.h.b16 %v1728
        %v1825 = vunpack.c.h.b16 %v1729
        %v1826 = vunpack.c.h.b16 %v1730
        %v1827 = vunpack.c.h.b16 %v1731
        %v1828 = vpack.c.b16 %v1765, %v1764
        %v1829 = vpack.c.b16 %v1767, %v1766
        %v1830 = vpack.c.b16 %v1769, %v1768
        %v1831 = vpack.c.b16 %v1771, %v1770
        %v1832 = vpack.c.b16 %v1773, %v1772
        %v1833 = vpack.c.b16 %v1775, %v1774
        %v1834 = vpack.c.b16 %v1777, %v1776
        %v1835 = vpack.c.b16 %v1779, %v1778
        %v1836 = vpack.c.b16 %v1781, %v1780
        %v1837 = vpack.c.b16 %v1783, %v1782
        %v1838 = vpack.c.b16 %v1785, %v1784
        %v1839 = vpack.c.b16 %v1787, %v1786
        %v1840 = vpack.c.b16 %v1789, %v1788
        %v1841 = vpack.c.b16 %v1791, %v1790
        %v1842 = vpack.c.b16 %v1793, %v1792
        %v1843 = vpack.c.b16 %v1795, %v1794
        %v1844 = vpack.c.b16 %v1797, %v1796
        %v1845 = vpack.c.b16 %v1799, %v1798
        %v1846 = vpack.c.b16 %v1801, %v1800
        %v1847 = vpack.c.b16 %v1803, %v1802
        %v1848 = vpack.c.b16 %v1805, %v1804
        %v1849 = vpack.c.b16 %v1807, %v1806
        %v1850 = vpack.c.b16 %v1809, %v1808
        %v1851 = vpack.c.b16 %v1811, %v1810
        %v1852 = vpack.c.b16 %v1813, %v1812
        %v1853 = vpack.c.b16 %v1815, %v1814
        %v1854 = vpack.c.b16 %v1817, %v1816
        %v1855 = vpack.c.b16 %v1819, %v1818
        %v1856 = vpack.c.b16 %v1821, %v1820
        %v1857 = vpack.c.b16 %v1823, %v1822
        %v1858 = vpack.c.b16 %v1825, %v1824
        %v1859 = vpack.c.b16 %v1827, %v1826
        %1892 = vst [vmem:[%s301] sm:$0xff] %v1828
        %1893 = vst [vmem:[%s301 + $0x8] sm:$0xff] %v1829
        %1894 = vst [vmem:[%s301 + $0x10] sm:$0xff] %v1830
        %1895 = vst [vmem:[%s301 + $0x18] sm:$0xff] %v1831
        %1896 = vst [vmem:[%s301 + $0x20] sm:$0xff] %v1832
        %1897 = vst [vmem:[%s301 + $0x28] sm:$0xff] %v1833
        %1898 = vst [vmem:[%s301 + $0x30] sm:$0xff] %v1834
        %1899 = vst [vmem:[%s301 + $0x38] sm:$0xff] %v1835
        %1900 = vst [vmem:[%s301 + $0x40] sm:$0xff] %v1836
        %1901 = vst [vmem:[%s301 + $0x48] sm:$0xff] %v1837
        %1902 = vst [vmem:[%s301 + $0x50] sm:$0xff] %v1838
        %1903 = vst [vmem:[%s301 + $0x58] sm:$0xff] %v1839
        %1904 = vst [vmem:[%s301 + $0x60] sm:$0xff] %v1840
        %1905 = vst [vmem:[%s301 + $0x68] sm:$0xff] %v1841
        %1906 = vst [vmem:[%s301 + $0x70] sm:$0xff] %v1842
        %1907 = vst [vmem:[%s301 + $0x78] sm:$0xff] %v1843
        %1908 = vst [vmem:[%s301 + $0x80] sm:$0xff] %v1844
        %1909 = vst [vmem:[%s301 + $0x88] sm:$0xff] %v1845
        %1910 = vst [vmem:[%s301 + $0x90] sm:$0xff] %v1846
        %1911 = vst [vmem:[%s301 + $0x98] sm:$0xff] %v1847
        %1912 = vst [vmem:[%s301 + $0xa0] sm:$0xff] %v1848
        %1913 = vst [vmem:[%s301 + $0xa8] sm:$0xff] %v1849
        %1914 = vst [vmem:[%s301 + $0xb0] sm:$0xff] %v1850
        %1915 = vst [vmem:[%s301 + $0xb8] sm:$0xff] %v1851
        %1916 = vst [vmem:[%s301 + $0xc0] sm:$0xff] %v1852
        %1917 = vst [vmem:[%s301 + $0xc8] sm:$0xff] %v1853
        %1918 = vst [vmem:[%s301 + $0xd0] sm:$0xff] %v1854
        %1919 = vst [vmem:[%s301 + $0xd8] sm:$0xff] %v1855
        %1920 = vst [vmem:[%s301 + $0xe0] sm:$0xff] %v1856
        %1921 = vst [vmem:[%s301 + $0xe8] sm:$0xff] %v1857
        %1922 = vst [vmem:[%s301 + $0xf0] sm:$0xff] %v1858
        %1923 = vst [vmem:[%s301 + $0xf8] sm:$0xff] %v1859
        %p1924 = scmp.lt.s32.totalorder %s20, 1
        %s1925 = scalar_select %p1924, %s20, 1
        %s1926 = smul.addr %s1925, 64
        %s1927 = smul.addr %s1926, 4
        %s1928 = scalar_lea.vmem %s6, %s1927
        %p1929 = scmp.lt.s32.totalorder %s20, 1
        %s1930 = scalar_select %p1929, %s20, 1
        %s1931 = smul.addr %s1930, 16
        %s1932 = smul.addr %s1931, 8
        %s1933 = scalar_lea.vmem %s7, %s1932
        // Predicated region
        $region49: #{decoder_block_forward.5} parent=43 // pred_check
          %p1934 = pneg %p169
        $region50: #{decoder_block_forward.5} parent=43 // pred_check_branch
          %1936 = sbr.rel (%p1934) target = $region52
        $region51: #{decoder_block_forward.5} parent=43 // pred_region
          _
        $region52: #{decoder_block_forward.5} parent=43 // pred_fallthru
          _
        // Predicated region
        $region53: #{decoder_block_forward.5} parent=43 // pred_check
          %p1937 = pneg %p195
        $region54: #{decoder_block_forward.5} parent=43 // pred_check_branch
          %1939 = sbr.rel (%p1937) target = $region56
        $region55: #{decoder_block_forward.5} parent=43 // pred_region
          _
        $region56: #{decoder_block_forward.5} parent=43 // pred_fallthru
          _
      $region44: #{decoder_block_forward.5} parent=5 // pred_fallthru
        _
      %p1940 = scmp.le.s32.totalorder 2, %s15
      // Predicated region
      $region57: #{decoder_block_forward.5} parent=5 // pred_check
        %p1941 = pneg %p1940
      $region58: #{decoder_block_forward.5} parent=5 // pred_check_branch
        %1943 = sbr.rel (%p1941) target = $region60
      $region59: #{decoder_block_forward.5} parent=5 // pred_region
        %s1944 = ssub.s32 %s15, 2
        // Predicated region
        $region61: #{decoder_block_forward.5} parent=59 // pred_check
          %p1945 = pneg %p175
        $region62: #{decoder_block_forward.5} parent=59 // pred_check_branch
          %1947 = sbr.rel (%p1945) target = $region64
        $region63: #{decoder_block_forward.5} parent=59 // pred_region
          %p1948 = scmp.lt.s32.totalorder %s21, 1
          %s1949 = scalar_select %p1948, %s21, 1
          %s1950 = smul.addr %s1949, 64
          %s1951 = smul.addr %s1950, 4
          %s1952 = scalar_lea.vmem %s6, %s1951
        $region64: #{decoder_block_forward.5} parent=59 // pred_fallthru
          _
        // Predicated region
        $region65: #{decoder_block_forward.5} parent=59 // pred_check
          %p1953 = pneg %p201
        $region66: #{decoder_block_forward.5} parent=59 // pred_check_branch
          %1955 = sbr.rel (%p1953) target = $region68
        $region67: #{decoder_block_forward.5} parent=59 // pred_region
          %p1956 = scmp.lt.s32.totalorder %s21, 1
          %s1957 = scalar_select %p1956, %s21, 1
          %s1958 = smul.addr %s1957, 16
          %s1959 = smul.addr %s1958, 8
          %s1960 = scalar_lea.vmem %s7, %s1959
        $region68: #{decoder_block_forward.5} parent=59 // pred_fallthru
          _
      $region60: #{decoder_block_forward.5} parent=5 // pred_fallthru
        _
    $region6: #{decoder_block_forward.5} parent=1 // loop_footer
      %s19 = sadd.s32 1, %s15
    $region7: #{decoder_block_forward.5} parent=1 // loop_footer_branch
      %14 = sbr.rel target = $region3
    $region8: #{decoder_block_forward.5} parent=1 // loop_exit
      _
    %1961 = vsyncpa [#allocation3], 1
    %s1962 = scalar_lea.sflag [#allocation3], 1
    %1963 = vsyncpa %s1962, 1

// kernel: decoder_block_forward.6
$region0: #{decoder_block_forward.6}
  #allocation0 [shape = 'u32[]', space=smem, size = 0x4, offset = 0x4, fixed_abs, tag = 'smem constant byte address 0x4 - core index']
  #allocation1 [shape = 'u32[144,128]{1,0:T(1,128)}', space=vmem, size = 0x12000, scoped, tag = 'internal scratch']
  %s0 = inlined_call_operand.vmem [shape: bf16[2,16,4096], index: 0, kind: input, shape index: {}]
  %s1 = inlined_call_operand.vmem [shape: f32[16,1], index: 1, kind: input, shape index: {}]
  %s2 = inlined_call_operand.vmem [shape: f32[16,1], index: 2, kind: input, shape index: {}]
  %s3 = inlined_call_operand.vmem [shape: bf16[32,16], index: 3, kind: input, shape index: {}]
  %s4 = inlined_call_operand.vmem [shape: f32[32,1], index: 4, kind: input, shape index: {}]
  %s5 = inlined_call_operand.vmem [shape: bf16[2,32,4096], index: 5, kind: output, shape index: {0}]
  %s6 = inlined_call_operand.vmem [shape: f32[2,2,32,2], index: 6, kind: output, shape index: {1}]
  %7 = xla_tuple %s5, %s6
  %s8 = sld [smem:[#allocation0]]
  $region103: #{decoder_block_forward.6} parent=0
    _
  %s10 = ssub.s32 1, %s8
  %s11 = scalar_select 0, %s10, %s8
  $region1: #{decoder_block_forward.6} parent=0
    #allocation2 [shape = 'u8[131072]{0}', space=vmem, size = 0x20000, scoped, tag = 'input window, operand 0']
    #allocation3 [shape = 'u8[262144]{0}', space=vmem, size = 0x40000, scoped, tag = 'output window, operand 0']
    loop: start=0, step=1, limit=6
    $region2: #{decoder_block_forward.6} parent=1 // loop_pre_header
      _
    $region3: #{decoder_block_forward.6} parent=1 // loop_header
      %s13 = sphi 0, %s17
      %p14 = scmp.ge.s32.totalorder %s13, 6
      %s20 = sphi 0, %s32
      %s21 = sphi 0, %s28
      %s22 = sphi 0, %s20
      %s23 = sphi 0, %s21
      %s24 = sphi 0, %s22
      %s25 = sphi 0, %s23
      %s37 = sphi 0, %s39
      %s40 = sphi 0, %s37
      %s41 = sphi 0, %s40
      %s57 = sphi 0, %s41
      %s61 = sphi 0, %s61
      %s63 = sphi 0, %s61
      %s64 = sphi 0, %s63
      %s78 = sphi 0, %s64
      %s82 = sphi 0, %s82
      %s84 = sphi 0, %s82
      %s85 = sphi 0, %s84
      %s99 = sphi 0, %s85
      %s103 = sphi 0, %s103
      %s105 = sphi 0, %s103
      %s106 = sphi 0, %s105
      %s120 = sphi 0, %s106
      %s124 = sphi 0, %s124
      %s126 = sphi 0, %s124
      %s127 = sphi 0, %s126
      %s141 = sphi 0, %s127
      %s149 = sphi 0, %s151
      %s152 = sphi 0, %s149
      %s153 = sphi 0, %s152
      %s169 = sphi 0, %s153
      %s177 = sphi 0, %s179
      %s180 = sphi 0, %s177
      %s181 = sphi 0, %s180
      %s197 = sphi 0, %s181
    $region4: #{decoder_block_forward.6} parent=1 // loop_header_branch
      %16 = sbr.rel (%p14) target = $region8
    $region5: #{decoder_block_forward.6} parent=1 // loop_body
      %s18 = ssub.s32 %s13, 1
      %s19 = ssub.s32 %s13, 2
      %s26 = sadd.s32 1, %s21
      %p27 = scmp.ge.s32.totalorder %s26, 2
      %s28 = scalar_select %p27, 0, %s26
      %s29 = sadd.s32 1, %s20
      %s30 = scalar_select %p27, %s29, %s20
      %p31 = scmp.ge.s32.totalorder %s30, 2
      %s32 = scalar_select %p31, 0, %s30
      %s33 = ssub.s32 %s20, %s32
      %s34 = ssub.s32 %s21, %s28
      %s35 = sor.u32 %s33, %s34
      %p36 = scmp.eq.s32.totalorder %s35, 0
      %s38 = sadd.s32 %s37, 1
      %s39 = scalar_select %p36, %s37, %s38
      %p42 = pneg %p36
      %p43 = scmp.eq.s32.totalorder %s13, 3
      %p44 = por %p42, %p43
      %p45 = scmp.ne.s32.totalorder %s37, %s40
      %p46 = scmp.eq.s32.totalorder %s13, 0
      %p47 = por %p45, %p46
      %p48 = scmp.ne.s32.totalorder %s37, %s40
      %p49 = scmp.eq.s32.totalorder %s18, 3
      %p50 = por %p48, %p49
      %p51 = scmp.ne.s32.totalorder %s40, %s41
      %p52 = scmp.eq.s32.totalorder %s18, 0
      %p53 = por %p51, %p52
      %p54 = scmp.ne.s32.totalorder %s40, %s41
      %p55 = scmp.eq.s32.totalorder %s19, 3
      %p56 = por %p54, %p55
      %p58 = scmp.ne.s32.totalorder %s41, %s57
      %p59 = scmp.eq.s32.totalorder %s19, 0
      %p60 = por %p58, %p59
      %s62 = sadd.s32 %s61, 1
      %p65 = scmp.eq.s32.totalorder %s13, 3
      %p66 = scmp.ne.s32.totalorder %s61, %s63
      %p67 = scmp.eq.s32.totalorder %s13, 0
      %p68 = por %p66, %p67
      %p69 = scmp.ne.s32.totalorder %s61, %s63
      %p70 = scmp.eq.s32.totalorder %s18, 3
      %p71 = por %p69, %p70
      %p72 = scmp.ne.s32.totalorder %s63, %s64
      %p73 = scmp.eq.s32.totalorder %s18, 0
      %p74 = por %p72, %p73
      %p75 = scmp.ne.s32.totalorder %s63, %s64
      %p76 = scmp.eq.s32.totalorder %s19, 3
      %p77 = por %p75, %p76
      %p79 = scmp.ne.s32.totalorder %s64, %s78
      %p80 = scmp.eq.s32.totalorder %s19, 0
      %p81 = por %p79, %p80
      %s83 = sadd.s32 %s82, 1
      %p86 = scmp.eq.s32.totalorder %s13, 3
      %p87 = scmp.ne.s32.totalorder %s82, %s84
      %p88 = scmp.eq.s32.totalorder %s13, 0
      %p89 = por %p87, %p88
      %p90 = scmp.ne.s32.totalorder %s82, %s84
      %p91 = scmp.eq.s32.totalorder %s18, 3
      %p92 = por %p90, %p91
      %p93 = scmp.ne.s32.totalorder %s84, %s85
      %p94 = scmp.eq.s32.totalorder %s18, 0
      %p95 = por %p93, %p94
      %p96 = scmp.ne.s32.totalorder %s84, %s85
      %p97 = scmp.eq.s32.totalorder %s19, 3
      %p98 = por %p96, %p97
      %p100 = scmp.ne.s32.totalorder %s85, %s99
      %p101 = scmp.eq.s32.totalorder %s19, 0
      %p102 = por %p100, %p101
      %s104 = sadd.s32 %s103, 1
      %p107 = scmp.eq.s32.totalorder %s13, 3
      %p108 = scmp.ne.s32.totalorder %s103, %s105
      %p109 = scmp.eq.s32.totalorder %s13, 0
      %p110 = por %p108, %p109
      %p111 = scmp.ne.s32.totalorder %s103, %s105
      %p112 = scmp.eq.s32.totalorder %s18, 3
      %p113 = por %p111, %p112
      %p114 = scmp.ne.s32.totalorder %s105, %s106
      %p115 = scmp.eq.s32.totalorder %s18, 0
      %p116 = por %p114, %p115
      %p117 = scmp.ne.s32.totalorder %s105, %s106
      %p118 = scmp.eq.s32.totalorder %s19, 3
      %p119 = por %p117, %p118
      %p121 = scmp.ne.s32.totalorder %s106, %s120
      %p122 = scmp.eq.s32.totalorder %s19, 0
      %p123 = por %p121, %p122
      %s125 = sadd.s32 %s124, 1
      %p128 = scmp.eq.s32.totalorder %s13, 3
      %p129 = scmp.ne.s32.totalorder %s124, %s126
      %p130 = scmp.eq.s32.totalorder %s13, 0
      %p131 = por %p129, %p130
      %p132 = scmp.ne.s32.totalorder %s124, %s126
      %p133 = scmp.eq.s32.totalorder %s18, 3
      %p134 = por %p132, %p133
      %p135 = scmp.ne.s32.totalorder %s126, %s127
      %p136 = scmp.eq.s32.totalorder %s18, 0
      %p137 = por %p135, %p136
      %p138 = scmp.ne.s32.totalorder %s126, %s127
      %p139 = scmp.eq.s32.totalorder %s19, 3
      %p140 = por %p138, %p139
      %p142 = scmp.ne.s32.totalorder %s127, %s141
      %p143 = scmp.eq.s32.totalorder %s19, 0
      %p144 = por %p142, %p143
      %s145 = ssub.s32 %s20, %s32
      %s146 = ssub.s32 %s21, %s28
      %s147 = sor.u32 %s145, %s146
      %p148 = scmp.eq.s32.totalorder %s147, 0
      %s150 = sadd.s32 %s149, 1
      %s151 = scalar_select %p148, %s149, %s150
      %p154 = pneg %p148
      %p155 = scmp.eq.s32.totalorder %s13, 3
      %p156 = por %p154, %p155
      %p157 = scmp.ne.s32.totalorder %s149, %s152
      %p158 = scmp.eq.s32.totalorder %s13, 0
      %p159 = por %p157, %p158
      %p160 = scmp.ne.s32.totalorder %s149, %s152
      %p161 = scmp.eq.s32.totalorder %s18, 3
      %p162 = por %p160, %p161
      %p163 = scmp.ne.s32.totalorder %s152, %s153
      %p164 = scmp.eq.s32.totalorder %s18, 0
      %p165 = por %p163, %p164
      %p166 = scmp.ne.s32.totalorder %s152, %s153
      %p167 = scmp.eq.s32.totalorder %s19, 3
      %p168 = por %p166, %p167
      %p170 = scmp.ne.s32.totalorder %s153, %s169
      %p171 = scmp.eq.s32.totalorder %s19, 0
      %p172 = por %p170, %p171
      %s173 = ssub.s32 %s20, %s32
      %s174 = ssub.s32 %s21, %s28
      %s175 = sor.u32 %s173, %s174
      %p176 = scmp.eq.s32.totalorder %s175, 0
      %s178 = sadd.s32 %s177, 1
      %s179 = scalar_select %p176, %s177, %s178
      %p182 = pneg %p176
      %p183 = scmp.eq.s32.totalorder %s13, 3
      %p184 = por %p182, %p183
      %p185 = scmp.ne.s32.totalorder %s177, %s180
      %p186 = scmp.eq.s32.totalorder %s13, 0
      %p187 = por %p185, %p186
      %p188 = scmp.ne.s32.totalorder %s177, %s180
      %p189 = scmp.eq.s32.totalorder %s18, 3
      %p190 = por %p188, %p189
      %p191 = scmp.ne.s32.totalorder %s180, %s181
      %p192 = scmp.eq.s32.totalorder %s18, 0
      %p193 = por %p191, %p192
      %p194 = scmp.ne.s32.totalorder %s180, %s181
      %p195 = scmp.eq.s32.totalorder %s19, 3
      %p196 = por %p194, %p195
      %p198 = scmp.ne.s32.totalorder %s181, %s197
      %p199 = scmp.eq.s32.totalorder %s19, 0
      %p200 = por %p198, %p199
      %p201 = scmp.le.s32.totalorder 1, %s13
      %p202 = scmp.lt.s32.totalorder %s13, 5
      %p203 = pnand %p201, %p202
      %p204 = pneg %p203
      // Predicated region
      $region9: #{decoder_block_forward.6} parent=5 // pred_check
        _
      $region10: #{decoder_block_forward.6} parent=5 // pred_check_branch
        %206 = sbr.rel (%p203) target = $region12
      $region11: #{decoder_block_forward.6} parent=5 // pred_region
        %s207 = ssub.s32 %s13, 1
        // Predicated region
        $region13: #{decoder_block_forward.6} parent=11 // pred_check
          %p208 = pneg %p74
        $region14: #{decoder_block_forward.6} parent=11 // pred_check_branch
          %210 = sbr.rel (%p208) target = $region16
        $region15: #{decoder_block_forward.6} parent=11 // pred_region
          _
        $region16: #{decoder_block_forward.6} parent=11 // pred_fallthru
          _
        // Predicated region
        $region17: #{decoder_block_forward.6} parent=11 // pred_check
          %p211 = pneg %p95
        $region18: #{decoder_block_forward.6} parent=11 // pred_check_branch
          %213 = sbr.rel (%p211) target = $region20
        $region19: #{decoder_block_forward.6} parent=11 // pred_region
          _
        $region20: #{decoder_block_forward.6} parent=11 // pred_fallthru
          _
        // Predicated region
        $region21: #{decoder_block_forward.6} parent=11 // pred_check
          %p214 = pneg %p116
        $region22: #{decoder_block_forward.6} parent=11 // pred_check_branch
          %216 = sbr.rel (%p214) target = $region24
        $region23: #{decoder_block_forward.6} parent=11 // pred_region
          _
        $region24: #{decoder_block_forward.6} parent=11 // pred_fallthru
          _
        // Predicated region
        $region25: #{decoder_block_forward.6} parent=11 // pred_check
          %p217 = pneg %p137
        $region26: #{decoder_block_forward.6} parent=11 // pred_check_branch
          %219 = sbr.rel (%p217) target = $region28
        $region27: #{decoder_block_forward.6} parent=11 // pred_region
          _
        $region28: #{decoder_block_forward.6} parent=11 // pred_fallthru
          _
      $region12: #{decoder_block_forward.6} parent=5 // pred_fallthru
        _
      %p220 = scmp.lt.s32.totalorder %s13, 4
      // Predicated region
      $region29: #{decoder_block_forward.6} parent=5 // pred_check
        %p221 = pneg %p220
      $region30: #{decoder_block_forward.6} parent=5 // pred_check_branch
        %223 = sbr.rel (%p221) target = $region32
      $region31: #{decoder_block_forward.6} parent=5 // pred_region
        // Predicated region
        $region33: #{decoder_block_forward.6} parent=31 // pred_check
          %p224 = pneg %p47
        $region34: #{decoder_block_forward.6} parent=31 // pred_check_branch
          %226 = sbr.rel (%p224) target = $region36
        $region35: #{decoder_block_forward.6} parent=31 // pred_region
          %s227 = sand.u32 %s37, 1
          %s228 = sand.u32 %s37, 1
          %s229 = smul.addr %s228, 128
          %s230 = scalar_lea.vmem [#allocation2], %s229
          %s231 = smul.u32 16, %s21
          %s232 = smul.addr %s20, 64
          %s233 = sadd.s32 %s231, %s232
          %s234 = smul.addr %s233, 4
          %s235 = scalar_lea.vmem %s0, %s234
          // Predicated region
          $region37: #{decoder_block_forward.6} parent=35 // pred_check
            _
          $region38: #{decoder_block_forward.6} parent=35 // pred_check_branch
            %237 = sbr.rel (0) target = $region40
          $region39: #{decoder_block_forward.6} parent=35 // pred_region
            // Predicated region
            $region41: #{decoder_block_forward.6} parent=39 // pred_check
              _
            $region42: #{decoder_block_forward.6} parent=39 // pred_check_branch
              %239 = sbr.rel (0) target = $region44
            $region43: #{decoder_block_forward.6} parent=39 // pred_region
              loop: start=0, step=1, limit=1
              $region45: #{decoder_block_forward.6} parent=43 // loop_pre_header
                _
              $region46: #{decoder_block_forward.6} parent=43 // loop_header
                %s241 = sphi 0, %s245
                %p242 = scmp.ge.s32.totalorder %s241, 1
                %s246 = sphi %s235, %s235
                %s247 = sphi %s230, %s230
              $region47: #{decoder_block_forward.6} parent=43 // loop_header_branch
                %244 = sbr.rel (%p242) target = $region51
              $region48: #{decoder_block_forward.6} parent=43 // loop_body
                %v248 = vld [vmem:[%s246] sm:$0xff]
                %249 = vst [vmem:[%s247] sm:$0xff] %v248
                %v250 = vld [vmem:[%s246 + $0x8] sm:$0xff]
                %251 = vst [vmem:[%s247 + $0x8] sm:$0xff] %v250
                %v252 = vld [vmem:[%s246 + $0x10] sm:$0xff]
                %253 = vst [vmem:[%s247 + $0x10] sm:$0xff] %v252
                %v254 = vld [vmem:[%s246 + $0x18] sm:$0xff]
                %255 = vst [vmem:[%s247 + $0x18] sm:$0xff] %v254
                %v256 = vld [vmem:[%s246 + $0x20] sm:$0xff]
                %257 = vst [vmem:[%s247 + $0x20] sm:$0xff] %v256
                %v258 = vld [vmem:[%s246 + $0x28] sm:$0xff]
                %259 = vst [vmem:[%s247 + $0x28] sm:$0xff] %v258
                %v260 = vld [vmem:[%s246 + $0x30] sm:$0xff]
                %261 = vst [vmem:[%s247 + $0x30] sm:$0xff] %v260
                %v262 = vld [vmem:[%s246 + $0x38] sm:$0xff]
                %263 = vst [vmem:[%s247 + $0x38] sm:$0xff] %v262
                %v264 = vld [vmem:[%s246 + $0x80] sm:$0xff]
                %265 = vst [vmem:[%s247 + $0x40] sm:$0xff] %v264
                %v266 = vld [vmem:[%s246 + $0x88] sm:$0xff]
                %267 = vst [vmem:[%s247 + $0x48] sm:$0xff] %v266
                %v268 = vld [vmem:[%s246 + $0x90] sm:$0xff]
                %269 = vst [vmem:[%s247 + $0x50] sm:$0xff] %v268
                %v270 = vld [vmem:[%s246 + $0x98] sm:$0xff]
                %271 = vst [vmem:[%s247 + $0x58] sm:$0xff] %v270
                %v272 = vld [vmem:[%s246 + $0xa0] sm:$0xff]
                %273 = vst [vmem:[%s247 + $0x60] sm:$0xff] %v272
                %v274 = vld [vmem:[%s246 + $0xa8] sm:$0xff]
                %275 = vst [vmem:[%s247 + $0x68] sm:$0xff] %v274
                %v276 = vld [vmem:[%s246 + $0xb0] sm:$0xff]
                %277 = vst [vmem:[%s247 + $0x70] sm:$0xff] %v276
                %v278 = vld [vmem:[%s246 + $0xb8] sm:$0xff]
                %279 = vst [vmem:[%s247 + $0x78] sm:$0xff] %v278
              $region49: #{decoder_block_forward.6} parent=43 // loop_footer
                %s245 = sadd.s32 1, %s241
              $region50: #{decoder_block_forward.6} parent=43 // loop_footer_branch
                %240 = sbr.rel target = $region46
              $region51: #{decoder_block_forward.6} parent=43 // loop_exit
                _
            $region44: #{decoder_block_forward.6} parent=39 // pred_fallthru
              _
            // Predicated region
            $region52: #{decoder_block_forward.6} parent=39 // pred_check
              _
            $region53: #{decoder_block_forward.6} parent=39 // pred_check_branch
              %281 = sbr.rel target = $region55
            $region54: #{decoder_block_forward.6} parent=39 // pred_region
              _
            $region55: #{decoder_block_forward.6} parent=39 // pred_fallthru
              _
          $region40: #{decoder_block_forward.6} parent=35 // pred_fallthru
            _
          %282 = vnop
        $region36: #{decoder_block_forward.6} parent=31 // pred_fallthru
          _
      $region32: #{decoder_block_forward.6} parent=5 // pred_fallthru
        _
      %p283 = scmp.le.s32.totalorder 1, %s13
      %p284 = scmp.lt.s32.totalorder %s13, 5
      %p285 = pnand %p283, %p284
      %p286 = pneg %p285
      // Predicated region
      $region56: #{decoder_block_forward.6} parent=5 // pred_check
        _
      $region57: #{decoder_block_forward.6} parent=5 // pred_check_branch
        %288 = sbr.rel (%p285) target = $region59
      $region58: #{decoder_block_forward.6} parent=5 // pred_region
        %s289 = ssub.s32 %s13, 1
        %s290 = sand.u32 %s40, 1
        %s291 = sand.u32 %s40, 1
        %s292 = smul.addr %s291, 128
        %s293 = scalar_lea.vmem [#allocation2], %s292
        // Predicated region
        $region60: #{decoder_block_forward.6} parent=58 // pred_check
          %p294 = pneg %p53
        $region61: #{decoder_block_forward.6} parent=58 // pred_check_branch
          %296 = sbr.rel (%p294) target = $region63
        $region62: #{decoder_block_forward.6} parent=58 // pred_region
          _
        $region63: #{decoder_block_forward.6} parent=58 // pred_fallthru
          _
        %s297 = sand.u32 %s40, 1
        %s298 = sand.u32 %s40, 1
        %s299 = smul.addr %s298, 128
        %s300 = scalar_lea.vmem [#allocation2], %s299
        %p301 = pneg %p53
        %p302 = pneg %p50
        %p303 = pneg %p74
        %p304 = pneg %p71
        %p305 = pneg %p95
        %p306 = pneg %p92
        %p307 = pneg %p116
        %p308 = pneg %p113
        %p309 = pneg %p137
        %p310 = pneg %p134
        %p311 = pneg %p165
        %p312 = pneg %p162
        %s313 = sand.u32 %s152, 1
        %s314 = sand.u32 %s152, 1
        %s315 = smul.addr %s314, 256
        %s316 = scalar_lea.vmem [#allocation3], %s315
        %p317 = pneg %p193
        %p318 = pneg %p190
        %p319 = scmp.lt.s32.totalorder %s22, 1
        %s320 = scalar_select %p319, %s22, 1
        %p321 = scmp.lt.s32.totalorder %s23, 1
        %s322 = scalar_select %p321, %s23, 1
        %s323 = smul.addr %s322, 4
        %s324 = smul.addr %s320, 8
        %s325 = sadd.s32 %s323, %s324
        %s326 = smul.addr %s325, 8
        %s327 = scalar_lea.vmem %s6, %s326
        %s328 = smul.u32 16, %s23
        %s329 = smul.u32 16, %s23
        %p330 = scmp.lt.s32.totalorder %s22, 1
        %s331 = scalar_select %p330, %s22, 1
        %p332 = scmp.lt.s32.totalorder %s23, 1
        %s333 = scalar_select %p332, %s23, 1
        %s334 = smul.addr %s333, 4
        %s335 = smul.addr %s331, 8
        %s336 = sadd.s32 %s334, %s335
        %s337 = smul.addr %s336, 8
        %s338 = scalar_lea.vmem %s6, %s337
        %v340 = vld [vmem:[%s293] sm:$0xff]
        %v341 = vld [vmem:[%s293 + $0x8] sm:$0xff]
        %v342 = vld [vmem:[%s293 + $0x10] sm:$0xff]
        %v343 = vld [vmem:[%s293 + $0x18] sm:$0xff]
        %v344 = vld [vmem:[%s293 + $0x20] sm:$0xff]
        %v345 = vld [vmem:[%s293 + $0x28] sm:$0xff]
        %v346 = vld [vmem:[%s293 + $0x30] sm:$0xff]
        %v347 = vld [vmem:[%s293 + $0x38] sm:$0xff]
        %v348 = vld [vmem:[%s293 + $0x40] sm:$0xff]
        %v349 = vld [vmem:[%s293 + $0x48] sm:$0xff]
        %v350 = vld [vmem:[%s293 + $0x50] sm:$0xff]
        %v351 = vld [vmem:[%s293 + $0x58] sm:$0xff]
        %v352 = vld [vmem:[%s293 + $0x60] sm:$0xff]
        %v353 = vld [vmem:[%s293 + $0x68] sm:$0xff]
        %v354 = vld [vmem:[%s293 + $0x70] sm:$0xff]
        %v355 = vld [vmem:[%s293 + $0x78] sm:$0xff]
        %v356 = vunpack.c.l.bf16 %v340
        %v357 = vunpack.c.h.bf16 %v340
        %v358 = vunpack.c.l.bf16 %v341
        %v359 = vunpack.c.h.bf16 %v341
        %v360 = vunpack.c.l.bf16 %v342
        %v361 = vunpack.c.h.bf16 %v342
        %v362 = vunpack.c.l.bf16 %v343
        %v363 = vunpack.c.h.bf16 %v343
        %v364 = vunpack.c.l.bf16 %v344
        %v365 = vunpack.c.h.bf16 %v344
        %v366 = vunpack.c.l.bf16 %v345
        %v367 = vunpack.c.h.bf16 %v345
        %v368 = vunpack.c.l.bf16 %v346
        %v369 = vunpack.c.h.bf16 %v346
        %v370 = vunpack.c.l.bf16 %v347
        %v371 = vunpack.c.h.bf16 %v347
        %v372 = vunpack.c.l.bf16 %v348
        %v373 = vunpack.c.h.bf16 %v348
        %v374 = vunpack.c.l.bf16 %v349
        %v375 = vunpack.c.h.bf16 %v349
        %v376 = vunpack.c.l.bf16 %v350
        %v377 = vunpack.c.h.bf16 %v350
        %v378 = vunpack.c.l.bf16 %v351
        %v379 = vunpack.c.h.bf16 %v351
        %v380 = vunpack.c.l.bf16 %v352
        %v381 = vunpack.c.h.bf16 %v352
        %v382 = vunpack.c.l.bf16 %v353
        %v383 = vunpack.c.h.bf16 %v353
        %v384 = vunpack.c.l.bf16 %v354
        %v385 = vunpack.c.h.bf16 %v354
        %v386 = vunpack.c.l.bf16 %v355
        %v387 = vunpack.c.h.bf16 %v355
        %v388 = vld [vmem:[%s1] sm:$0xff]
        %v389 = vld [vmem:[%s1 + $0x8] sm:$0xff]
        %391 = vset.pattern.permute.xlu0 0
        %392 = vperm.xlu0 %391, %v388
        %v393 = vpop.permute.xlu0 %392
        %396 = vset.pattern.permute.xlu0 0
        %397 = vperm.xlu0 %396, %v389
        %v398 = vpop.permute.xlu0 %397
        %v400 = vmul.f32 %v356, %v393
        %v401 = vmul.f32 %v357, %v393
        %v402 = vmul.f32 %v358, %v393
        %v403 = vmul.f32 %v359, %v393
        %v404 = vmul.f32 %v360, %v393
        %v405 = vmul.f32 %v361, %v393
        %v406 = vmul.f32 %v362, %v393
        %v407 = vmul.f32 %v363, %v393
        %v408 = vmul.f32 %v364, %v393
        %v409 = vmul.f32 %v365, %v393
        %v410 = vmul.f32 %v366, %v393
        %v411 = vmul.f32 %v367, %v393
        %v412 = vmul.f32 %v368, %v393
        %v413 = vmul.f32 %v369, %v393
        %v414 = vmul.f32 %v370, %v393
        %v415 = vmul.f32 %v371, %v393
        %v416 = vmul.f32 %v372, %v398
        %v417 = vmul.f32 %v373, %v398
        %v418 = vmul.f32 %v374, %v398
        %v419 = vmul.f32 %v375, %v398
        %v420 = vmul.f32 %v376, %v398
        %v421 = vmul.f32 %v377, %v398
        %v422 = vmul.f32 %v378, %v398
        %v423 = vmul.f32 %v379, %v398
        %v424 = vmul.f32 %v380, %v398
        %v425 = vmul.f32 %v381, %v398
        %v426 = vmul.f32 %v382, %v398
        %v427 = vmul.f32 %v383, %v398
        %v428 = vmul.f32 %v384, %v398
        %v429 = vmul.f32 %v385, %v398
        %v430 = vmul.f32 %v386, %v398
        %v431 = vmul.f32 %v387, %v398
        %v432 = vld [vmem:[%s2] sm:$0xff]
        %v433 = vld [vmem:[%s2 + $0x8] sm:$0xff]
        %435 = vset.pattern.permute.xlu0 0
        %436 = vperm.xlu0 %435, %v432
        %v437 = vpop.permute.xlu0 %436
        %440 = vset.pattern.permute.xlu0 0
        %441 = vperm.xlu0 %440, %v433
        %v442 = vpop.permute.xlu0 %441
        %v444 = vadd.f32 %v400, %v437
        %v445 = vadd.f32 %v401, %v437
        %v446 = vadd.f32 %v402, %v437
        %v447 = vadd.f32 %v403, %v437
        %v448 = vadd.f32 %v404, %v437
        %v449 = vadd.f32 %v405, %v437
        %v450 = vadd.f32 %v406, %v437
        %v451 = vadd.f32 %v407, %v437
        %v452 = vadd.f32 %v408, %v437
        %v453 = vadd.f32 %v409, %v437
        %v454 = vadd.f32 %v410, %v437
        %v455 = vadd.f32 %v411, %v437
        %v456 = vadd.f32 %v412, %v437
        %v457 = vadd.f32 %v413, %v437
        %v458 = vadd.f32 %v414, %v437
        %v459 = vadd.f32 %v415, %v437
        %v460 = vadd.f32 %v416, %v442
        %v461 = vadd.f32 %v417, %v442
        %v462 = vadd.f32 %v418, %v442
        %v463 = vadd.f32 %v419, %v442
        %v464 = vadd.f32 %v420, %v442
        %v465 = vadd.f32 %v421, %v442
        %v466 = vadd.f32 %v422, %v442
        %v467 = vadd.f32 %v423, %v442
        %v468 = vadd.f32 %v424, %v442
        %v469 = vadd.f32 %v425, %v442
        %v470 = vadd.f32 %v426, %v442
        %v471 = vadd.f32 %v427, %v442
        %v472 = vadd.f32 %v428, %v442
        %v473 = vadd.f32 %v429, %v442
        %v474 = vadd.f32 %v430, %v442
        %v475 = vadd.f32 %v431, %v442
        %v476 = vmax.f32 %v444, 0.0
        %v477 = vmax.f32 %v445, 0.0
        %v478 = vmax.f32 %v446, 0.0
        %v479 = vmax.f32 %v447, 0.0
        %v480 = vmax.f32 %v448, 0.0
        %v481 = vmax.f32 %v449, 0.0
        %v482 = vmax.f32 %v450, 0.0
        %v483 = vmax.f32 %v451, 0.0
        %v484 = vmax.f32 %v452, 0.0
        %v485 = vmax.f32 %v453, 0.0
        %v486 = vmax.f32 %v454, 0.0
        %v487 = vmax.f32 %v455, 0.0
        %v488 = vmax.f32 %v456, 0.0
        %v489 = vmax.f32 %v457, 0.0
        %v490 = vmax.f32 %v458, 0.0
        %v491 = vmax.f32 %v459, 0.0
        %v492 = vmax.f32 %v460, 0.0
        %v493 = vmax.f32 %v461, 0.0
        %v494 = vmax.f32 %v462, 0.0
        %v495 = vmax.f32 %v463, 0.0
        %v496 = vmax.f32 %v464, 0.0
        %v497 = vmax.f32 %v465, 0.0
        %v498 = vmax.f32 %v466, 0.0
        %v499 = vmax.f32 %v467, 0.0
        %v500 = vmax.f32 %v468, 0.0
        %v501 = vmax.f32 %v469, 0.0
        %v502 = vmax.f32 %v470, 0.0
        %v503 = vmax.f32 %v471, 0.0
        %v504 = vmax.f32 %v472, 0.0
        %v505 = vmax.f32 %v473, 0.0
        %v506 = vmax.f32 %v474, 0.0
        %v507 = vmax.f32 %v475, 0.0
        %v508 = vld [vmem:[%s3] sm:$0xf]
        %v509 = vld [vmem:[%s3 + $0x4] sm:$0xf]
        %v510 = vld [vmem:[%s3 + $0x8] sm:$0xf]
        %v511 = vld [vmem:[%s3 + $0xc] sm:$0xf]
        %v512 = vpack.c.bf16 %v492, %v476
        %v513 = vpack.c.bf16 %v493, %v477
        %v514 = vpack.c.bf16 %v494, %v478
        %v515 = vpack.c.bf16 %v495, %v479
        %v516 = vpack.c.bf16 %v496, %v480
        %v517 = vpack.c.bf16 %v497, %v481
        %v518 = vpack.c.bf16 %v498, %v482
        %v519 = vpack.c.bf16 %v499, %v483
        %v520 = vpack.c.bf16 %v500, %v484
        %v521 = vpack.c.bf16 %v501, %v485
        %v522 = vpack.c.bf16 %v502, %v486
        %v523 = vpack.c.bf16 %v503, %v487
        %v524 = vpack.c.bf16 %v504, %v488
        %v525 = vpack.c.bf16 %v505, %v489
        %v526 = vpack.c.bf16 %v506, %v490
        %v527 = vpack.c.bf16 %v507, %v491
        %v528 = vld [vmem:[%s4] sm:$0xff]
        %v529 = vld [vmem:[%s4 + $0x8] sm:$0xff]
        %v530 = vld [vmem:[%s4 + $0x10] sm:$0xff]
        %v531 = vld [vmem:[%s4 + $0x18] sm:$0xff]
        %533 = vset.pattern.permute.xlu0 0
        %534 = vperm.xlu0 %533, %v528
        %v535 = vpop.permute.xlu0 %534
        %538 = vset.pattern.permute.xlu0 0
        %539 = vperm.xlu0 %538, %v529
        %v540 = vpop.permute.xlu0 %539
        %543 = vset.pattern.permute.xlu0 0
        %544 = vperm.xlu0 %543, %v530
        %v545 = vpop.permute.xlu0 %544
        %548 = vset.pattern.permute.xlu0 0
        %549 = vperm.xlu0 %548, %v531
        %v550 = vpop.permute.xlu0 %549
        %v556 = vunpack.c.l.b16 %v508
        %v557 = vunpack.c.l.b16 %v509
        %v558 = vunpack.c.l.b16 %v510
        %v559 = vunpack.c.l.b16 %v511
        %v560 = vpack.c.b16 %v557, %v556
        %v561 = vpack.c.b16 %v559, %v558
        %vm562 = vcmask 130048
        %v564 = vsel %vm562, %v560, 0
        %v567 = vsel %vm562, %v561, 0
        %569 = vmatprep.subr.bf16.mxu0 %v513
        %570 = vmatpush1.bf16.msra.mxu0 %v512
        %571 = vmatprep.subr.bf16.mxu0 0
        %572 = vmatpush1.bf16.msra.mxu0 0
        %573 = vmatprep.subr.bf16.mxu0 0
        %574 = vmatpush1.bf16.msra.mxu0 0
        %575 = vmatprep.subr.bf16.mxu0 0
        %576 = vmatpush1.bf16.msra.mxu0 0
        %577 = vmatprep.subr.bf16.mxu0 0
        %578 = vmatpush1.bf16.msra.mxu0 0
        %579 = vmatprep.subr.bf16.mxu0 0
        %580 = vmatpush1.bf16.msra.mxu0 0
        %581 = vmatprep.subr.bf16.mxu0 0
        %582 = vmatpush1.bf16.msra.mxu0 0
        %583 = vmatprep.subr.bf16.mxu0 0
        %584 = vmatpush1.bf16.msra.mxu0 0
        %585 = vmatprep.subr.bf16.mxu0 0
        %586 = vmatpush1.bf16.msra.mxu0 0
        %587 = vmatprep.subr.bf16.mxu0 0
        %588 = vmatpush1.bf16.msra.mxu0 0
        %589 = vmatprep.subr.bf16.mxu0 0
        %590 = vmatpush1.bf16.msra.mxu0 0
        %591 = vmatprep.subr.bf16.mxu0 0
        %592 = vmatpush1.bf16.msra.mxu0 0
        %593 = vmatprep.subr.bf16.mxu0 0
        %594 = vmatpush1.bf16.msra.mxu0 0
        %595 = vmatprep.subr.bf16.mxu0 0
        %596 = vmatpush1.bf16.msra.mxu0 0
        %597 = vmatprep.subr.bf16.mxu0 0
        %598 = vmatpush1.bf16.msra.mxu0 0
        %599 = vmatprep.subr.bf16.mxu0 0
        %600 = vmatpush1.bf16.msra.mxu0 0
        %601 = vmatprep.mubr.bf16.mxu0 0
        %602 = vmatmul.mubr.bf16.gmra.mrb[0].mxu0 %v564
        %v603 = vpop.f32.mrb[0].mxu0
        %v604 = vadd.f32 %v535, %v603
        %v605 = vpop.f32.mrb[0].mxu0
        %v606 = vadd.f32 %v535, %v605
        %v607 = vpop.f32.mrb[0].mxu0
        %v608 = vadd.f32 %v540, %v607
        %v609 = vpop.f32.mrb[0].mxu0
        %v610 = vadd.f32 %v540, %v609
        %611 = vmatprep.mubr.bf16.mxu0 0
        %612 = vmatmul.mubr.bf16.gmra.mrb[0].mxu0 %v567
        %v613 = vpop.f32.mrb[0].mxu0
        %v614 = vadd.f32 %v545, %v613
        %v615 = vpop.f32.mrb[0].mxu0
        %v616 = vadd.f32 %v545, %v615
        %v617 = vpop.f32.mrb[0].mxu0
        %v618 = vadd.f32 %v550, %v617
        %v619 = vpop.f32.mrb[0].mxu0
        %v620 = vadd.f32 %v550, %v619
        %621 = vdwg.mxu0
        %622 = vmatprep.subr.bf16.mxu0 %v515
        %623 = vmatpush1.bf16.msra.mxu0 %v514
        %624 = vmatprep.subr.bf16.mxu0 0
        %625 = vmatpush1.bf16.msra.mxu0 0
        %626 = vmatprep.subr.bf16.mxu0 0
        %627 = vmatpush1.bf16.msra.mxu0 0
        %628 = vmatprep.subr.bf16.mxu0 0
        %629 = vmatpush1.bf16.msra.mxu0 0
        %630 = vmatprep.subr.bf16.mxu0 0
        %631 = vmatpush1.bf16.msra.mxu0 0
        %632 = vmatprep.subr.bf16.mxu0 0
        %633 = vmatpush1.bf16.msra.mxu0 0
        %634 = vmatprep.subr.bf16.mxu0 0
        %635 = vmatpush1.bf16.msra.mxu0 0
        %636 = vmatprep.subr.bf16.mxu0 0
        %637 = vmatpush1.bf16.msra.mxu0 0
        %638 = vmatprep.subr.bf16.mxu0 0
        %639 = vmatpush1.bf16.msra.mxu0 0
        %640 = vmatprep.subr.bf16.mxu0 0
        %641 = vmatpush1.bf16.msra.mxu0 0
        %642 = vmatprep.subr.bf16.mxu0 0
        %643 = vmatpush1.bf16.msra.mxu0 0
        %644 = vmatprep.subr.bf16.mxu0 0
        %645 = vmatpush1.bf16.msra.mxu0 0
        %646 = vmatprep.subr.bf16.mxu0 0
        %647 = vmatpush1.bf16.msra.mxu0 0
        %648 = vmatprep.subr.bf16.mxu0 0
        %649 = vmatpush1.bf16.msra.mxu0 0
        %650 = vmatprep.subr.bf16.mxu0 0
        %651 = vmatpush1.bf16.msra.mxu0 0
        %652 = vmatprep.subr.bf16.mxu0 0
        %653 = vmatpush1.bf16.msra.mxu0 0
        %654 = vmatprep.mubr.bf16.mxu0 0
        %655 = vmatmul.mubr.bf16.gmra.mrb[0].mxu0 %v564
        %v656 = vpop.f32.mrb[0].mxu0
        %v657 = vadd.f32 %v535, %v656
        %v658 = vpop.f32.mrb[0].mxu0
        %v659 = vadd.f32 %v535, %v658
        %v660 = vpop.f32.mrb[0].mxu0
        %v661 = vadd.f32 %v540, %v660
        %v662 = vpop.f32.mrb[0].mxu0
        %v663 = vadd.f32 %v540, %v662
        %664 = vmatprep.mubr.bf16.mxu0 0
        %665 = vmatmul.mubr.bf16.gmra.mrb[0].mxu0 %v567
        %v666 = vpop.f32.mrb[0].mxu0
        %v667 = vadd.f32 %v545, %v666
        %v668 = vpop.f32.mrb[0].mxu0
        %v669 = vadd.f32 %v545, %v668
        %v670 = vpop.f32.mrb[0].mxu0
        %v671 = vadd.f32 %v550, %v670
        %v672 = vpop.f32.mrb[0].mxu0
        %v673 = vadd.f32 %v550, %v672
        %674 = vdwg.mxu0
        %675 = vmatprep.subr.bf16.mxu0 %v517
        %676 = vmatpush1.bf16.msra.mxu0 %v516
        %677 = vmatprep.subr.bf16.mxu0 0
        %678 = vmatpush1.bf16.msra.mxu0 0
        %679 = vmatprep.subr.bf16.mxu0 0
        %680 = vmatpush1.bf16.msra.mxu0 0
        %681 = vmatprep.subr.bf16.mxu0 0
        %682 = vmatpush1.bf16.msra.mxu0 0
        %683 = vmatprep.subr.bf16.mxu0 0
        %684 = vmatpush1.bf16.msra.mxu0 0
        %685 = vmatprep.subr.bf16.mxu0 0
        %686 = vmatpush1.bf16.msra.mxu0 0
        %687 = vmatprep.subr.bf16.mxu0 0
        %688 = vmatpush1.bf16.msra.mxu0 0
        %689 = vmatprep.subr.bf16.mxu0 0
        %690 = vmatpush1.bf16.msra.mxu0 0
        %691 = vmatprep.subr.bf16.mxu0 0
        %692 = vmatpush1.bf16.msra.mxu0 0
        %693 = vmatprep.subr.bf16.mxu0 0
        %694 = vmatpush1.bf16.msra.mxu0 0
        %695 = vmatprep.subr.bf16.mxu0 0
        %696 = vmatpush1.bf16.msra.mxu0 0
        %697 = vmatprep.subr.bf16.mxu0 0
        %698 = vmatpush1.bf16.msra.mxu0 0
        %699 = vmatprep.subr.bf16.mxu0 0
        %700 = vmatpush1.bf16.msra.mxu0 0
        %701 = vmatprep.subr.bf16.mxu0 0
        %702 = vmatpush1.bf16.msra.mxu0 0
        %703 = vmatprep.subr.bf16.mxu0 0
        %704 = vmatpush1.bf16.msra.mxu0 0
        %705 = vmatprep.subr.bf16.mxu0 0
        %706 = vmatpush1.bf16.msra.mxu0 0
        %707 = vmatprep.mubr.bf16.mxu0 0
        %708 = vmatmul.mubr.bf16.gmra.mrb[0].mxu0 %v564
        %v709 = vpop.f32.mrb[0].mxu0
        %v710 = vadd.f32 %v535, %v709
        %v711 = vpop.f32.mrb[0].mxu0
        %v712 = vadd.f32 %v535, %v711
        %v713 = vpop.f32.mrb[0].mxu0
        %v714 = vadd.f32 %v540, %v713
        %v715 = vpop.f32.mrb[0].mxu0
        %v716 = vadd.f32 %v540, %v715
        %717 = vmatprep.mubr.bf16.mxu0 0
        %718 = vmatmul.mubr.bf16.gmra.mrb[0].mxu0 %v567
        %v719 = vpop.f32.mrb[0].mxu0
        %v720 = vadd.f32 %v545, %v719
        %v721 = vpop.f32.mrb[0].mxu0
        %v722 = vadd.f32 %v545, %v721
        %v723 = vpop.f32.mrb[0].mxu0
        %v724 = vadd.f32 %v550, %v723
        %v725 = vpop.f32.mrb[0].mxu0
        %v726 = vadd.f32 %v550, %v725
        %727 = vdwg.mxu0
        %728 = vmatprep.subr.bf16.mxu0 %v519
        %729 = vmatpush1.bf16.msra.mxu0 %v518
        %730 = vmatprep.subr.bf16.mxu0 0
        %731 = vmatpush1.bf16.msra.mxu0 0
        %732 = vmatprep.subr.bf16.mxu0 0
        %733 = vmatpush1.bf16.msra.mxu0 0
        %734 = vmatprep.subr.bf16.mxu0 0
        %735 = vmatpush1.bf16.msra.mxu0 0
        %736 = vmatprep.subr.bf16.mxu0 0
        %737 = vmatpush1.bf16.msra.mxu0 0
        %738 = vmatprep.subr.bf16.mxu0 0
        %739 = vmatpush1.bf16.msra.mxu0 0
        %740 = vmatprep.subr.bf16.mxu0 0
        %741 = vmatpush1.bf16.msra.mxu0 0
        %742 = vmatprep.subr.bf16.mxu0 0
        %743 = vmatpush1.bf16.msra.mxu0 0
        %744 = vmatprep.subr.bf16.mxu0 0
        %745 = vmatpush1.bf16.msra.mxu0 0
        %746 = vmatprep.subr.bf16.mxu0 0
        %747 = vmatpush1.bf16.msra.mxu0 0
        %748 = vmatprep.subr.bf16.mxu0 0
        %749 = vmatpush1.bf16.msra.mxu0 0
        %750 = vmatprep.subr.bf16.mxu0 0
        %751 = vmatpush1.bf16.msra.mxu0 0
        %752 = vmatprep.subr.bf16.mxu0 0
        %753 = vmatpush1.bf16.msra.mxu0 0
        %754 = vmatprep.subr.bf16.mxu0 0
        %755 = vmatpush1.bf16.msra.mxu0 0
        %756 = vmatprep.subr.bf16.mxu0 0
        %757 = vmatpush1.bf16.msra.mxu0 0
        %758 = vmatprep.subr.bf16.mxu0 0
        %759 = vmatpush1.bf16.msra.mxu0 0
        %760 = vmatprep.mubr.bf16.mxu0 0
        %761 = vmatmul.mubr.bf16.gmra.mrb[0].mxu0 %v564
        %v762 = vpop.f32.mrb[0].mxu0
        %v763 = vadd.f32 %v535, %v762
        %v764 = vpop.f32.mrb[0].mxu0
        %v765 = vadd.f32 %v535, %v764
        %v766 = vpop.f32.mrb[0].mxu0
        %v767 = vadd.f32 %v540, %v766
        %v768 = vpop.f32.mrb[0].mxu0
        %v769 = vadd.f32 %v540, %v768
        %770 = vmatprep.mubr.bf16.mxu0 0
        %771 = vmatmul.mubr.bf16.gmra.mrb[0].mxu0 %v567
        %v772 = vpop.f32.mrb[0].mxu0
        %v773 = vadd.f32 %v545, %v772
        %v774 = vpop.f32.mrb[0].mxu0
        %v775 = vadd.f32 %v545, %v774
        %v776 = vpop.f32.mrb[0].mxu0
        %v777 = vadd.f32 %v550, %v776
        %v778 = vpop.f32.mrb[0].mxu0
        %v779 = vadd.f32 %v550, %v778
        %780 = vdwg.mxu0
        %781 = vmatprep.subr.bf16.mxu0 %v521
        %782 = vmatpush1.bf16.msra.mxu0 %v520
        %783 = vmatprep.subr.bf16.mxu0 0
        %784 = vmatpush1.bf16.msra.mxu0 0
        %785 = vmatprep.subr.bf16.mxu0 0
        %786 = vmatpush1.bf16.msra.mxu0 0
        %787 = vmatprep.subr.bf16.mxu0 0
        %788 = vmatpush1.bf16.msra.mxu0 0
        %789 = vmatprep.subr.bf16.mxu0 0
        %790 = vmatpush1.bf16.msra.mxu0 0
        %791 = vmatprep.subr.bf16.mxu0 0
        %792 = vmatpush1.bf16.msra.mxu0 0
        %793 = vmatprep.subr.bf16.mxu0 0
        %794 = vmatpush1.bf16.msra.mxu0 0
        %795 = vmatprep.subr.bf16.mxu0 0
        %796 = vmatpush1.bf16.msra.mxu0 0
        %797 = vmatprep.subr.bf16.mxu0 0
        %798 = vmatpush1.bf16.msra.mxu0 0
        %799 = vmatprep.subr.bf16.mxu0 0
        %800 = vmatpush1.bf16.msra.mxu0 0
        %801 = vmatprep.subr.bf16.mxu0 0
        %802 = vmatpush1.bf16.msra.mxu0 0
        %803 = vmatprep.subr.bf16.mxu0 0
        %804 = vmatpush1.bf16.msra.mxu0 0
        %805 = vmatprep.subr.bf16.mxu0 0
        %806 = vmatpush1.bf16.msra.mxu0 0
        %807 = vmatprep.subr.bf16.mxu0 0
        %808 = vmatpush1.bf16.msra.mxu0 0
        %809 = vmatprep.subr.bf16.mxu0 0
        %810 = vmatpush1.bf16.msra.mxu0 0
        %811 = vmatprep.subr.bf16.mxu0 0
        %812 = vmatpush1.bf16.msra.mxu0 0
        %813 = vmatprep.mubr.bf16.mxu0 0
        %814 = vmatmul.mubr.bf16.gmra.mrb[0].mxu0 %v564
        %v815 = vpop.f32.mrb[0].mxu0
        %v816 = vadd.f32 %v535, %v815
        %v817 = vpop.f32.mrb[0].mxu0
        %v818 = vadd.f32 %v535, %v817
        %v819 = vpop.f32.mrb[0].mxu0
        %v820 = vadd.f32 %v540, %v819
        %v821 = vpop.f32.mrb[0].mxu0
        %v822 = vadd.f32 %v540, %v821
        %823 = vmatprep.mubr.bf16.mxu0 0
        %824 = vmatmul.mubr.bf16.gmra.mrb[0].mxu0 %v567
        %v825 = vpop.f32.mrb[0].mxu0
        %v826 = vadd.f32 %v545, %v825
        %v827 = vpop.f32.mrb[0].mxu0
        %v828 = vadd.f32 %v545, %v827
        %v829 = vpop.f32.mrb[0].mxu0
        %v830 = vadd.f32 %v550, %v829
        %v831 = vpop.f32.mrb[0].mxu0
        %v832 = vadd.f32 %v550, %v831
        %833 = vdwg.mxu0
        %834 = vmatprep.subr.bf16.mxu0 %v523
        %835 = vmatpush1.bf16.msra.mxu0 %v522
        %836 = vmatprep.subr.bf16.mxu0 0
        %837 = vmatpush1.bf16.msra.mxu0 0
        %838 = vmatprep.subr.bf16.mxu0 0
        %839 = vmatpush1.bf16.msra.mxu0 0
        %840 = vmatprep.subr.bf16.mxu0 0
        %841 = vmatpush1.bf16.msra.mxu0 0
        %842 = vmatprep.subr.bf16.mxu0 0
        %843 = vmatpush1.bf16.msra.mxu0 0
        %844 = vmatprep.subr.bf16.mxu0 0
        %845 = vmatpush1.bf16.msra.mxu0 0
        %846 = vmatprep.subr.bf16.mxu0 0
        %847 = vmatpush1.bf16.msra.mxu0 0
        %848 = vmatprep.subr.bf16.mxu0 0
        %849 = vmatpush1.bf16.msra.mxu0 0
        %850 = vmatprep.subr.bf16.mxu0 0
        %851 = vmatpush1.bf16.msra.mxu0 0
        %852 = vmatprep.subr.bf16.mxu0 0
        %853 = vmatpush1.bf16.msra.mxu0 0
        %854 = vmatprep.subr.bf16.mxu0 0
        %855 = vmatpush1.bf16.msra.mxu0 0
        %856 = vmatprep.subr.bf16.mxu0 0
        %857 = vmatpush1.bf16.msra.mxu0 0
        %858 = vmatprep.subr.bf16.mxu0 0
        %859 = vmatpush1.bf16.msra.mxu0 0
        %860 = vmatprep.subr.bf16.mxu0 0
        %861 = vmatpush1.bf16.msra.mxu0 0
        %862 = vmatprep.subr.bf16.mxu0 0
        %863 = vmatpush1.bf16.msra.mxu0 0
        %864 = vmatprep.subr.bf16.mxu0 0
        %865 = vmatpush1.bf16.msra.mxu0 0
        %866 = vmatprep.mubr.bf16.mxu0 0
        %867 = vmatmul.mubr.bf16.gmra.mrb[0].mxu0 %v564
        %v868 = vpop.f32.mrb[0].mxu0
        %v869 = vadd.f32 %v535, %v868
        %v870 = vpop.f32.mrb[0].mxu0
        %v871 = vadd.f32 %v535, %v870
        %v872 = vpop.f32.mrb[0].mxu0
        %v873 = vadd.f32 %v540, %v872
        %v874 = vpop.f32.mrb[0].mxu0
        %v875 = vadd.f32 %v540, %v874
        %876 = vmatprep.mubr.bf16.mxu0 0
        %877 = vmatmul.mubr.bf16.gmra.mrb[0].mxu0 %v567
        %v878 = vpop.f32.mrb[0].mxu0
        %v879 = vadd.f32 %v545, %v878
        %v880 = vpop.f32.mrb[0].mxu0
        %v881 = vadd.f32 %v545, %v880
        %v882 = vpop.f32.mrb[0].mxu0
        %v883 = vadd.f32 %v550, %v882
        %v884 = vpop.f32.mrb[0].mxu0
        %v885 = vadd.f32 %v550, %v884
        %886 = vdwg.mxu0
        %887 = vmatprep.subr.bf16.mxu0 %v525
        %888 = vmatpush1.bf16.msra.mxu0 %v524
        %889 = vmatprep.subr.bf16.mxu0 0
        %890 = vmatpush1.bf16.msra.mxu0 0
        %891 = vmatprep.subr.bf16.mxu0 0
        %892 = vmatpush1.bf16.msra.mxu0 0
        %893 = vmatprep.subr.bf16.mxu0 0
        %894 = vmatpush1.bf16.msra.mxu0 0
        %895 = vmatprep.subr.bf16.mxu0 0
        %896 = vmatpush1.bf16.msra.mxu0 0
        %897 = vmatprep.subr.bf16.mxu0 0
        %898 = vmatpush1.bf16.msra.mxu0 0
        %899 = vmatprep.subr.bf16.mxu0 0
        %900 = vmatpush1.bf16.msra.mxu0 0
        %901 = vmatprep.subr.bf16.mxu0 0
        %902 = vmatpush1.bf16.msra.mxu0 0
        %903 = vmatprep.subr.bf16.mxu0 0
        %904 = vmatpush1.bf16.msra.mxu0 0
        %905 = vmatprep.subr.bf16.mxu0 0
        %906 = vmatpush1.bf16.msra.mxu0 0
        %907 = vmatprep.subr.bf16.mxu0 0
        %908 = vmatpush1.bf16.msra.mxu0 0
        %909 = vmatprep.subr.bf16.mxu0 0
        %910 = vmatpush1.bf16.msra.mxu0 0
        %911 = vmatprep.subr.bf16.mxu0 0
        %912 = vmatpush1.bf16.msra.mxu0 0
        %913 = vmatprep.subr.bf16.mxu0 0
        %914 = vmatpush1.bf16.msra.mxu0 0
        %915 = vmatprep.subr.bf16.mxu0 0
        %916 = vmatpush1.bf16.msra.mxu0 0
        %917 = vmatprep.subr.bf16.mxu0 0
        %918 = vmatpush1.bf16.msra.mxu0 0
        %919 = vmatprep.mubr.bf16.mxu0 0
        %920 = vmatmul.mubr.bf16.gmra.mrb[0].mxu0 %v564
        %v921 = vpop.f32.mrb[0].mxu0
        %v922 = vadd.f32 %v535, %v921
        %v923 = vpop.f32.mrb[0].mxu0
        %v924 = vadd.f32 %v535, %v923
        %v925 = vpop.f32.mrb[0].mxu0
        %v926 = vadd.f32 %v540, %v925
        %v927 = vpop.f32.mrb[0].mxu0
        %v928 = vadd.f32 %v540, %v927
        %929 = vmatprep.mubr.bf16.mxu0 0
        %930 = vmatmul.mubr.bf16.gmra.mrb[0].mxu0 %v567
        %v931 = vpop.f32.mrb[0].mxu0
        %v932 = vadd.f32 %v545, %v931
        %v933 = vpop.f32.mrb[0].mxu0
        %v934 = vadd.f32 %v545, %v933
        %v935 = vpop.f32.mrb[0].mxu0
        %v936 = vadd.f32 %v550, %v935
        %v937 = vpop.f32.mrb[0].mxu0
        %v938 = vadd.f32 %v550, %v937
        %939 = vdwg.mxu0
        %940 = vmatprep.subr.bf16.mxu0 %v527
        %941 = vmatpush1.bf16.msra.mxu0 %v526
        %942 = vmatprep.subr.bf16.mxu0 0
        %943 = vmatpush1.bf16.msra.mxu0 0
        %944 = vmatprep.subr.bf16.mxu0 0
        %945 = vmatpush1.bf16.msra.mxu0 0
        %946 = vmatprep.subr.bf16.mxu0 0
        %947 = vmatpush1.bf16.msra.mxu0 0
        %948 = vmatprep.subr.bf16.mxu0 0
        %949 = vmatpush1.bf16.msra.mxu0 0
        %950 = vmatprep.subr.bf16.mxu0 0
        %951 = vmatpush1.bf16.msra.mxu0 0
        %952 = vmatprep.subr.bf16.mxu0 0
        %953 = vmatpush1.bf16.msra.mxu0 0
        %954 = vmatprep.subr.bf16.mxu0 0
        %955 = vmatpush1.bf16.msra.mxu0 0
        %956 = vmatprep.subr.bf16.mxu0 0
        %957 = vmatpush1.bf16.msra.mxu0 0
        %958 = vmatprep.subr.bf16.mxu0 0
        %959 = vmatpush1.bf16.msra.mxu0 0
        %960 = vmatprep.subr.bf16.mxu0 0
        %961 = vmatpush1.bf16.msra.mxu0 0
        %962 = vmatprep.subr.bf16.mxu0 0
        %963 = vmatpush1.bf16.msra.mxu0 0
        %964 = vmatprep.subr.bf16.mxu0 0
        %965 = vmatpush1.bf16.msra.mxu0 0
        %966 = vmatprep.subr.bf16.mxu0 0
        %967 = vmatpush1.bf16.msra.mxu0 0
        %968 = vmatprep.subr.bf16.mxu0 0
        %969 = vmatpush1.bf16.msra.mxu0 0
        %970 = vmatprep.subr.bf16.mxu0 0
        %971 = vmatpush1.bf16.msra.mxu0 0
        %972 = vmatprep.mubr.bf16.mxu0 0
        %973 = vmatmul.mubr.bf16.gmra.mrb[0].mxu0 %v564
        %v974 = vpop.f32.mrb[0].mxu0
        %v975 = vadd.f32 %v535, %v974
        %v976 = vpop.f32.mrb[0].mxu0
        %v977 = vadd.f32 %v535, %v976
        %v978 = vpop.f32.mrb[0].mxu0
        %v979 = vadd.f32 %v540, %v978
        %v980 = vpop.f32.mrb[0].mxu0
        %v981 = vadd.f32 %v540, %v980
        %982 = vmatprep.mubr.bf16.mxu0 0
        %983 = vmatmul.mubr.bf16.gmra.mrb[0].mxu0 %v567
        %v984 = vpop.f32.mrb[0].mxu0
        %v985 = vadd.f32 %v545, %v984
        %v986 = vpop.f32.mrb[0].mxu0
        %v987 = vadd.f32 %v545, %v986
        %v988 = vpop.f32.mrb[0].mxu0
        %v989 = vadd.f32 %v550, %v988
        %v990 = vpop.f32.mrb[0].mxu0
        %v991 = vadd.f32 %v550, %v990
        %992 = vdwg.mxu0
        %v993 = vadd.f32 %v604, %v606
        %v994 = vadd.f32 %v993, %v657
        %v995 = vadd.f32 %v994, %v659
        %v996 = vadd.f32 %v995, %v710
        %v997 = vadd.f32 %v996, %v712
        %v998 = vadd.f32 %v997, %v763
        %v999 = vadd.f32 %v998, %v765
        %v1000 = vadd.f32 %v999, %v816
        %v1001 = vadd.f32 %v1000, %v818
        %v1002 = vadd.f32 %v1001, %v869
        %v1003 = vadd.f32 %v1002, %v871
        %v1004 = vadd.f32 %v1003, %v922
        %v1005 = vadd.f32 %v1004, %v924
        %v1006 = vadd.f32 %v1005, %v975
        %v1007 = vadd.f32 %v1006, %v977
        %1008 = vadd.xlane.f32.xlu0 %v1007
        %v1009 = vpop.xlane.xlu0 %1008
        %v1010 = vadd.f32 %v608, %v610
        %v1011 = vadd.f32 %v1010, %v661
        %v1012 = vadd.f32 %v1011, %v663
        %v1013 = vadd.f32 %v1012, %v714
        %v1014 = vadd.f32 %v1013, %v716
        %v1015 = vadd.f32 %v1014, %v767
        %v1016 = vadd.f32 %v1015, %v769
        %v1017 = vadd.f32 %v1016, %v820
        %v1018 = vadd.f32 %v1017, %v822
        %v1019 = vadd.f32 %v1018, %v873
        %v1020 = vadd.f32 %v1019, %v875
        %v1021 = vadd.f32 %v1020, %v926
        %v1022 = vadd.f32 %v1021, %v928
        %v1023 = vadd.f32 %v1022, %v979
        %v1024 = vadd.f32 %v1023, %v981
        %1025 = vadd.xlane.f32.xlu0 %v1024
        %v1026 = vpop.xlane.xlu0 %1025
        %v1027 = vadd.f32 %v614, %v616
        %v1028 = vadd.f32 %v1027, %v667
        %v1029 = vadd.f32 %v1028, %v669
        %v1030 = vadd.f32 %v1029, %v720
        %v1031 = vadd.f32 %v1030, %v722
        %v1032 = vadd.f32 %v1031, %v773
        %v1033 = vadd.f32 %v1032, %v775
        %v1034 = vadd.f32 %v1033, %v826
        %v1035 = vadd.f32 %v1034, %v828
        %v1036 = vadd.f32 %v1035, %v879
        %v1037 = vadd.f32 %v1036, %v881
        %v1038 = vadd.f32 %v1037, %v932
        %v1039 = vadd.f32 %v1038, %v934
        %v1040 = vadd.f32 %v1039, %v985
        %v1041 = vadd.f32 %v1040, %v987
        %1042 = vadd.xlane.f32.xlu0 %v1041
        %v1043 = vpop.xlane.xlu0 %1042
        %v1044 = vadd.f32 %v618, %v620
        %v1045 = vadd.f32 %v1044, %v671
        %v1046 = vadd.f32 %v1045, %v673
        %v1047 = vadd.f32 %v1046, %v724
        %v1048 = vadd.f32 %v1047, %v726
        %v1049 = vadd.f32 %v1048, %v777
        %v1050 = vadd.f32 %v1049, %v779
        %v1051 = vadd.f32 %v1050, %v830
        %v1052 = vadd.f32 %v1051, %v832
        %v1053 = vadd.f32 %v1052, %v883
        %v1054 = vadd.f32 %v1053, %v885
        %v1055 = vadd.f32 %v1054, %v936
        %v1056 = vadd.f32 %v1055, %v938
        %v1057 = vadd.f32 %v1056, %v989
        %v1058 = vadd.f32 %v1057, %v991
        %1059 = vadd.xlane.f32.xlu0 %v1058
        %v1060 = vpop.xlane.xlu0 %1059
        %v1061 = vmul.f32 %v604, %v604
        %v1062 = vmul.f32 %v606, %v606
        %v1063 = vmul.f32 %v657, %v657
        %v1064 = vmul.f32 %v659, %v659
        %v1065 = vmul.f32 %v710, %v710
        %v1066 = vmul.f32 %v712, %v712
        %v1067 = vmul.f32 %v763, %v763
        %v1068 = vmul.f32 %v765, %v765
        %v1069 = vmul.f32 %v816, %v816
        %v1070 = vmul.f32 %v818, %v818
        %v1071 = vmul.f32 %v869, %v869
        %v1072 = vmul.f32 %v871, %v871
        %v1073 = vmul.f32 %v922, %v922
        %v1074 = vmul.f32 %v924, %v924
        %v1075 = vmul.f32 %v975, %v975
        %v1076 = vmul.f32 %v977, %v977
        %v1077 = vmul.f32 %v608, %v608
        %v1078 = vmul.f32 %v610, %v610
        %v1079 = vmul.f32 %v661, %v661
        %v1080 = vmul.f32 %v663, %v663
        %v1081 = vmul.f32 %v714, %v714
        %v1082 = vmul.f32 %v716, %v716
        %v1083 = vmul.f32 %v767, %v767
        %v1084 = vmul.f32 %v769, %v769
        %v1085 = vmul.f32 %v820, %v820
        %v1086 = vmul.f32 %v822, %v822
        %v1087 = vmul.f32 %v873, %v873
        %v1088 = vmul.f32 %v875, %v875
        %v1089 = vmul.f32 %v926, %v926
        %v1090 = vmul.f32 %v928, %v928
        %v1091 = vmul.f32 %v979, %v979
        %v1092 = vmul.f32 %v981, %v981
        %v1093 = vmul.f32 %v614, %v614
        %v1094 = vmul.f32 %v616, %v616
        %v1095 = vmul.f32 %v667, %v667
        %v1096 = vmul.f32 %v669, %v669
        %v1097 = vmul.f32 %v720, %v720
        %v1098 = vmul.f32 %v722, %v722
        %v1099 = vmul.f32 %v773, %v773
        %v1100 = vmul.f32 %v775, %v775
        %v1101 = vmul.f32 %v826, %v826
        %v1102 = vmul.f32 %v828, %v828
        %v1103 = vmul.f32 %v879, %v879
        %v1104 = vmul.f32 %v881, %v881
        %v1105 = vmul.f32 %v932, %v932
        %v1106 = vmul.f32 %v934, %v934
        %v1107 = vmul.f32 %v985, %v985
        %v1108 = vmul.f32 %v987, %v987
        %v1109 = vmul.f32 %v618, %v618
        %v1110 = vmul.f32 %v620, %v620
        %v1111 = vmul.f32 %v671, %v671
        %v1112 = vmul.f32 %v673, %v673
        %v1113 = vmul.f32 %v724, %v724
        %v1114 = vmul.f32 %v726, %v726
        %v1115 = vmul.f32 %v777, %v777
        %v1116 = vmul.f32 %v779, %v779
        %v1117 = vmul.f32 %v830, %v830
        %v1118 = vmul.f32 %v832, %v832
        %v1119 = vmul.f32 %v883, %v883
        %v1120 = vmul.f32 %v885, %v885
        %v1121 = vmul.f32 %v936, %v936
        %v1122 = vmul.f32 %v938, %v938
        %v1123 = vmul.f32 %v989, %v989
        %v1124 = vmul.f32 %v991, %v991
        %v1125 = vadd.f32 %v1061, %v1062
        %v1126 = vadd.f32 %v1125, %v1063
        %v1127 = vadd.f32 %v1126, %v1064
        %v1128 = vadd.f32 %v1127, %v1065
        %v1129 = vadd.f32 %v1128, %v1066
        %v1130 = vadd.f32 %v1129, %v1067
        %v1131 = vadd.f32 %v1130, %v1068
        %v1132 = vadd.f32 %v1131, %v1069
        %v1133 = vadd.f32 %v1132, %v1070
        %v1134 = vadd.f32 %v1133, %v1071
        %v1135 = vadd.f32 %v1134, %v1072
        %v1136 = vadd.f32 %v1135, %v1073
        %v1137 = vadd.f32 %v1136, %v1074
        %v1138 = vadd.f32 %v1137, %v1075
        %v1139 = vadd.f32 %v1138, %v1076
        %1140 = vadd.xlane.f32.xlu0 %v1139
        %v1141 = vpop.xlane.xlu0 %1140
        %v1142 = vadd.f32 %v1077, %v1078
        %v1143 = vadd.f32 %v1142, %v1079
        %v1144 = vadd.f32 %v1143, %v1080
        %v1145 = vadd.f32 %v1144, %v1081
        %v1146 = vadd.f32 %v1145, %v1082
        %v1147 = vadd.f32 %v1146, %v1083
        %v1148 = vadd.f32 %v1147, %v1084
        %v1149 = vadd.f32 %v1148, %v1085
        %v1150 = vadd.f32 %v1149, %v1086
        %v1151 = vadd.f32 %v1150, %v1087
        %v1152 = vadd.f32 %v1151, %v1088
        %v1153 = vadd.f32 %v1152, %v1089
        %v1154 = vadd.f32 %v1153, %v1090
        %v1155 = vadd.f32 %v1154, %v1091
        %v1156 = vadd.f32 %v1155, %v1092
        %1157 = vadd.xlane.f32.xlu0 %v1156
        %v1158 = vpop.xlane.xlu0 %1157
        %v1159 = vadd.f32 %v1093, %v1094
        %v1160 = vadd.f32 %v1159, %v1095
        %v1161 = vadd.f32 %v1160, %v1096
        %v1162 = vadd.f32 %v1161, %v1097
        %v1163 = vadd.f32 %v1162, %v1098
        %v1164 = vadd.f32 %v1163, %v1099
        %v1165 = vadd.f32 %v1164, %v1100
        %v1166 = vadd.f32 %v1165, %v1101
        %v1167 = vadd.f32 %v1166, %v1102
        %v1168 = vadd.f32 %v1167, %v1103
        %v1169 = vadd.f32 %v1168, %v1104
        %v1170 = vadd.f32 %v1169, %v1105
        %v1171 = vadd.f32 %v1170, %v1106
        %v1172 = vadd.f32 %v1171, %v1107
        %v1173 = vadd.f32 %v1172, %v1108
        %1174 = vadd.xlane.f32.xlu0 %v1173
        %v1175 = vpop.xlane.xlu0 %1174
        %v1176 = vadd.f32 %v1109, %v1110
        %v1177 = vadd.f32 %v1176, %v1111
        %v1178 = vadd.f32 %v1177, %v1112
        %v1179 = vadd.f32 %v1178, %v1113
        %v1180 = vadd.f32 %v1179, %v1114
        %v1181 = vadd.f32 %v1180, %v1115
        %v1182 = vadd.f32 %v1181, %v1116
        %v1183 = vadd.f32 %v1182, %v1117
        %v1184 = vadd.f32 %v1183, %v1118
        %v1185 = vadd.f32 %v1184, %v1119
        %v1186 = vadd.f32 %v1185, %v1120
        %v1187 = vadd.f32 %v1186, %v1121
        %v1188 = vadd.f32 %v1187, %v1122
        %v1189 = vadd.f32 %v1188, %v1123
        %v1190 = vadd.f32 %v1189, %v1124
        %1191 = vadd.xlane.f32.xlu0 %v1190
        %v1192 = vpop.xlane.xlu0 %1191
        %vm1193 = vcmask 7168
        %v1194 = vsel %vm1193, %v1009, %v1141
        %v1195 = vsel %vm1193, %v1026, %v1158
        %v1196 = vsel %vm1193, %v1043, %v1175
        %v1197 = vsel %vm1193, %v1060, %v1192
        %vm1198 = vcmask 15360
        %1199 = vst.msk [vmem:[%s338] sm:$0xff] %vm1198, %v1194
        %1200 = vst.msk [vmem:[%s338 + $0x8] sm:$0xff] %vm1198, %v1195
        %1201 = vst.msk [vmem:[%s338 + $0x10] sm:$0xff] %vm1198, %v1196
        %1202 = vst.msk [vmem:[%s338 + $0x18] sm:$0xff] %vm1198, %v1197
        %v1203 = vpack.c.bf16 %v608, %v604
        %v1204 = vpack.c.bf16 %v610, %v606
        %v1205 = vpack.c.bf16 %v661, %v657
        %v1206 = vpack.c.bf16 %v663, %v659
        %v1207 = vpack.c.bf16 %v714, %v710
        %v1208 = vpack.c.bf16 %v716, %v712
        %v1209 = vpack.c.bf16 %v767, %v763
        %v1210 = vpack.c.bf16 %v769, %v765
        %v1211 = vpack.c.bf16 %v820, %v816
        %v1212 = vpack.c.bf16 %v822, %v818
        %v1213 = vpack.c.bf16 %v873, %v869
        %v1214 = vpack.c.bf16 %v875, %v871
        %v1215 = vpack.c.bf16 %v926, %v922
        %v1216 = vpack.c.bf16 %v928, %v924
        %v1217 = vpack.c.bf16 %v979, %v975
        %v1218 = vpack.c.bf16 %v981, %v977
        %v1219 = vpack.c.bf16 %v618, %v614
        %v1220 = vpack.c.bf16 %v620, %v616
        %v1221 = vpack.c.bf16 %v671, %v667
        %v1222 = vpack.c.bf16 %v673, %v669
        %v1223 = vpack.c.bf16 %v724, %v720
        %v1224 = vpack.c.bf16 %v726, %v722
        %v1225 = vpack.c.bf16 %v777, %v773
        %v1226 = vpack.c.bf16 %v779, %v775
        %v1227 = vpack.c.bf16 %v830, %v826
        %v1228 = vpack.c.bf16 %v832, %v828
        %v1229 = vpack.c.bf16 %v883, %v879
        %v1230 = vpack.c.bf16 %v885, %v881
        %v1231 = vpack.c.bf16 %v936, %v932
        %v1232 = vpack.c.bf16 %v938, %v934
        %v1233 = vpack.c.bf16 %v989, %v985
        %v1234 = vpack.c.bf16 %v991, %v987
        %v1267 = vunpack.c.l.b16 %v1203
        %v1268 = vunpack.c.l.b16 %v1204
        %v1269 = vunpack.c.l.b16 %v1205
        %v1270 = vunpack.c.l.b16 %v1206
        %v1271 = vunpack.c.l.b16 %v1207
        %v1272 = vunpack.c.l.b16 %v1208
        %v1273 = vunpack.c.l.b16 %v1209
        %v1274 = vunpack.c.l.b16 %v1210
        %v1275 = vunpack.c.l.b16 %v1211
        %v1276 = vunpack.c.l.b16 %v1212
        %v1277 = vunpack.c.l.b16 %v1213
        %v1278 = vunpack.c.l.b16 %v1214
        %v1279 = vunpack.c.l.b16 %v1215
        %v1280 = vunpack.c.l.b16 %v1216
        %v1281 = vunpack.c.l.b16 %v1217
        %v1282 = vunpack.c.l.b16 %v1218
        %v1283 = vunpack.c.h.b16 %v1203
        %v1284 = vunpack.c.h.b16 %v1204
        %v1285 = vunpack.c.h.b16 %v1205
        %v1286 = vunpack.c.h.b16 %v1206
        %v1287 = vunpack.c.h.b16 %v1207
        %v1288 = vunpack.c.h.b16 %v1208
        %v1289 = vunpack.c.h.b16 %v1209
        %v1290 = vunpack.c.h.b16 %v1210
        %v1291 = vunpack.c.h.b16 %v1211
        %v1292 = vunpack.c.h.b16 %v1212
        %v1293 = vunpack.c.h.b16 %v1213
        %v1294 = vunpack.c.h.b16 %v1214
        %v1295 = vunpack.c.h.b16 %v1215
        %v1296 = vunpack.c.h.b16 %v1216
        %v1297 = vunpack.c.h.b16 %v1217
        %v1298 = vunpack.c.h.b16 %v1218
        %v1299 = vunpack.c.l.b16 %v1219
        %v1300 = vunpack.c.l.b16 %v1220
        %v1301 = vunpack.c.l.b16 %v1221
        %v1302 = vunpack.c.l.b16 %v1222
        %v1303 = vunpack.c.l.b16 %v1223
        %v1304 = vunpack.c.l.b16 %v1224
        %v1305 = vunpack.c.l.b16 %v1225
        %v1306 = vunpack.c.l.b16 %v1226
        %v1307 = vunpack.c.l.b16 %v1227
        %v1308 = vunpack.c.l.b16 %v1228
        %v1309 = vunpack.c.l.b16 %v1229
        %v1310 = vunpack.c.l.b16 %v1230
        %v1311 = vunpack.c.l.b16 %v1231
        %v1312 = vunpack.c.l.b16 %v1232
        %v1313 = vunpack.c.l.b16 %v1233
        %v1314 = vunpack.c.l.b16 %v1234
        %v1315 = vunpack.c.h.b16 %v1219
        %v1316 = vunpack.c.h.b16 %v1220
        %v1317 = vunpack.c.h.b16 %v1221
        %v1318 = vunpack.c.h.b16 %v1222
        %v1319 = vunpack.c.h.b16 %v1223
        %v1320 = vunpack.c.h.b16 %v1224
        %v1321 = vunpack.c.h.b16 %v1225
        %v1322 = vunpack.c.h.b16 %v1226
        %v1323 = vunpack.c.h.b16 %v1227
        %v1324 = vunpack.c.h.b16 %v1228
        %v1325 = vunpack.c.h.b16 %v1229
        %v1326 = vunpack.c.h.b16 %v1230
        %v1327 = vunpack.c.h.b16 %v1231
        %v1328 = vunpack.c.h.b16 %v1232
        %v1329 = vunpack.c.h.b16 %v1233
        %v1330 = vunpack.c.h.b16 %v1234
        %v1331 = vpack.c.b16 %v1268, %v1267
        %v1332 = vpack.c.b16 %v1270, %v1269
        %v1333 = vpack.c.b16 %v1272, %v1271
        %v1334 = vpack.c.b16 %v1274, %v1273
        %v1335 = vpack.c.b16 %v1276, %v1275
        %v1336 = vpack.c.b16 %v1278, %v1277
        %v1337 = vpack.c.b16 %v1280, %v1279
        %v1338 = vpack.c.b16 %v1282, %v1281
        %v1339 = vpack.c.b16 %v1284, %v1283
        %v1340 = vpack.c.b16 %v1286, %v1285
        %v1341 = vpack.c.b16 %v1288, %v1287
        %v1342 = vpack.c.b16 %v1290, %v1289
        %v1343 = vpack.c.b16 %v1292, %v1291
        %v1344 = vpack.c.b16 %v1294, %v1293
        %v1345 = vpack.c.b16 %v1296, %v1295
        %v1346 = vpack.c.b16 %v1298, %v1297
        %v1347 = vpack.c.b16 %v1300, %v1299
        %v1348 = vpack.c.b16 %v1302, %v1301
        %v1349 = vpack.c.b16 %v1304, %v1303
        %v1350 = vpack.c.b16 %v1306, %v1305
        %v1351 = vpack.c.b16 %v1308, %v1307
        %v1352 = vpack.c.b16 %v1310, %v1309
        %v1353 = vpack.c.b16 %v1312, %v1311
        %v1354 = vpack.c.b16 %v1314, %v1313
        %v1355 = vpack.c.b16 %v1316, %v1315
        %v1356 = vpack.c.b16 %v1318, %v1317
        %v1357 = vpack.c.b16 %v1320, %v1319
        %v1358 = vpack.c.b16 %v1322, %v1321
        %v1359 = vpack.c.b16 %v1324, %v1323
        %v1360 = vpack.c.b16 %v1326, %v1325
        %v1361 = vpack.c.b16 %v1328, %v1327
        %v1362 = vpack.c.b16 %v1330, %v1329
        %1395 = vst [vmem:[%s316] sm:$0xff] %v1331
        %1396 = vst [vmem:[%s316 + $0x8] sm:$0xff] %v1332
        %1397 = vst [vmem:[%s316 + $0x10] sm:$0xff] %v1333
        %1398 = vst [vmem:[%s316 + $0x18] sm:$0xff] %v1334
        %1399 = vst [vmem:[%s316 + $0x20] sm:$0xff] %v1335
        %1400 = vst [vmem:[%s316 + $0x28] sm:$0xff] %v1336
        %1401 = vst [vmem:[%s316 + $0x30] sm:$0xff] %v1337
        %1402 = vst [vmem:[%s316 + $0x38] sm:$0xff] %v1338
        %1403 = vst [vmem:[%s316 + $0x40] sm:$0xff] %v1339
        %1404 = vst [vmem:[%s316 + $0x48] sm:$0xff] %v1340
        %1405 = vst [vmem:[%s316 + $0x50] sm:$0xff] %v1341
        %1406 = vst [vmem:[%s316 + $0x58] sm:$0xff] %v1342
        %1407 = vst [vmem:[%s316 + $0x60] sm:$0xff] %v1343
        %1408 = vst [vmem:[%s316 + $0x68] sm:$0xff] %v1344
        %1409 = vst [vmem:[%s316 + $0x70] sm:$0xff] %v1345
        %1410 = vst [vmem:[%s316 + $0x78] sm:$0xff] %v1346
        %1411 = vst [vmem:[%s316 + $0x80] sm:$0xff] %v1347
        %1412 = vst [vmem:[%s316 + $0x88] sm:$0xff] %v1348
        %1413 = vst [vmem:[%s316 + $0x90] sm:$0xff] %v1349
        %1414 = vst [vmem:[%s316 + $0x98] sm:$0xff] %v1350
        %1415 = vst [vmem:[%s316 + $0xa0] sm:$0xff] %v1351
        %1416 = vst [vmem:[%s316 + $0xa8] sm:$0xff] %v1352
        %1417 = vst [vmem:[%s316 + $0xb0] sm:$0xff] %v1353
        %1418 = vst [vmem:[%s316 + $0xb8] sm:$0xff] %v1354
        %1419 = vst [vmem:[%s316 + $0xc0] sm:$0xff] %v1355
        %1420 = vst [vmem:[%s316 + $0xc8] sm:$0xff] %v1356
        %1421 = vst [vmem:[%s316 + $0xd0] sm:$0xff] %v1357
        %1422 = vst [vmem:[%s316 + $0xd8] sm:$0xff] %v1358
        %1423 = vst [vmem:[%s316 + $0xe0] sm:$0xff] %v1359
        %1424 = vst [vmem:[%s316 + $0xe8] sm:$0xff] %v1360
        %1425 = vst [vmem:[%s316 + $0xf0] sm:$0xff] %v1361
        %1426 = vst [vmem:[%s316 + $0xf8] sm:$0xff] %v1362
        %s1427 = sand.u32 %s152, 1
        %s1428 = sand.u32 %s152, 1
        %s1429 = smul.addr %s1428, 256
        %s1430 = scalar_lea.vmem [#allocation3], %s1429
        %p1431 = scmp.lt.s32.totalorder %s22, 1
        %s1432 = scalar_select %p1431, %s22, 1
        %p1433 = scmp.lt.s32.totalorder %s23, 1
        %s1434 = scalar_select %p1433, %s23, 1
        %s1435 = smul.addr %s1434, 4
        %s1436 = smul.addr %s1432, 8
        %s1437 = sadd.s32 %s1435, %s1436
        %s1438 = smul.addr %s1437, 8
        %s1439 = scalar_lea.vmem %s6, %s1438
        // Predicated region
        $region64: #{decoder_block_forward.6} parent=58 // pred_check
          %p1440 = pneg %p162
        $region65: #{decoder_block_forward.6} parent=58 // pred_check_branch
          %1442 = sbr.rel (%p1440) target = $region67
        $region66: #{decoder_block_forward.6} parent=58 // pred_region
          %s1443 = smul.u32 16, %s23
          %s1444 = smul.addr %s22, 128
          %s1445 = sadd.s32 %s1443, %s1444
          %s1446 = smul.addr %s1445, 4
          %s1447 = scalar_lea.vmem %s5, %s1446
          // Predicated region
          $region68: #{decoder_block_forward.6} parent=66 // pred_check
            _
          $region69: #{decoder_block_forward.6} parent=66 // pred_check_branch
            %1449 = sbr.rel (0) target = $region71
          $region70: #{decoder_block_forward.6} parent=66 // pred_region
            // Predicated region
            $region72: #{decoder_block_forward.6} parent=70 // pred_check
              _
            $region73: #{decoder_block_forward.6} parent=70 // pred_check_branch
              %1451 = sbr.rel (0) target = $region75
            $region74: #{decoder_block_forward.6} parent=70 // pred_region
              loop: start=0, step=1, limit=1
              $region76: #{decoder_block_forward.6} parent=74 // loop_pre_header
                _
              $region77: #{decoder_block_forward.6} parent=74 // loop_header
                %s1453 = sphi 0, %s1457
                %p1454 = scmp.ge.s32.totalorder %s1453, 1
                %s1458 = sphi %s1430, %s1430
                %s1459 = sphi %s1447, %s1447
              $region78: #{decoder_block_forward.6} parent=74 // loop_header_branch
                %1456 = sbr.rel (%p1454) target = $region82
              $region79: #{decoder_block_forward.6} parent=74 // loop_body
                %v1460 = vld [vmem:[%s1458] sm:$0xff]
                %1461 = vst [vmem:[%s1459] sm:$0xff] %v1460
                %v1462 = vld [vmem:[%s1458 + $0x8] sm:$0xff]
                %1463 = vst [vmem:[%s1459 + $0x8] sm:$0xff] %v1462
                %v1464 = vld [vmem:[%s1458 + $0x10] sm:$0xff]
                %1465 = vst [vmem:[%s1459 + $0x10] sm:$0xff] %v1464
                %v1466 = vld [vmem:[%s1458 + $0x18] sm:$0xff]
                %1467 = vst [vmem:[%s1459 + $0x18] sm:$0xff] %v1466
                %v1468 = vld [vmem:[%s1458 + $0x20] sm:$0xff]
                %1469 = vst [vmem:[%s1459 + $0x20] sm:$0xff] %v1468
                %v1470 = vld [vmem:[%s1458 + $0x28] sm:$0xff]
                %1471 = vst [vmem:[%s1459 + $0x28] sm:$0xff] %v1470
                %v1472 = vld [vmem:[%s1458 + $0x30] sm:$0xff]
                %1473 = vst [vmem:[%s1459 + $0x30] sm:$0xff] %v1472
                %v1474 = vld [vmem:[%s1458 + $0x38] sm:$0xff]
                %1475 = vst [vmem:[%s1459 + $0x38] sm:$0xff] %v1474
                %v1476 = vld [vmem:[%s1458 + $0x40] sm:$0xff]
                %1477 = vst [vmem:[%s1459 + $0x80] sm:$0xff] %v1476
                %v1478 = vld [vmem:[%s1458 + $0x48] sm:$0xff]
                %1479 = vst [vmem:[%s1459 + $0x88] sm:$0xff] %v1478
                %v1480 = vld [vmem:[%s1458 + $0x50] sm:$0xff]
                %1481 = vst [vmem:[%s1459 + $0x90] sm:$0xff] %v1480
                %v1482 = vld [vmem:[%s1458 + $0x58] sm:$0xff]
                %1483 = vst [vmem:[%s1459 + $0x98] sm:$0xff] %v1482
                %v1484 = vld [vmem:[%s1458 + $0x60] sm:$0xff]
                %1485 = vst [vmem:[%s1459 + $0xa0] sm:$0xff] %v1484
                %v1486 = vld [vmem:[%s1458 + $0x68] sm:$0xff]
                %1487 = vst [vmem:[%s1459 + $0xa8] sm:$0xff] %v1486
                %v1488 = vld [vmem:[%s1458 + $0x70] sm:$0xff]
                %1489 = vst [vmem:[%s1459 + $0xb0] sm:$0xff] %v1488
                %v1490 = vld [vmem:[%s1458 + $0x78] sm:$0xff]
                %1491 = vst [vmem:[%s1459 + $0xb8] sm:$0xff] %v1490
                %v1492 = vld [vmem:[%s1458 + $0x80] sm:$0xff]
                %1493 = vst [vmem:[%s1459 + $0x100] sm:$0xff] %v1492
                %v1494 = vld [vmem:[%s1458 + $0x88] sm:$0xff]
                %1495 = vst [vmem:[%s1459 + $0x108] sm:$0xff] %v1494
                %v1496 = vld [vmem:[%s1458 + $0x90] sm:$0xff]
                %1497 = vst [vmem:[%s1459 + $0x110] sm:$0xff] %v1496
                %v1498 = vld [vmem:[%s1458 + $0x98] sm:$0xff]
                %1499 = vst [vmem:[%s1459 + $0x118] sm:$0xff] %v1498
                %v1500 = vld [vmem:[%s1458 + $0xa0] sm:$0xff]
                %1501 = vst [vmem:[%s1459 + $0x120] sm:$0xff] %v1500
                %v1502 = vld [vmem:[%s1458 + $0xa8] sm:$0xff]
                %1503 = vst [vmem:[%s1459 + $0x128] sm:$0xff] %v1502
                %v1504 = vld [vmem:[%s1458 + $0xb0] sm:$0xff]
                %1505 = vst [vmem:[%s1459 + $0x130] sm:$0xff] %v1504
                %v1506 = vld [vmem:[%s1458 + $0xb8] sm:$0xff]
                %1507 = vst [vmem:[%s1459 + $0x138] sm:$0xff] %v1506
                %v1508 = vld [vmem:[%s1458 + $0xc0] sm:$0xff]
                %1509 = vst [vmem:[%s1459 + $0x180] sm:$0xff] %v1508
                %v1510 = vld [vmem:[%s1458 + $0xc8] sm:$0xff]
                %1511 = vst [vmem:[%s1459 + $0x188] sm:$0xff] %v1510
                %v1512 = vld [vmem:[%s1458 + $0xd0] sm:$0xff]
                %1513 = vst [vmem:[%s1459 + $0x190] sm:$0xff] %v1512
                %v1514 = vld [vmem:[%s1458 + $0xd8] sm:$0xff]
                %1515 = vst [vmem:[%s1459 + $0x198] sm:$0xff] %v1514
                %v1516 = vld [vmem:[%s1458 + $0xe0] sm:$0xff]
                %1517 = vst [vmem:[%s1459 + $0x1a0] sm:$0xff] %v1516
                %v1518 = vld [vmem:[%s1458 + $0xe8] sm:$0xff]
                %1519 = vst [vmem:[%s1459 + $0x1a8] sm:$0xff] %v1518
                %v1520 = vld [vmem:[%s1458 + $0xf0] sm:$0xff]
                %1521 = vst [vmem:[%s1459 + $0x1b0] sm:$0xff] %v1520
                %v1522 = vld [vmem:[%s1458 + $0xf8] sm:$0xff]
                %1523 = vst [vmem:[%s1459 + $0x1b8] sm:$0xff] %v1522
              $region80: #{decoder_block_forward.6} parent=74 // loop_footer
                %s1457 = sadd.s32 1, %s1453
              $region81: #{decoder_block_forward.6} parent=74 // loop_footer_branch
                %1452 = sbr.rel target = $region77
              $region82: #{decoder_block_forward.6} parent=74 // loop_exit
                _
            $region75: #{decoder_block_forward.6} parent=70 // pred_fallthru
              _
            // Predicated region
            $region83: #{decoder_block_forward.6} parent=70 // pred_check
              _
            $region84: #{decoder_block_forward.6} parent=70 // pred_check_branch
              %1525 = sbr.rel target = $region86
            $region85: #{decoder_block_forward.6} parent=70 // pred_region
              _
            $region86: #{decoder_block_forward.6} parent=70 // pred_fallthru
              _
          $region71: #{decoder_block_forward.6} parent=66 // pred_fallthru
            _
          %1526 = vnop
        $region67: #{decoder_block_forward.6} parent=58 // pred_fallthru
          _
        // Predicated region
        $region87: #{decoder_block_forward.6} parent=58 // pred_check
          %p1527 = pneg %p190
        $region88: #{decoder_block_forward.6} parent=58 // pred_check_branch
          %1529 = sbr.rel (%p1527) target = $region90
        $region89: #{decoder_block_forward.6} parent=58 // pred_region
          _
        $region90: #{decoder_block_forward.6} parent=58 // pred_fallthru
          _
      $region59: #{decoder_block_forward.6} parent=5 // pred_fallthru
        _
      %p1530 = scmp.le.s32.totalorder 2, %s13
      // Predicated region
      $region91: #{decoder_block_forward.6} parent=5 // pred_check
        %p1531 = pneg %p1530
      $region92: #{decoder_block_forward.6} parent=5 // pred_check_branch
        %1533 = sbr.rel (%p1531) target = $region94
      $region93: #{decoder_block_forward.6} parent=5 // pred_region
        %s1534 = ssub.s32 %s13, 2
        // Predicated region
        $region95: #{decoder_block_forward.6} parent=93 // pred_check
          %p1535 = pneg %p168
        $region96: #{decoder_block_forward.6} parent=93 // pred_check_branch
          %1537 = sbr.rel (%p1535) target = $region98
        $region97: #{decoder_block_forward.6} parent=93 // pred_region
          %s1538 = sand.u32 %s153, 1
          %s1539 = sand.u32 %s153, 1
          %s1540 = smul.addr %s1539, 256
          %s1541 = scalar_lea.vmem [#allocation3], %s1540
        $region98: #{decoder_block_forward.6} parent=93 // pred_fallthru
          _
        // Predicated region
        $region99: #{decoder_block_forward.6} parent=93 // pred_check
          %p1542 = pneg %p196
        $region100: #{decoder_block_forward.6} parent=93 // pred_check_branch
          %1544 = sbr.rel (%p1542) target = $region102
        $region101: #{decoder_block_forward.6} parent=93 // pred_region
          %p1545 = scmp.lt.s32.totalorder %s24, 1
          %s1546 = scalar_select %p1545, %s24, 1
          %p1547 = scmp.lt.s32.totalorder %s25, 1
          %s1548 = scalar_select %p1547, %s25, 1
          %s1549 = smul.addr %s1548, 4
          %s1550 = smul.addr %s1546, 8
          %s1551 = sadd.s32 %s1549, %s1550
          %s1552 = smul.addr %s1551, 8
          %s1553 = scalar_lea.vmem %s6, %s1552
        $region102: #{decoder_block_forward.6} parent=93 // pred_fallthru
          _
      $region94: #{decoder_block_forward.6} parent=5 // pred_fallthru
        _
    $region6: #{decoder_block_forward.6} parent=1 // loop_footer
      %s17 = sadd.s32 1, %s13
    $region7: #{decoder_block_forward.6} parent=1 // loop_footer_branch
      %12 = sbr.rel target = $region3
    $region8: #{decoder_block_forward.6} parent=1 // loop_exit
      _

// kernel: decoder_block_forward.7
$region0: #{decoder_block_forward.7}
  #allocation0 [shape = 'u32[]', space=smem, size = 0x4, offset = 0x4, fixed_abs, tag = 'smem constant byte address 0x4 - core index']
  #allocation1 [shape = 'u32[144,128]{1,0:T(1,128)}', space=vmem, size = 0x12000, scoped, tag = 'internal scratch']
  %s0 = inlined_call_operand.vmem [shape: bf16[2,32,4096], index: 0, kind: input, shape index: {}]
  %s1 = inlined_call_operand.vmem [shape: f32[32,1], index: 1, kind: input, shape index: {}]
  %s2 = inlined_call_operand.vmem [shape: f32[32,1], index: 2, kind: input, shape index: {}]
  %s3 = inlined_call_operand.vmem [shape: f32[2,32,4096], index: 3, kind: output, shape index: {}]
  %s4 = sld [smem:[#allocation0]]
  $region87: #{decoder_block_forward.7} parent=0
    _
  %s6 = ssub.s32 1, %s4
  %s7 = scalar_select 0, %s6, %s4
  $region1: #{decoder_block_forward.7} parent=0
    #allocation2 [shape = 'u8[262144]{0}', space=vmem, size = 0x40000, scoped, tag = 'input window, operand 0']
    #allocation3 [shape = 'u8[524288]{0}', space=vmem, size = 0x80000, scoped, tag = 'output window, operand 0']
    loop: start=0, step=1, limit=6
    $region2: #{decoder_block_forward.7} parent=1 // loop_pre_header
      _
    $region3: #{decoder_block_forward.7} parent=1 // loop_header
      %s9 = sphi 0, %s13
      %p10 = scmp.ge.s32.totalorder %s9, 6
      %s16 = sphi 0, %s28
      %s17 = sphi 0, %s24
      %s18 = sphi 0, %s16
      %s19 = sphi 0, %s17
      %s20 = sphi 0, %s18
      %s21 = sphi 0, %s19
      %s33 = sphi 0, %s35
      %s36 = sphi 0, %s33
      %s37 = sphi 0, %s36
      %s53 = sphi 0, %s37
      %s57 = sphi 0, %s57
      %s59 = sphi 0, %s57
      %s60 = sphi 0, %s59
      %s74 = sphi 0, %s60
      %s78 = sphi 0, %s78
      %s80 = sphi 0, %s78
      %s81 = sphi 0, %s80
      %s95 = sphi 0, %s81
      %s103 = sphi 0, %s105
      %s106 = sphi 0, %s103
      %s107 = sphi 0, %s106
      %s123 = sphi 0, %s107
    $region4: #{decoder_block_forward.7} parent=1 // loop_header_branch
      %12 = sbr.rel (%p10) target = $region8
    $region5: #{decoder_block_forward.7} parent=1 // loop_body
      %s14 = ssub.s32 %s9, 1
      %s15 = ssub.s32 %s9, 2
      %s22 = sadd.s32 1, %s17
      %p23 = scmp.ge.s32.totalorder %s22, 2
      %s24 = scalar_select %p23, 0, %s22
      %s25 = sadd.s32 1, %s16
      %s26 = scalar_select %p23, %s25, %s16
      %p27 = scmp.ge.s32.totalorder %s26, 2
      %s28 = scalar_select %p27, 0, %s26
      %s29 = ssub.s32 %s16, %s28
      %s30 = ssub.s32 %s17, %s24
      %s31 = sor.u32 %s29, %s30
      %p32 = scmp.eq.s32.totalorder %s31, 0
      %s34 = sadd.s32 %s33, 1
      %s35 = scalar_select %p32, %s33, %s34
      %p38 = pneg %p32
      %p39 = scmp.eq.s32.totalorder %s9, 3
      %p40 = por %p38, %p39
      %p41 = scmp.ne.s32.totalorder %s33, %s36
      %p42 = scmp.eq.s32.totalorder %s9, 0
      %p43 = por %p41, %p42
      %p44 = scmp.ne.s32.totalorder %s33, %s36
      %p45 = scmp.eq.s32.totalorder %s14, 3
      %p46 = por %p44, %p45
      %p47 = scmp.ne.s32.totalorder %s36, %s37
      %p48 = scmp.eq.s32.totalorder %s14, 0
      %p49 = por %p47, %p48
      %p50 = scmp.ne.s32.totalorder %s36, %s37
      %p51 = scmp.eq.s32.totalorder %s15, 3
      %p52 = por %p50, %p51
      %p54 = scmp.ne.s32.totalorder %s37, %s53
      %p55 = scmp.eq.s32.totalorder %s15, 0
      %p56 = por %p54, %p55
      %s58 = sadd.s32 %s57, 1
      %p61 = scmp.eq.s32.totalorder %s9, 3
      %p62 = scmp.ne.s32.totalorder %s57, %s59
      %p63 = scmp.eq.s32.totalorder %s9, 0
      %p64 = por %p62, %p63
      %p65 = scmp.ne.s32.totalorder %s57, %s59
      %p66 = scmp.eq.s32.totalorder %s14, 3
      %p67 = por %p65, %p66
      %p68 = scmp.ne.s32.totalorder %s59, %s60
      %p69 = scmp.eq.s32.totalorder %s14, 0
      %p70 = por %p68, %p69
      %p71 = scmp.ne.s32.totalorder %s59, %s60
      %p72 = scmp.eq.s32.totalorder %s15, 3
      %p73 = por %p71, %p72
      %p75 = scmp.ne.s32.totalorder %s60, %s74
      %p76 = scmp.eq.s32.totalorder %s15, 0
      %p77 = por %p75, %p76
      %s79 = sadd.s32 %s78, 1
      %p82 = scmp.eq.s32.totalorder %s9, 3
      %p83 = scmp.ne.s32.totalorder %s78, %s80
      %p84 = scmp.eq.s32.totalorder %s9, 0
      %p85 = por %p83, %p84
      %p86 = scmp.ne.s32.totalorder %s78, %s80
      %p87 = scmp.eq.s32.totalorder %s14, 3
      %p88 = por %p86, %p87
      %p89 = scmp.ne.s32.totalorder %s80, %s81
      %p90 = scmp.eq.s32.totalorder %s14, 0
      %p91 = por %p89, %p90
      %p92 = scmp.ne.s32.totalorder %s80, %s81
      %p93 = scmp.eq.s32.totalorder %s15, 3
      %p94 = por %p92, %p93
      %p96 = scmp.ne.s32.totalorder %s81, %s95
      %p97 = scmp.eq.s32.totalorder %s15, 0
      %p98 = por %p96, %p97
      %s99 = ssub.s32 %s16, %s28
      %s100 = ssub.s32 %s17, %s24
      %s101 = sor.u32 %s99, %s100
      %p102 = scmp.eq.s32.totalorder %s101, 0
      %s104 = sadd.s32 %s103, 1
      %s105 = scalar_select %p102, %s103, %s104
      %p108 = pneg %p102
      %p109 = scmp.eq.s32.totalorder %s9, 3
      %p110 = por %p108, %p109
      %p111 = scmp.ne.s32.totalorder %s103, %s106
      %p112 = scmp.eq.s32.totalorder %s9, 0
      %p113 = por %p111, %p112
      %p114 = scmp.ne.s32.totalorder %s103, %s106
      %p115 = scmp.eq.s32.totalorder %s14, 3
      %p116 = por %p114, %p115
      %p117 = scmp.ne.s32.totalorder %s106, %s107
      %p118 = scmp.eq.s32.totalorder %s14, 0
      %p119 = por %p117, %p118
      %p120 = scmp.ne.s32.totalorder %s106, %s107
      %p121 = scmp.eq.s32.totalorder %s15, 3
      %p122 = por %p120, %p121
      %p124 = scmp.ne.s32.totalorder %s107, %s123
      %p125 = scmp.eq.s32.totalorder %s15, 0
      %p126 = por %p124, %p125
      %p127 = scmp.le.s32.totalorder 1, %s9
      %p128 = scmp.lt.s32.totalorder %s9, 5
      %p129 = pnand %p127, %p128
      %p130 = pneg %p129
      // Predicated region
      $region9: #{decoder_block_forward.7} parent=5 // pred_check
        _
      $region10: #{decoder_block_forward.7} parent=5 // pred_check_branch
        %132 = sbr.rel (%p129) target = $region12
      $region11: #{decoder_block_forward.7} parent=5 // pred_region
        %s133 = ssub.s32 %s9, 1
        // Predicated region
        $region13: #{decoder_block_forward.7} parent=11 // pred_check
          %p134 = pneg %p70
        $region14: #{decoder_block_forward.7} parent=11 // pred_check_branch
          %136 = sbr.rel (%p134) target = $region16
        $region15: #{decoder_block_forward.7} parent=11 // pred_region
          _
        $region16: #{decoder_block_forward.7} parent=11 // pred_fallthru
          _
        // Predicated region
        $region17: #{decoder_block_forward.7} parent=11 // pred_check
          %p137 = pneg %p91
        $region18: #{decoder_block_forward.7} parent=11 // pred_check_branch
          %139 = sbr.rel (%p137) target = $region20
        $region19: #{decoder_block_forward.7} parent=11 // pred_region
          _
        $region20: #{decoder_block_forward.7} parent=11 // pred_fallthru
          _
      $region12: #{decoder_block_forward.7} parent=5 // pred_fallthru
        _
      %p140 = scmp.lt.s32.totalorder %s9, 4
      // Predicated region
      $region21: #{decoder_block_forward.7} parent=5 // pred_check
        %p141 = pneg %p140
      $region22: #{decoder_block_forward.7} parent=5 // pred_check_branch
        %143 = sbr.rel (%p141) target = $region24
      $region23: #{decoder_block_forward.7} parent=5 // pred_region
        // Predicated region
        $region25: #{decoder_block_forward.7} parent=23 // pred_check
          %p144 = pneg %p43
        $region26: #{decoder_block_forward.7} parent=23 // pred_check_branch
          %146 = sbr.rel (%p144) target = $region28
        $region27: #{decoder_block_forward.7} parent=23 // pred_region
          %s147 = sand.u32 %s33, 1
          %s148 = sand.u32 %s33, 1
          %s149 = smul.addr %s148, 256
          %s150 = scalar_lea.vmem [#allocation2], %s149
          %s151 = smul.u32 16, %s17
          %s152 = smul.addr %s16, 128
          %s153 = sadd.s32 %s151, %s152
          %s154 = smul.addr %s153, 4
          %s155 = scalar_lea.vmem %s0, %s154
          // Predicated region
          $region29: #{decoder_block_forward.7} parent=27 // pred_check
            _
          $region30: #{decoder_block_forward.7} parent=27 // pred_check_branch
            %157 = sbr.rel (0) target = $region32
          $region31: #{decoder_block_forward.7} parent=27 // pred_region
            // Predicated region
            $region33: #{decoder_block_forward.7} parent=31 // pred_check
              _
            $region34: #{decoder_block_forward.7} parent=31 // pred_check_branch
              %159 = sbr.rel (0) target = $region36
            $region35: #{decoder_block_forward.7} parent=31 // pred_region
              loop: start=0, step=1, limit=1
              $region37: #{decoder_block_forward.7} parent=35 // loop_pre_header
                _
              $region38: #{decoder_block_forward.7} parent=35 // loop_header
                %s161 = sphi 0, %s165
                %p162 = scmp.ge.s32.totalorder %s161, 1
                %s166 = sphi %s155, %s155
                %s167 = sphi %s150, %s150
              $region39: #{decoder_block_forward.7} parent=35 // loop_header_branch
                %164 = sbr.rel (%p162) target = $region43
              $region40: #{decoder_block_forward.7} parent=35 // loop_body
                %v168 = vld [vmem:[%s166] sm:$0xff]
                %169 = vst [vmem:[%s167] sm:$0xff] %v168
                %v170 = vld [vmem:[%s166 + $0x8] sm:$0xff]
                %171 = vst [vmem:[%s167 + $0x8] sm:$0xff] %v170
                %v172 = vld [vmem:[%s166 + $0x10] sm:$0xff]
                %173 = vst [vmem:[%s167 + $0x10] sm:$0xff] %v172
                %v174 = vld [vmem:[%s166 + $0x18] sm:$0xff]
                %175 = vst [vmem:[%s167 + $0x18] sm:$0xff] %v174
                %v176 = vld [vmem:[%s166 + $0x20] sm:$0xff]
                %177 = vst [vmem:[%s167 + $0x20] sm:$0xff] %v176
                %v178 = vld [vmem:[%s166 + $0x28] sm:$0xff]
                %179 = vst [vmem:[%s167 + $0x28] sm:$0xff] %v178
                %v180 = vld [vmem:[%s166 + $0x30] sm:$0xff]
                %181 = vst [vmem:[%s167 + $0x30] sm:$0xff] %v180
                %v182 = vld [vmem:[%s166 + $0x38] sm:$0xff]
                %183 = vst [vmem:[%s167 + $0x38] sm:$0xff] %v182
                %v184 = vld [vmem:[%s166 + $0x80] sm:$0xff]
                %185 = vst [vmem:[%s167 + $0x40] sm:$0xff] %v184
                %v186 = vld [vmem:[%s166 + $0x88] sm:$0xff]
                %187 = vst [vmem:[%s167 + $0x48] sm:$0xff] %v186
                %v188 = vld [vmem:[%s166 + $0x90] sm:$0xff]
                %189 = vst [vmem:[%s167 + $0x50] sm:$0xff] %v188
                %v190 = vld [vmem:[%s166 + $0x98] sm:$0xff]
                %191 = vst [vmem:[%s167 + $0x58] sm:$0xff] %v190
                %v192 = vld [vmem:[%s166 + $0xa0] sm:$0xff]
                %193 = vst [vmem:[%s167 + $0x60] sm:$0xff] %v192
                %v194 = vld [vmem:[%s166 + $0xa8] sm:$0xff]
                %195 = vst [vmem:[%s167 + $0x68] sm:$0xff] %v194
                %v196 = vld [vmem:[%s166 + $0xb0] sm:$0xff]
                %197 = vst [vmem:[%s167 + $0x70] sm:$0xff] %v196
                %v198 = vld [vmem:[%s166 + $0xb8] sm:$0xff]
                %199 = vst [vmem:[%s167 + $0x78] sm:$0xff] %v198
                %v200 = vld [vmem:[%s166 + $0x100] sm:$0xff]
                %201 = vst [vmem:[%s167 + $0x80] sm:$0xff] %v200
                %v202 = vld [vmem:[%s166 + $0x108] sm:$0xff]
                %203 = vst [vmem:[%s167 + $0x88] sm:$0xff] %v202
                %v204 = vld [vmem:[%s166 + $0x110] sm:$0xff]
                %205 = vst [vmem:[%s167 + $0x90] sm:$0xff] %v204
                %v206 = vld [vmem:[%s166 + $0x118] sm:$0xff]
                %207 = vst [vmem:[%s167 + $0x98] sm:$0xff] %v206
                %v208 = vld [vmem:[%s166 + $0x120] sm:$0xff]
                %209 = vst [vmem:[%s167 + $0xa0] sm:$0xff] %v208
                %v210 = vld [vmem:[%s166 + $0x128] sm:$0xff]
                %211 = vst [vmem:[%s167 + $0xa8] sm:$0xff] %v210
                %v212 = vld [vmem:[%s166 + $0x130] sm:$0xff]
                %213 = vst [vmem:[%s167 + $0xb0] sm:$0xff] %v212
                %v214 = vld [vmem:[%s166 + $0x138] sm:$0xff]
                %215 = vst [vmem:[%s167 + $0xb8] sm:$0xff] %v214
                %v216 = vld [vmem:[%s166 + $0x180] sm:$0xff]
                %217 = vst [vmem:[%s167 + $0xc0] sm:$0xff] %v216
                %v218 = vld [vmem:[%s166 + $0x188] sm:$0xff]
                %219 = vst [vmem:[%s167 + $0xc8] sm:$0xff] %v218
                %v220 = vld [vmem:[%s166 + $0x190] sm:$0xff]
                %221 = vst [vmem:[%s167 + $0xd0] sm:$0xff] %v220
                %v222 = vld [vmem:[%s166 + $0x198] sm:$0xff]
                %223 = vst [vmem:[%s167 + $0xd8] sm:$0xff] %v222
                %v224 = vld [vmem:[%s166 + $0x1a0] sm:$0xff]
                %225 = vst [vmem:[%s167 + $0xe0] sm:$0xff] %v224
                %v226 = vld [vmem:[%s166 + $0x1a8] sm:$0xff]
                %227 = vst [vmem:[%s167 + $0xe8] sm:$0xff] %v226
                %v228 = vld [vmem:[%s166 + $0x1b0] sm:$0xff]
                %229 = vst [vmem:[%s167 + $0xf0] sm:$0xff] %v228
                %v230 = vld [vmem:[%s166 + $0x1b8] sm:$0xff]
                %231 = vst [vmem:[%s167 + $0xf8] sm:$0xff] %v230
              $region41: #{decoder_block_forward.7} parent=35 // loop_footer
                %s165 = sadd.s32 1, %s161
              $region42: #{decoder_block_forward.7} parent=35 // loop_footer_branch
                %160 = sbr.rel target = $region38
              $region43: #{decoder_block_forward.7} parent=35 // loop_exit
                _
            $region36: #{decoder_block_forward.7} parent=31 // pred_fallthru
              _
            // Predicated region
            $region44: #{decoder_block_forward.7} parent=31 // pred_check
              _
            $region45: #{decoder_block_forward.7} parent=31 // pred_check_branch
              %233 = sbr.rel target = $region47
            $region46: #{decoder_block_forward.7} parent=31 // pred_region
              _
            $region47: #{decoder_block_forward.7} parent=31 // pred_fallthru
              _
          $region32: #{decoder_block_forward.7} parent=27 // pred_fallthru
            _
          %234 = vnop
        $region28: #{decoder_block_forward.7} parent=23 // pred_fallthru
          _
      $region24: #{decoder_block_forward.7} parent=5 // pred_fallthru
        _
      %p235 = scmp.le.s32.totalorder 1, %s9
      %p236 = scmp.lt.s32.totalorder %s9, 5
      %p237 = pnand %p235, %p236
      %p238 = pneg %p237
      // Predicated region
      $region48: #{decoder_block_forward.7} parent=5 // pred_check
        _
      $region49: #{decoder_block_forward.7} parent=5 // pred_check_branch
        %240 = sbr.rel (%p237) target = $region51
      $region50: #{decoder_block_forward.7} parent=5 // pred_region
        %s241 = ssub.s32 %s9, 1
        %s242 = sand.u32 %s36, 1
        %s243 = sand.u32 %s36, 1
        %s244 = smul.addr %s243, 256
        %s245 = scalar_lea.vmem [#allocation2], %s244
        // Predicated region
        $region52: #{decoder_block_forward.7} parent=50 // pred_check
          %p246 = pneg %p49
        $region53: #{decoder_block_forward.7} parent=50 // pred_check_branch
          %248 = sbr.rel (%p246) target = $region55
        $region54: #{decoder_block_forward.7} parent=50 // pred_region
          _
        $region55: #{decoder_block_forward.7} parent=50 // pred_fallthru
          _
        %s249 = sand.u32 %s36, 1
        %s250 = sand.u32 %s36, 1
        %s251 = smul.addr %s250, 256
        %s252 = scalar_lea.vmem [#allocation2], %s251
        %p253 = pneg %p49
        %p254 = pneg %p46
        %p255 = pneg %p70
        %p256 = pneg %p67
        %p257 = pneg %p91
        %p258 = pneg %p88
        %p259 = pneg %p119
        %p260 = pneg %p116
        %s261 = sand.u32 %s106, 1
        %s262 = sand.u32 %s106, 1
        %s263 = smul.addr %s262, 512
        %s264 = scalar_lea.vmem [#allocation3], %s263
        %s265 = smul.u32 16, %s19
        %s266 = smul.u32 16, %s19
        %v267 = vld [vmem:[%s245] sm:$0xff]
        %v268 = vld [vmem:[%s245 + $0x8] sm:$0xff]
        %v269 = vld [vmem:[%s245 + $0x10] sm:$0xff]
        %v270 = vld [vmem:[%s245 + $0x18] sm:$0xff]
        %v271 = vld [vmem:[%s245 + $0x20] sm:$0xff]
        %v272 = vld [vmem:[%s245 + $0x28] sm:$0xff]
        %v273 = vld [vmem:[%s245 + $0x30] sm:$0xff]
        %v274 = vld [vmem:[%s245 + $0x38] sm:$0xff]
        %v275 = vld [vmem:[%s245 + $0x40] sm:$0xff]
        %v276 = vld [vmem:[%s245 + $0x48] sm:$0xff]
        %v277 = vld [vmem:[%s245 + $0x50] sm:$0xff]
        %v278 = vld [vmem:[%s245 + $0x58] sm:$0xff]
        %v279 = vld [vmem:[%s245 + $0x60] sm:$0xff]
        %v280 = vld [vmem:[%s245 + $0x68] sm:$0xff]
        %v281 = vld [vmem:[%s245 + $0x70] sm:$0xff]
        %v282 = vld [vmem:[%s245 + $0x78] sm:$0xff]
        %v283 = vld [vmem:[%s245 + $0x80] sm:$0xff]
        %v284 = vld [vmem:[%s245 + $0x88] sm:$0xff]
        %v285 = vld [vmem:[%s245 + $0x90] sm:$0xff]
        %v286 = vld [vmem:[%s245 + $0x98] sm:$0xff]
        %v287 = vld [vmem:[%s245 + $0xa0] sm:$0xff]
        %v288 = vld [vmem:[%s245 + $0xa8] sm:$0xff]
        %v289 = vld [vmem:[%s245 + $0xb0] sm:$0xff]
        %v290 = vld [vmem:[%s245 + $0xb8] sm:$0xff]
        %v291 = vld [vmem:[%s245 + $0xc0] sm:$0xff]
        %v292 = vld [vmem:[%s245 + $0xc8] sm:$0xff]
        %v293 = vld [vmem:[%s245 + $0xd0] sm:$0xff]
        %v294 = vld [vmem:[%s245 + $0xd8] sm:$0xff]
        %v295 = vld [vmem:[%s245 + $0xe0] sm:$0xff]
        %v296 = vld [vmem:[%s245 + $0xe8] sm:$0xff]
        %v297 = vld [vmem:[%s245 + $0xf0] sm:$0xff]
        %v298 = vld [vmem:[%s245 + $0xf8] sm:$0xff]
        %v299 = vunpack.c.l.bf16 %v267
        %v300 = vunpack.c.h.bf16 %v267
        %v301 = vunpack.c.l.bf16 %v268
        %v302 = vunpack.c.h.bf16 %v268
        %v303 = vunpack.c.l.bf16 %v269
        %v304 = vunpack.c.h.bf16 %v269
        %v305 = vunpack.c.l.bf16 %v270
        %v306 = vunpack.c.h.bf16 %v270
        %v307 = vunpack.c.l.bf16 %v271
        %v308 = vunpack.c.h.bf16 %v271
        %v309 = vunpack.c.l.bf16 %v272
        %v310 = vunpack.c.h.bf16 %v272
        %v311 = vunpack.c.l.bf16 %v273
        %v312 = vunpack.c.h.bf16 %v273
        %v313 = vunpack.c.l.bf16 %v274
        %v314 = vunpack.c.h.bf16 %v274
        %v315 = vunpack.c.l.bf16 %v275
        %v316 = vunpack.c.h.bf16 %v275
        %v317 = vunpack.c.l.bf16 %v276
        %v318 = vunpack.c.h.bf16 %v276
        %v319 = vunpack.c.l.bf16 %v277
        %v320 = vunpack.c.h.bf16 %v277
        %v321 = vunpack.c.l.bf16 %v278
        %v322 = vunpack.c.h.bf16 %v278
        %v323 = vunpack.c.l.bf16 %v279
        %v324 = vunpack.c.h.bf16 %v279
        %v325 = vunpack.c.l.bf16 %v280
        %v326 = vunpack.c.h.bf16 %v280
        %v327 = vunpack.c.l.bf16 %v281
        %v328 = vunpack.c.h.bf16 %v281
        %v329 = vunpack.c.l.bf16 %v282
        %v330 = vunpack.c.h.bf16 %v282
        %v331 = vunpack.c.l.bf16 %v283
        %v332 = vunpack.c.h.bf16 %v283
        %v333 = vunpack.c.l.bf16 %v284
        %v334 = vunpack.c.h.bf16 %v284
        %v335 = vunpack.c.l.bf16 %v285
        %v336 = vunpack.c.h.bf16 %v285
        %v337 = vunpack.c.l.bf16 %v286
        %v338 = vunpack.c.h.bf16 %v286
        %v339 = vunpack.c.l.bf16 %v287
        %v340 = vunpack.c.h.bf16 %v287
        %v341 = vunpack.c.l.bf16 %v288
        %v342 = vunpack.c.h.bf16 %v288
        %v343 = vunpack.c.l.bf16 %v289
        %v344 = vunpack.c.h.bf16 %v289
        %v345 = vunpack.c.l.bf16 %v290
        %v346 = vunpack.c.h.bf16 %v290
        %v347 = vunpack.c.l.bf16 %v291
        %v348 = vunpack.c.h.bf16 %v291
        %v349 = vunpack.c.l.bf16 %v292
        %v350 = vunpack.c.h.bf16 %v292
        %v351 = vunpack.c.l.bf16 %v293
        %v352 = vunpack.c.h.bf16 %v293
        %v353 = vunpack.c.l.bf16 %v294
        %v354 = vunpack.c.h.bf16 %v294
        %v355 = vunpack.c.l.bf16 %v295
        %v356 = vunpack.c.h.bf16 %v295
        %v357 = vunpack.c.l.bf16 %v296
        %v358 = vunpack.c.h.bf16 %v296
        %v359 = vunpack.c.l.bf16 %v297
        %v360 = vunpack.c.h.bf16 %v297
        %v361 = vunpack.c.l.bf16 %v298
        %v362 = vunpack.c.h.bf16 %v298
        %v363 = vld [vmem:[%s1] sm:$0xff]
        %v364 = vld [vmem:[%s1 + $0x8] sm:$0xff]
        %v365 = vld [vmem:[%s1 + $0x10] sm:$0xff]
        %v366 = vld [vmem:[%s1 + $0x18] sm:$0xff]
        %368 = vset.pattern.permute.xlu0 0
        %369 = vperm.xlu0 %368, %v363
        %v370 = vpop.permute.xlu0 %369
        %373 = vset.pattern.permute.xlu0 0
        %374 = vperm.xlu0 %373, %v364
        %v375 = vpop.permute.xlu0 %374
        %378 = vset.pattern.permute.xlu0 0
        %379 = vperm.xlu0 %378, %v365
        %v380 = vpop.permute.xlu0 %379
        %383 = vset.pattern.permute.xlu0 0
        %384 = vperm.xlu0 %383, %v366
        %v385 = vpop.permute.xlu0 %384
        %v387 = vmul.f32 %v299, %v370
        %v388 = vmul.f32 %v300, %v370
        %v389 = vmul.f32 %v301, %v370
        %v390 = vmul.f32 %v302, %v370
        %v391 = vmul.f32 %v303, %v370
        %v392 = vmul.f32 %v304, %v370
        %v393 = vmul.f32 %v305, %v370
        %v394 = vmul.f32 %v306, %v370
        %v395 = vmul.f32 %v307, %v370
        %v396 = vmul.f32 %v308, %v370
        %v397 = vmul.f32 %v309, %v370
        %v398 = vmul.f32 %v310, %v370
        %v399 = vmul.f32 %v311, %v370
        %v400 = vmul.f32 %v312, %v370
        %v401 = vmul.f32 %v313, %v370
        %v402 = vmul.f32 %v314, %v370
        %v403 = vmul.f32 %v315, %v375
        %v404 = vmul.f32 %v316, %v375
        %v405 = vmul.f32 %v317, %v375
        %v406 = vmul.f32 %v318, %v375
        %v407 = vmul.f32 %v319, %v375
        %v408 = vmul.f32 %v320, %v375
        %v409 = vmul.f32 %v321, %v375
        %v410 = vmul.f32 %v322, %v375
        %v411 = vmul.f32 %v323, %v375
        %v412 = vmul.f32 %v324, %v375
        %v413 = vmul.f32 %v325, %v375
        %v414 = vmul.f32 %v326, %v375
        %v415 = vmul.f32 %v327, %v375
        %v416 = vmul.f32 %v328, %v375
        %v417 = vmul.f32 %v329, %v375
        %v418 = vmul.f32 %v330, %v375
        %v419 = vmul.f32 %v331, %v380
        %v420 = vmul.f32 %v332, %v380
        %v421 = vmul.f32 %v333, %v380
        %v422 = vmul.f32 %v334, %v380
        %v423 = vmul.f32 %v335, %v380
        %v424 = vmul.f32 %v336, %v380
        %v425 = vmul.f32 %v337, %v380
        %v426 = vmul.f32 %v338, %v380
        %v427 = vmul.f32 %v339, %v380
        %v428 = vmul.f32 %v340, %v380
        %v429 = vmul.f32 %v341, %v380
        %v430 = vmul.f32 %v342, %v380
        %v431 = vmul.f32 %v343, %v380
        %v432 = vmul.f32 %v344, %v380
        %v433 = vmul.f32 %v345, %v380
        %v434 = vmul.f32 %v346, %v380
        %v435 = vmul.f32 %v347, %v385
        %v436 = vmul.f32 %v348, %v385
        %v437 = vmul.f32 %v349, %v385
        %v438 = vmul.f32 %v350, %v385
        %v439 = vmul.f32 %v351, %v385
        %v440 = vmul.f32 %v352, %v385
        %v441 = vmul.f32 %v353, %v385
        %v442 = vmul.f32 %v354, %v385
        %v443 = vmul.f32 %v355, %v385
        %v444 = vmul.f32 %v356, %v385
        %v445 = vmul.f32 %v357, %v385
        %v446 = vmul.f32 %v358, %v385
        %v447 = vmul.f32 %v359, %v385
        %v448 = vmul.f32 %v360, %v385
        %v449 = vmul.f32 %v361, %v385
        %v450 = vmul.f32 %v362, %v385
        %v451 = vld [vmem:[%s2] sm:$0xff]
        %v452 = vld [vmem:[%s2 + $0x8] sm:$0xff]
        %v453 = vld [vmem:[%s2 + $0x10] sm:$0xff]
        %v454 = vld [vmem:[%s2 + $0x18] sm:$0xff]
        %456 = vset.pattern.permute.xlu0 0
        %457 = vperm.xlu0 %456, %v451
        %v458 = vpop.permute.xlu0 %457
        %461 = vset.pattern.permute.xlu0 0
        %462 = vperm.xlu0 %461, %v452
        %v463 = vpop.permute.xlu0 %462
        %466 = vset.pattern.permute.xlu0 0
        %467 = vperm.xlu0 %466, %v453
        %v468 = vpop.permute.xlu0 %467
        %471 = vset.pattern.permute.xlu0 0
        %472 = vperm.xlu0 %471, %v454
        %v473 = vpop.permute.xlu0 %472
        %v475 = vadd.f32 %v387, %v458
        %v476 = vadd.f32 %v388, %v458
        %v477 = vadd.f32 %v389, %v458
        %v478 = vadd.f32 %v390, %v458
        %v479 = vadd.f32 %v391, %v458
        %v480 = vadd.f32 %v392, %v458
        %v481 = vadd.f32 %v393, %v458
        %v482 = vadd.f32 %v394, %v458
        %v483 = vadd.f32 %v395, %v458
        %v484 = vadd.f32 %v396, %v458
        %v485 = vadd.f32 %v397, %v458
        %v486 = vadd.f32 %v398, %v458
        %v487 = vadd.f32 %v399, %v458
        %v488 = vadd.f32 %v400, %v458
        %v489 = vadd.f32 %v401, %v458
        %v490 = vadd.f32 %v402, %v458
        %v491 = vadd.f32 %v403, %v463
        %v492 = vadd.f32 %v404, %v463
        %v493 = vadd.f32 %v405, %v463
        %v494 = vadd.f32 %v406, %v463
        %v495 = vadd.f32 %v407, %v463
        %v496 = vadd.f32 %v408, %v463
        %v497 = vadd.f32 %v409, %v463
        %v498 = vadd.f32 %v410, %v463
        %v499 = vadd.f32 %v411, %v463
        %v500 = vadd.f32 %v412, %v463
        %v501 = vadd.f32 %v413, %v463
        %v502 = vadd.f32 %v414, %v463
        %v503 = vadd.f32 %v415, %v463
        %v504 = vadd.f32 %v416, %v463
        %v505 = vadd.f32 %v417, %v463
        %v506 = vadd.f32 %v418, %v463
        %v507 = vadd.f32 %v419, %v468
        %v508 = vadd.f32 %v420, %v468
        %v509 = vadd.f32 %v421, %v468
        %v510 = vadd.f32 %v422, %v468
        %v511 = vadd.f32 %v423, %v468
        %v512 = vadd.f32 %v424, %v468
        %v513 = vadd.f32 %v425, %v468
        %v514 = vadd.f32 %v426, %v468
        %v515 = vadd.f32 %v427, %v468
        %v516 = vadd.f32 %v428, %v468
        %v517 = vadd.f32 %v429, %v468
        %v518 = vadd.f32 %v430, %v468
        %v519 = vadd.f32 %v431, %v468
        %v520 = vadd.f32 %v432, %v468
        %v521 = vadd.f32 %v433, %v468
        %v522 = vadd.f32 %v434, %v468
        %v523 = vadd.f32 %v435, %v473
        %v524 = vadd.f32 %v436, %v473
        %v525 = vadd.f32 %v437, %v473
        %v526 = vadd.f32 %v438, %v473
        %v527 = vadd.f32 %v439, %v473
        %v528 = vadd.f32 %v440, %v473
        %v529 = vadd.f32 %v441, %v473
        %v530 = vadd.f32 %v442, %v473
        %v531 = vadd.f32 %v443, %v473
        %v532 = vadd.f32 %v444, %v473
        %v533 = vadd.f32 %v445, %v473
        %v534 = vadd.f32 %v446, %v473
        %v535 = vadd.f32 %v447, %v473
        %v536 = vadd.f32 %v448, %v473
        %v537 = vadd.f32 %v449, %v473
        %v538 = vadd.f32 %v450, %v473
        %v539 = vmax.f32 %v475, 0.0
        %v540 = vmax.f32 %v476, 0.0
        %v541 = vmax.f32 %v477, 0.0
        %v542 = vmax.f32 %v478, 0.0
        %v543 = vmax.f32 %v479, 0.0
        %v544 = vmax.f32 %v480, 0.0
        %v545 = vmax.f32 %v481, 0.0
        %v546 = vmax.f32 %v482, 0.0
        %v547 = vmax.f32 %v483, 0.0
        %v548 = vmax.f32 %v484, 0.0
        %v549 = vmax.f32 %v485, 0.0
        %v550 = vmax.f32 %v486, 0.0
        %v551 = vmax.f32 %v487, 0.0
        %v552 = vmax.f32 %v488, 0.0
        %v553 = vmax.f32 %v489, 0.0
        %v554 = vmax.f32 %v490, 0.0
        %v555 = vmax.f32 %v491, 0.0
        %v556 = vmax.f32 %v492, 0.0
        %v557 = vmax.f32 %v493, 0.0
        %v558 = vmax.f32 %v494, 0.0
        %v559 = vmax.f32 %v495, 0.0
        %v560 = vmax.f32 %v496, 0.0
        %v561 = vmax.f32 %v497, 0.0
        %v562 = vmax.f32 %v498, 0.0
        %v563 = vmax.f32 %v499, 0.0
        %v564 = vmax.f32 %v500, 0.0
        %v565 = vmax.f32 %v501, 0.0
        %v566 = vmax.f32 %v502, 0.0
        %v567 = vmax.f32 %v503, 0.0
        %v568 = vmax.f32 %v504, 0.0
        %v569 = vmax.f32 %v505, 0.0
        %v570 = vmax.f32 %v506, 0.0
        %v571 = vmax.f32 %v507, 0.0
        %v572 = vmax.f32 %v508, 0.0
        %v573 = vmax.f32 %v509, 0.0
        %v574 = vmax.f32 %v510, 0.0
        %v575 = vmax.f32 %v511, 0.0
        %v576 = vmax.f32 %v512, 0.0
        %v577 = vmax.f32 %v513, 0.0
        %v578 = vmax.f32 %v514, 0.0
        %v579 = vmax.f32 %v515, 0.0
        %v580 = vmax.f32 %v516, 0.0
        %v581 = vmax.f32 %v517, 0.0
        %v582 = vmax.f32 %v518, 0.0
        %v583 = vmax.f32 %v519, 0.0
        %v584 = vmax.f32 %v520, 0.0
        %v585 = vmax.f32 %v521, 0.0
        %v586 = vmax.f32 %v522, 0.0
        %v587 = vmax.f32 %v523, 0.0
        %v588 = vmax.f32 %v524, 0.0
        %v589 = vmax.f32 %v525, 0.0
        %v590 = vmax.f32 %v526, 0.0
        %v591 = vmax.f32 %v527, 0.0
        %v592 = vmax.f32 %v528, 0.0
        %v593 = vmax.f32 %v529, 0.0
        %v594 = vmax.f32 %v530, 0.0
        %v595 = vmax.f32 %v531, 0.0
        %v596 = vmax.f32 %v532, 0.0
        %v597 = vmax.f32 %v533, 0.0
        %v598 = vmax.f32 %v534, 0.0
        %v599 = vmax.f32 %v535, 0.0
        %v600 = vmax.f32 %v536, 0.0
        %v601 = vmax.f32 %v537, 0.0
        %v602 = vmax.f32 %v538, 0.0
        %603 = vst [vmem:[%s264] sm:$0xff] %v539
        %604 = vst [vmem:[%s264 + $0x8] sm:$0xff] %v540
        %605 = vst [vmem:[%s264 + $0x10] sm:$0xff] %v541
        %606 = vst [vmem:[%s264 + $0x18] sm:$0xff] %v542
        %607 = vst [vmem:[%s264 + $0x20] sm:$0xff] %v543
        %608 = vst [vmem:[%s264 + $0x28] sm:$0xff] %v544
        %609 = vst [vmem:[%s264 + $0x30] sm:$0xff] %v545
        %610 = vst [vmem:[%s264 + $0x38] sm:$0xff] %v546
        %611 = vst [vmem:[%s264 + $0x40] sm:$0xff] %v547
        %612 = vst [vmem:[%s264 + $0x48] sm:$0xff] %v548
        %613 = vst [vmem:[%s264 + $0x50] sm:$0xff] %v549
        %614 = vst [vmem:[%s264 + $0x58] sm:$0xff] %v550
        %615 = vst [vmem:[%s264 + $0x60] sm:$0xff] %v551
        %616 = vst [vmem:[%s264 + $0x68] sm:$0xff] %v552
        %617 = vst [vmem:[%s264 + $0x70] sm:$0xff] %v553
        %618 = vst [vmem:[%s264 + $0x78] sm:$0xff] %v554
        %619 = vst [vmem:[%s264 + $0x80] sm:$0xff] %v555
        %620 = vst [vmem:[%s264 + $0x88] sm:$0xff] %v556
        %621 = vst [vmem:[%s264 + $0x90] sm:$0xff] %v557
        %622 = vst [vmem:[%s264 + $0x98] sm:$0xff] %v558
        %623 = vst [vmem:[%s264 + $0xa0] sm:$0xff] %v559
        %624 = vst [vmem:[%s264 + $0xa8] sm:$0xff] %v560
        %625 = vst [vmem:[%s264 + $0xb0] sm:$0xff] %v561
        %626 = vst [vmem:[%s264 + $0xb8] sm:$0xff] %v562
        %627 = vst [vmem:[%s264 + $0xc0] sm:$0xff] %v563
        %628 = vst [vmem:[%s264 + $0xc8] sm:$0xff] %v564
        %629 = vst [vmem:[%s264 + $0xd0] sm:$0xff] %v565
        %630 = vst [vmem:[%s264 + $0xd8] sm:$0xff] %v566
        %631 = vst [vmem:[%s264 + $0xe0] sm:$0xff] %v567
        %632 = vst [vmem:[%s264 + $0xe8] sm:$0xff] %v568
        %633 = vst [vmem:[%s264 + $0xf0] sm:$0xff] %v569
        %634 = vst [vmem:[%s264 + $0xf8] sm:$0xff] %v570
        %635 = vst [vmem:[%s264 + $0x100] sm:$0xff] %v571
        %636 = vst [vmem:[%s264 + $0x108] sm:$0xff] %v572
        %637 = vst [vmem:[%s264 + $0x110] sm:$0xff] %v573
        %638 = vst [vmem:[%s264 + $0x118] sm:$0xff] %v574
        %639 = vst [vmem:[%s264 + $0x120] sm:$0xff] %v575
        %640 = vst [vmem:[%s264 + $0x128] sm:$0xff] %v576
        %641 = vst [vmem:[%s264 + $0x130] sm:$0xff] %v577
        %642 = vst [vmem:[%s264 + $0x138] sm:$0xff] %v578
        %643 = vst [vmem:[%s264 + $0x140] sm:$0xff] %v579
        %644 = vst [vmem:[%s264 + $0x148] sm:$0xff] %v580
        %645 = vst [vmem:[%s264 + $0x150] sm:$0xff] %v581
        %646 = vst [vmem:[%s264 + $0x158] sm:$0xff] %v582
        %647 = vst [vmem:[%s264 + $0x160] sm:$0xff] %v583
        %648 = vst [vmem:[%s264 + $0x168] sm:$0xff] %v584
        %649 = vst [vmem:[%s264 + $0x170] sm:$0xff] %v585
        %650 = vst [vmem:[%s264 + $0x178] sm:$0xff] %v586
        %651 = vst [vmem:[%s264 + $0x180] sm:$0xff] %v587
        %652 = vst [vmem:[%s264 + $0x188] sm:$0xff] %v588
        %653 = vst [vmem:[%s264 + $0x190] sm:$0xff] %v589
        %654 = vst [vmem:[%s264 + $0x198] sm:$0xff] %v590
        %655 = vst [vmem:[%s264 + $0x1a0] sm:$0xff] %v591
        %656 = vst [vmem:[%s264 + $0x1a8] sm:$0xff] %v592
        %657 = vst [vmem:[%s264 + $0x1b0] sm:$0xff] %v593
        %658 = vst [vmem:[%s264 + $0x1b8] sm:$0xff] %v594
        %659 = vst [vmem:[%s264 + $0x1c0] sm:$0xff] %v595
        %660 = vst [vmem:[%s264 + $0x1c8] sm:$0xff] %v596
        %661 = vst [vmem:[%s264 + $0x1d0] sm:$0xff] %v597
        %662 = vst [vmem:[%s264 + $0x1d8] sm:$0xff] %v598
        %663 = vst [vmem:[%s264 + $0x1e0] sm:$0xff] %v599
        %664 = vst [vmem:[%s264 + $0x1e8] sm:$0xff] %v600
        %665 = vst [vmem:[%s264 + $0x1f0] sm:$0xff] %v601
        %666 = vst [vmem:[%s264 + $0x1f8] sm:$0xff] %v602
        %s667 = sand.u32 %s106, 1
        %s668 = sand.u32 %s106, 1
        %s669 = smul.addr %s668, 512
        %s670 = scalar_lea.vmem [#allocation3], %s669
        // Predicated region
        $region56: #{decoder_block_forward.7} parent=50 // pred_check
          %p671 = pneg %p116
        $region57: #{decoder_block_forward.7} parent=50 // pred_check_branch
          %673 = sbr.rel (%p671) target = $region59
        $region58: #{decoder_block_forward.7} parent=50 // pred_region
          %s674 = smul.u32 16, %s19
          %s675 = smul.addr %s18, 128
          %s676 = sadd.s32 %s674, %s675
          %s677 = smul.addr %s676, 8
          %s678 = scalar_lea.vmem %s3, %s677
          // Predicated region
          $region60: #{decoder_block_forward.7} parent=58 // pred_check
            _
          $region61: #{decoder_block_forward.7} parent=58 // pred_check_branch
            %680 = sbr.rel (0) target = $region63
          $region62: #{decoder_block_forward.7} parent=58 // pred_region
            // Predicated region
            $region64: #{decoder_block_forward.7} parent=62 // pred_check
              _
            $region65: #{decoder_block_forward.7} parent=62 // pred_check_branch
              %682 = sbr.rel (0) target = $region67
            $region66: #{decoder_block_forward.7} parent=62 // pred_region
              loop: start=0, step=1, limit=1
              $region68: #{decoder_block_forward.7} parent=66 // loop_pre_header
                _
              $region69: #{decoder_block_forward.7} parent=66 // loop_header
                %s684 = sphi 0, %s688
                %p685 = scmp.ge.s32.totalorder %s684, 1
                %s689 = sphi %s670, %s670
                %s690 = sphi %s678, %s678
              $region70: #{decoder_block_forward.7} parent=66 // loop_header_branch
                %687 = sbr.rel (%p685) target = $region74
              $region71: #{decoder_block_forward.7} parent=66 // loop_body
                %v691 = vld [vmem:[%s689] sm:$0xff]
                %692 = vst [vmem:[%s690] sm:$0xff] %v691
                %v693 = vld [vmem:[%s689 + $0x8] sm:$0xff]
                %694 = vst [vmem:[%s690 + $0x8] sm:$0xff] %v693
                %v695 = vld [vmem:[%s689 + $0x10] sm:$0xff]
                %696 = vst [vmem:[%s690 + $0x10] sm:$0xff] %v695
                %v697 = vld [vmem:[%s689 + $0x18] sm:$0xff]
                %698 = vst [vmem:[%s690 + $0x18] sm:$0xff] %v697
                %v699 = vld [vmem:[%s689 + $0x20] sm:$0xff]
                %700 = vst [vmem:[%s690 + $0x20] sm:$0xff] %v699
                %v701 = vld [vmem:[%s689 + $0x28] sm:$0xff]
                %702 = vst [vmem:[%s690 + $0x28] sm:$0xff] %v701
                %v703 = vld [vmem:[%s689 + $0x30] sm:$0xff]
                %704 = vst [vmem:[%s690 + $0x30] sm:$0xff] %v703
                %v705 = vld [vmem:[%s689 + $0x38] sm:$0xff]
                %706 = vst [vmem:[%s690 + $0x38] sm:$0xff] %v705
                %v707 = vld [vmem:[%s689 + $0x40] sm:$0xff]
                %708 = vst [vmem:[%s690 + $0x40] sm:$0xff] %v707
                %v709 = vld [vmem:[%s689 + $0x48] sm:$0xff]
                %710 = vst [vmem:[%s690 + $0x48] sm:$0xff] %v709
                %v711 = vld [vmem:[%s689 + $0x50] sm:$0xff]
                %712 = vst [vmem:[%s690 + $0x50] sm:$0xff] %v711
                %v713 = vld [vmem:[%s689 + $0x58] sm:$0xff]
                %714 = vst [vmem:[%s690 + $0x58] sm:$0xff] %v713
                %v715 = vld [vmem:[%s689 + $0x60] sm:$0xff]
                %716 = vst [vmem:[%s690 + $0x60] sm:$0xff] %v715
                %v717 = vld [vmem:[%s689 + $0x68] sm:$0xff]
                %718 = vst [vmem:[%s690 + $0x68] sm:$0xff] %v717
                %v719 = vld [vmem:[%s689 + $0x70] sm:$0xff]
                %720 = vst [vmem:[%s690 + $0x70] sm:$0xff] %v719
                %v721 = vld [vmem:[%s689 + $0x78] sm:$0xff]
                %722 = vst [vmem:[%s690 + $0x78] sm:$0xff] %v721
                %v723 = vld [vmem:[%s689 + $0x80] sm:$0xff]
                %724 = vst [vmem:[%s690 + $0x100] sm:$0xff] %v723
                %v725 = vld [vmem:[%s689 + $0x88] sm:$0xff]
                %726 = vst [vmem:[%s690 + $0x108] sm:$0xff] %v725
                %v727 = vld [vmem:[%s689 + $0x90] sm:$0xff]
                %728 = vst [vmem:[%s690 + $0x110] sm:$0xff] %v727
                %v729 = vld [vmem:[%s689 + $0x98] sm:$0xff]
                %730 = vst [vmem:[%s690 + $0x118] sm:$0xff] %v729
                %v731 = vld [vmem:[%s689 + $0xa0] sm:$0xff]
                %732 = vst [vmem:[%s690 + $0x120] sm:$0xff] %v731
                %v733 = vld [vmem:[%s689 + $0xa8] sm:$0xff]
                %734 = vst [vmem:[%s690 + $0x128] sm:$0xff] %v733
                %v735 = vld [vmem:[%s689 + $0xb0] sm:$0xff]
                %736 = vst [vmem:[%s690 + $0x130] sm:$0xff] %v735
                %v737 = vld [vmem:[%s689 + $0xb8] sm:$0xff]
                %738 = vst [vmem:[%s690 + $0x138] sm:$0xff] %v737
                %v739 = vld [vmem:[%s689 + $0xc0] sm:$0xff]
                %740 = vst [vmem:[%s690 + $0x140] sm:$0xff] %v739
                %v741 = vld [vmem:[%s689 + $0xc8] sm:$0xff]
                %742 = vst [vmem:[%s690 + $0x148] sm:$0xff] %v741
                %v743 = vld [vmem:[%s689 + $0xd0] sm:$0xff]
                %744 = vst [vmem:[%s690 + $0x150] sm:$0xff] %v743
                %v745 = vld [vmem:[%s689 + $0xd8] sm:$0xff]
                %746 = vst [vmem:[%s690 + $0x158] sm:$0xff] %v745
                %v747 = vld [vmem:[%s689 + $0xe0] sm:$0xff]
                %748 = vst [vmem:[%s690 + $0x160] sm:$0xff] %v747
                %v749 = vld [vmem:[%s689 + $0xe8] sm:$0xff]
                %750 = vst [vmem:[%s690 + $0x168] sm:$0xff] %v749
                %v751 = vld [vmem:[%s689 + $0xf0] sm:$0xff]
                %752 = vst [vmem:[%s690 + $0x170] sm:$0xff] %v751
                %v753 = vld [vmem:[%s689 + $0xf8] sm:$0xff]
                %754 = vst [vmem:[%s690 + $0x178] sm:$0xff] %v753
                %v755 = vld [vmem:[%s689 + $0x100] sm:$0xff]
                %756 = vst [vmem:[%s690 + $0x200] sm:$0xff] %v755
                %v757 = vld [vmem:[%s689 + $0x108] sm:$0xff]
                %758 = vst [vmem:[%s690 + $0x208] sm:$0xff] %v757
                %v759 = vld [vmem:[%s689 + $0x110] sm:$0xff]
                %760 = vst [vmem:[%s690 + $0x210] sm:$0xff] %v759
                %v761 = vld [vmem:[%s689 + $0x118] sm:$0xff]
                %762 = vst [vmem:[%s690 + $0x218] sm:$0xff] %v761
                %v763 = vld [vmem:[%s689 + $0x120] sm:$0xff]
                %764 = vst [vmem:[%s690 + $0x220] sm:$0xff] %v763
                %v765 = vld [vmem:[%s689 + $0x128] sm:$0xff]
                %766 = vst [vmem:[%s690 + $0x228] sm:$0xff] %v765
                %v767 = vld [vmem:[%s689 + $0x130] sm:$0xff]
                %768 = vst [vmem:[%s690 + $0x230] sm:$0xff] %v767
                %v769 = vld [vmem:[%s689 + $0x138] sm:$0xff]
                %770 = vst [vmem:[%s690 + $0x238] sm:$0xff] %v769
                %v771 = vld [vmem:[%s689 + $0x140] sm:$0xff]
                %772 = vst [vmem:[%s690 + $0x240] sm:$0xff] %v771
                %v773 = vld [vmem:[%s689 + $0x148] sm:$0xff]
                %774 = vst [vmem:[%s690 + $0x248] sm:$0xff] %v773
                %v775 = vld [vmem:[%s689 + $0x150] sm:$0xff]
                %776 = vst [vmem:[%s690 + $0x250] sm:$0xff] %v775
                %v777 = vld [vmem:[%s689 + $0x158] sm:$0xff]
                %778 = vst [vmem:[%s690 + $0x258] sm:$0xff] %v777
                %v779 = vld [vmem:[%s689 + $0x160] sm:$0xff]
                %780 = vst [vmem:[%s690 + $0x260] sm:$0xff] %v779
                %v781 = vld [vmem:[%s689 + $0x168] sm:$0xff]
                %782 = vst [vmem:[%s690 + $0x268] sm:$0xff] %v781
                %v783 = vld [vmem:[%s689 + $0x170] sm:$0xff]
                %784 = vst [vmem:[%s690 + $0x270] sm:$0xff] %v783
                %v785 = vld [vmem:[%s689 + $0x178] sm:$0xff]
                %786 = vst [vmem:[%s690 + $0x278] sm:$0xff] %v785
                %v787 = vld [vmem:[%s689 + $0x180] sm:$0xff]
                %788 = vst [vmem:[%s690 + $0x300] sm:$0xff] %v787
                %v789 = vld [vmem:[%s689 + $0x188] sm:$0xff]
                %790 = vst [vmem:[%s690 + $0x308] sm:$0xff] %v789
                %v791 = vld [vmem:[%s689 + $0x190] sm:$0xff]
                %792 = vst [vmem:[%s690 + $0x310] sm:$0xff] %v791
                %v793 = vld [vmem:[%s689 + $0x198] sm:$0xff]
                %794 = vst [vmem:[%s690 + $0x318] sm:$0xff] %v793
                %v795 = vld [vmem:[%s689 + $0x1a0] sm:$0xff]
                %796 = vst [vmem:[%s690 + $0x320] sm:$0xff] %v795
                %v797 = vld [vmem:[%s689 + $0x1a8] sm:$0xff]
                %798 = vst [vmem:[%s690 + $0x328] sm:$0xff] %v797
                %v799 = vld [vmem:[%s689 + $0x1b0] sm:$0xff]
                %800 = vst [vmem:[%s690 + $0x330] sm:$0xff] %v799
                %v801 = vld [vmem:[%s689 + $0x1b8] sm:$0xff]
                %802 = vst [vmem:[%s690 + $0x338] sm:$0xff] %v801
                %v803 = vld [vmem:[%s689 + $0x1c0] sm:$0xff]
                %804 = vst [vmem:[%s690 + $0x340] sm:$0xff] %v803
                %v805 = vld [vmem:[%s689 + $0x1c8] sm:$0xff]
                %806 = vst [vmem:[%s690 + $0x348] sm:$0xff] %v805
                %v807 = vld [vmem:[%s689 + $0x1d0] sm:$0xff]
                %808 = vst [vmem:[%s690 + $0x350] sm:$0xff] %v807
                %v809 = vld [vmem:[%s689 + $0x1d8] sm:$0xff]
                %810 = vst [vmem:[%s690 + $0x358] sm:$0xff] %v809
                %v811 = vld [vmem:[%s689 + $0x1e0] sm:$0xff]
                %812 = vst [vmem:[%s690 + $0x360] sm:$0xff] %v811
                %v813 = vld [vmem:[%s689 + $0x1e8] sm:$0xff]
                %814 = vst [vmem:[%s690 + $0x368] sm:$0xff] %v813
                %v815 = vld [vmem:[%s689 + $0x1f0] sm:$0xff]
                %816 = vst [vmem:[%s690 + $0x370] sm:$0xff] %v815
                %v817 = vld [vmem:[%s689 + $0x1f8] sm:$0xff]
                %818 = vst [vmem:[%s690 + $0x378] sm:$0xff] %v817
              $region72: #{decoder_block_forward.7} parent=66 // loop_footer
                %s688 = sadd.s32 1, %s684
              $region73: #{decoder_block_forward.7} parent=66 // loop_footer_branch
                %683 = sbr.rel target = $region69
              $region74: #{decoder_block_forward.7} parent=66 // loop_exit
                _
            $region67: #{decoder_block_forward.7} parent=62 // pred_fallthru
              _
            // Predicated region
            $region75: #{decoder_block_forward.7} parent=62 // pred_check
              _
            $region76: #{decoder_block_forward.7} parent=62 // pred_check_branch
              %820 = sbr.rel target = $region78
            $region77: #{decoder_block_forward.7} parent=62 // pred_region
              _
            $region78: #{decoder_block_forward.7} parent=62 // pred_fallthru
              _
          $region63: #{decoder_block_forward.7} parent=58 // pred_fallthru
            _
          %821 = vnop
        $region59: #{decoder_block_forward.7} parent=50 // pred_fallthru
          _
      $region51: #{decoder_block_forward.7} parent=5 // pred_fallthru
        _
      %p822 = scmp.le.s32.totalorder 2, %s9
      // Predicated region
      $region79: #{decoder_block_forward.7} parent=5 // pred_check
        %p823 = pneg %p822
      $region80: #{decoder_block_forward.7} parent=5 // pred_check_branch
        %825 = sbr.rel (%p823) target = $region82
      $region81: #{decoder_block_forward.7} parent=5 // pred_region
        %s826 = ssub.s32 %s9, 2
        // Predicated region
        $region83: #{decoder_block_forward.7} parent=81 // pred_check
          %p827 = pneg %p122
        $region84: #{decoder_block_forward.7} parent=81 // pred_check_branch
          %829 = sbr.rel (%p827) target = $region86
        $region85: #{decoder_block_forward.7} parent=81 // pred_region
          %s830 = sand.u32 %s107, 1
          %s831 = sand.u32 %s107, 1
          %s832 = smul.addr %s831, 512
          %s833 = scalar_lea.vmem [#allocation3], %s832
        $region86: #{decoder_block_forward.7} parent=81 // pred_fallthru
          _
      $region82: #{decoder_block_forward.7} parent=5 // pred_fallthru
        _
    $region6: #{decoder_block_forward.7} parent=1 // loop_footer
      %s13 = sadd.s32 1, %s9
    $region7: #{decoder_block_forward.7} parent=1 // loop_footer_branch
      %8 = sbr.rel target = $region3
    $region8: #{decoder_block_forward.7} parent=1 // loop_exit
      _

</llo_original>
